<compile_context>
chip_gen: v7x
topology: tpu7x:2x2x1
jax: 0.10.0
libtpu: 0.0.40
codegen_flags: <defaults>
</compile_context>

<pallas_src>
import functools

import jax
import jax.numpy as jnp
from jax.experimental import pallas as pl
from jax.experimental.pallas import tpu as pltpu


LN_EPS = 1e-5  # torch nn.LayerNorm default


def _bf16(x):
    """Cast MXU operands to bf16 (no-op if already bf16)."""
    return x.astype(jnp.bfloat16)


def _const_spec(shape):
    """BlockSpec for a grid-invariant (weight) input: constant index map and a single
    VMEM buffer (no point double-buffering a tile whose block index never changes)."""
    idx = lambda *_: (0,) * len(shape)
    try:
        return pl.BlockSpec(shape, idx, pipeline_mode=pl.Buffered(1))
    except (TypeError, AttributeError):   # older jax without pipeline_mode/Buffered
        return pl.BlockSpec(shape, idx)


# ---------------------------------------------------------------------------
# Generic linear kernel (patch-embedding projection, logits head).
# ---------------------------------------------------------------------------
def _linear_kernel(x_ref, w_ref, b_ref, o_ref):
    y = jnp.dot(_bf16(x_ref[...]), _bf16(w_ref[...]),
                preferred_element_type=jnp.float32) + b_ref[...]
    o_ref[...] = y.astype(o_ref.dtype)


def _pick_row_tile(rows):
    # Prefer >=2 grid steps (keeps both v7x TensorCores busy) with 8-aligned tiles.
    for t in (rows // 2, rows // 4):
        if t and t % 8 == 0 and rows % t == 0:
            return t
    return rows


def linear(x2d, w, b):
    """y = x2d @ w + b, bf16 MXU operands, f32 accumulation / output."""
    rows, k = x2d.shape
    n = w.shape[1]
    row_tile = _pick_row_tile(rows)
    w_bf = _bf16(w)
    return pl.pallas_call(
        _linear_kernel,
        out_shape=jax.ShapeDtypeStruct((rows, n), jnp.float32),
        grid_spec=pltpu.PrefetchScalarGridSpec(
            num_scalar_prefetch=0,
            grid=(rows // row_tile,),
            in_specs=[
                pl.BlockSpec((row_tile, k), lambda i: (i, 0)),
                _const_spec((k, n)),
                _const_spec((1, n)),
            ],
            out_specs=pl.BlockSpec((row_tile, n), lambda i: (i, 0)),
        ),
        compiler_params=pltpu.CompilerParams(
            dimension_semantics=("parallel",)),
    )(x2d, w_bf, b)


# ---------------------------------------------------------------------------
# Per-block kernel 1: LayerNorm1 + fused qkv projection (grid over batch).
# ---------------------------------------------------------------------------
def _ln_qkv_kernel(x_ref, g_ref, be_ref, w_ref, bq_ref, xn_ref, qkv_ref):
    x = x_ref[0]                                               # (Tp, D) f32
    mu = jnp.mean(x, axis=-1, keepdims=True)
    xc = x - mu
    var = jnp.mean(xc * xc, axis=-1, keepdims=True)
    xn = xc * jax.lax.rsqrt(var + LN_EPS) * g_ref[...] + be_ref[...]
    xn_ref[0] = xn                                             # f32, kept for residual
    # One MXU matmul for the whole qkv projection of this sample.
    qkv = jnp.dot(_bf16(xn), _bf16(w_ref[...]),
                  preferred_element_type=jnp.float32) + bq_ref[...]
    qkv_ref[0] = qkv.astype(qkv_ref.dtype)                     # stored bf16


# ---------------------------------------------------------------------------
# Per-block kernel 2: attention (per sample, head-batched) + residual +
# LayerNorm2 + MLP + residual (grid over batch).
# ---------------------------------------------------------------------------
def _make_attn_mlp_kernel(n_valid, tokens_padded):
    def kernel(q_ref, k_ref, v_ref, xn_ref, wp_ref, bp_ref,
               g2_ref, be2_ref, w1_ref, b1_ref, w2_ref, b2_ref, o_ref):
        q = _bf16(q_ref[0])                                    # (H, Tp, hd)
        k = _bf16(k_ref[0])                                    # (H, hd, Tp) pre-transposed
        # scores: head-batched matmul, no in-kernel transpose of k.
        s = jnp.einsum('htd,hds->hts', q, k,
                       preferred_element_type=jnp.float32)     # (H, Tp, Tp) f32
        if n_valid < tokens_padded:                            # mask padded keys
            key_idx = jax.lax.broadcasted_iota(jnp.int32, s.shape, 2)
            s = jnp.where(key_idx < n_valid, s, -1e30)
        # numerically-stable softmax; stats in f32, reciprocal on the EUP.
        m = jnp.max(s, axis=-1, keepdims=True)
        e = jnp.exp(s - m)
        denom = jnp.sum(e, axis=-1, keepdims=True)
        p = e * pl.reciprocal(denom, approx=True)
        # PV product, batched over heads.
        o = jnp.einsum('hts,hsd->htd', _bf16(p), _bf16(v_ref[0]),
                       preferred_element_type=jnp.float32)     # (H, Tp, hd)
        # Output projection as a per-head contraction (no lane-axis concat):
        #   out[t, :] = sum_h o[h, t, :] @ w_proj[h*hd:(h+1)*hd, :]
        ph = jnp.einsum('htd,hdn->htn', _bf16(o), _bf16(wp_ref[...]),
                        preferred_element_type=jnp.float32)    # (H, Tp, D)
        x1 = xn_ref[0] + jnp.sum(ph, axis=0) + bp_ref[...]     # residual on normed x
        # LayerNorm 2 (f32 stats).
        mu = jnp.mean(x1, axis=-1, keepdims=True)
        xc = x1 - mu
        var = jnp.mean(xc * xc, axis=-1, keepdims=True)
        y = xc * jax.lax.rsqrt(var + LN_EPS) * g2_ref[...] + be2_ref[...]
        # MLP (bf16 MXU operands, f32 accumulation), ReLU on the VPU.
        h = jnp.dot(_bf16(y), _bf16(w1_ref[...]),
                    preferred_element_type=jnp.float32) + b1_ref[...]
        h = jnp.maximum(h, 0.0)
        m2 = jnp.dot(_bf16(h), _bf16(w2_ref[...]),
                     preferred_element_type=jnp.float32) + b2_ref[...]
        o_ref[0] = (y + m2).astype(o_ref.dtype)
    return kernel


def transformer_block(x, blk, n_heads, n_valid):
    """x: (B, Tp, D) f32 (Tp padded to a multiple of 8)."""
    B, Tp, D = x.shape
    hd = D // n_heads
    hidden = blk['w_fc1'].shape[1]

    # --- LN1 + qkv projection ----------------------------------------------
    xn, qkv = pl.pallas_call(
        _ln_qkv_kernel,
        out_shape=(jax.ShapeDtypeStruct((B, Tp, D), jnp.float32),
                   jax.ShapeDtypeStruct((B, Tp, 3 * D), jnp.bfloat16)),
        grid_spec=pltpu.PrefetchScalarGridSpec(
            num_scalar_prefetch=0,
            grid=(B,),
            in_specs=[
                pl.BlockSpec((1, Tp, D), lambda b: (b, 0, 0)),
                _const_spec((1, D)),
                _const_spec((1, D)),
                _const_spec((D, 3 * D)),
                _const_spec((1, 3 * D)),
            ],
            out_specs=(pl.BlockSpec((1, Tp, D), lambda b: (b, 0, 0)),
                       pl.BlockSpec((1, Tp, 3 * D), lambda b: (b, 0, 0))),
        ),
        compiler_params=pltpu.CompilerParams(
            dimension_semantics=("parallel",)),
    )(x, blk['g1'], blk['be1'], _bf16(blk['w_qkv_s']), blk['b_qkv_s'])

    # --- wrapper-side head split (cheap XLA layout ops, kept OUT of the kernel) --
    qkv = qkv.reshape(B, Tp, 3, n_heads, hd)
    q = jnp.transpose(qkv[:, :, 0], (0, 2, 1, 3))              # (B, H, Tp, hd), bf16
    k = jnp.transpose(qkv[:, :, 1], (0, 2, 3, 1))              # (B, H, hd, Tp) pre-transposed
    v = jnp.transpose(qkv[:, :, 2], (0, 2, 1, 3))              # (B, H, Tp, hd)

    # --- attention + residual + LN2 + MLP + residual -------------------------
    kern = _make_attn_mlp_kernel(n_valid, Tp)
    out = pl.pallas_call(
        kern,
        out_shape=jax.ShapeDtypeStruct((B, Tp, D), jnp.float32),
        grid_spec=pltpu.PrefetchScalarGridSpec(
            num_scalar_prefetch=0,
            grid=(B,),
            in_specs=[
                pl.BlockSpec((1, n_heads, Tp, hd), lambda b: (b, 0, 0, 0)),
                pl.BlockSpec((1, n_heads, hd, Tp), lambda b: (b, 0, 0, 0)),
                pl.BlockSpec((1, n_heads, Tp, hd), lambda b: (b, 0, 0, 0)),
                pl.BlockSpec((1, Tp, D), lambda b: (b, 0, 0)),
                _const_spec((n_heads, hd, D)),     # w_proj reshaped per head
                _const_spec((1, D)),               # b_proj
                _const_spec((1, D)),               # ln2 gamma
                _const_spec((1, D)),               # ln2 beta
                _const_spec((D, hidden)),          # w_fc1
                _const_spec((1, hidden)),          # b_fc1
                _const_spec((hidden, D)),          # w_fc2
                _const_spec((1, D)),               # b_fc2
            ],
            out_specs=pl.BlockSpec((1, Tp, D), lambda b: (b, 0, 0)),
        ),
        compiler_params=pltpu.CompilerParams(
            dimension_semantics=("parallel",)),
    )(q, k, v, xn,
      _bf16(blk['w_proj_h']), blk['b_proj'],
      blk['g2'], blk['be2'],
      _bf16(blk['w_fc1']), blk['b_fc1'],
      _bf16(blk['w_fc2']), blk['b_fc2'])
    return out


# ---------------------------------------------------------------------------
# Full ViT forward (Pallas kernels + wrapper-side layout plumbing).
# ---------------------------------------------------------------------------
def vit_forward(x_img, params, *, n_heads, patch_size):
    B, C, Hi, Wi = x_img.shape
    P = patch_size
    Hp, Wp = Hi // P, Wi // P
    n_patches = Hp * Wp
    D = params['w_patch'].shape[1]

    # Patch embedding: Conv2d(kernel=stride=P) == patchify (layout) + one matmul.
    patches = x_img.reshape(B, C, Hp, P, Wp, P)
    patches = jnp.transpose(patches, (0, 2, 4, 1, 3, 5)).reshape(
        B * n_patches, C * P * P)
    emb = linear(patches, params['w_patch'], params['b_patch'])
    emb = emb.reshape(B, n_patches, D)

    # Class token + positional embedding (elementwise plumbing in the wrapper).
    cls = jnp.broadcast_to(params['class_token'], (B, 1, D))
    tok = jnp.concatenate([cls, emb], axis=1) + params['pos_emb']   # (B, T, D)
    T = n_patches + 1

    # Pad tokens to a multiple of 8 sublanes; padded keys are masked in-kernel.
    Tp = ((T + 7) // 8) * 8
    if Tp != T:
        tok = jnp.pad(tok, ((0, 0), (0, Tp - T), (0, 0)))

    x = tok
    for blk in params['blocks']:
        x = transformer_block(x, blk, n_heads, n_valid=T)

    cls_out = x[:, 0, :]                                            # (B, D) — valid row
    logits = linear(cls_out, params['w_logits'], params['b_logits'])
    # NOTE: the reference ViT defines self.norm but never applies it in forward().
    return logits


# ---------------------------------------------------------------------------
# Parameters (deterministic, synthetic) and a plain-JAX reference.
# ---------------------------------------------------------------------------
def init_params(key, cfg):
    D = cfg['dim']; H = cfg['n_heads']; hd = D // H
    hidden = D * cfg['mlp_ratio']
    CPP = cfg['in_channels'] * cfg['patch_size'] ** 2
    n_patches = (cfg['img_size'] // cfg['patch_size']) ** 2
    T = n_patches + 1

    keys = iter(jax.random.split(key, 8 + 16 * cfg['depth']))

    def nrm(shape, scale=0.05):
        return jax.random.normal(next(keys), shape, dtype=jnp.float32) * scale

    params = dict(
        w_patch=nrm((CPP, D)), b_patch=nrm((1, D)),
        class_token=jax.random.normal(next(keys), (1, 1, D), dtype=jnp.float32),
        pos_emb=jax.random.uniform(next(keys), (1, T, D), dtype=jnp.float32),
        w_logits=nrm((D, cfg['n_classes'])), b_logits=nrm((1, cfg['n_classes'])),
        blocks=[],
    )

    scale = float(hd) ** 0.5
    # Fold 1/sqrt(head_dim) into the q columns (one-time parameter transform).
    col_scale = jnp.concatenate([jnp.full((D,), 1.0 / scale, dtype=jnp.float32),
                                 jnp.ones((2 * D,), dtype=jnp.float32)])

    for _ in range(cfg['depth']):
        w_qkv = nrm((D, 3 * D)); b_qkv = nrm((1, 3 * D))
        w_proj = nrm((D, D)); b_proj = nrm((1, D))
        g1 = 1.0 + nrm((1, D), 0.1); be1 = nrm((1, D), 0.1)
        g2 = 1.0 + nrm((1, D), 0.1); be2 = nrm((1, D), 0.1)
        w_fc1 = nrm((D, hidden)); b_fc1 = nrm((1, hidden))
        w_fc2 = nrm((hidden, D)); b_fc2 = nrm((1, D))
        params['blocks'].append(dict(
            w_qkv=w_qkv, b_qkv=b_qkv, w_proj=w_proj, b_proj=b_proj,
            g1=g1, be1=be1, g2=g2, be2=be2,
            w_fc1=w_fc1, b_fc1=b_fc1, w_fc2=w_fc2, b_fc2=b_fc2,
            # Kernel-side derived forms: scale folded into q columns; proj weight
            # pre-reshaped per head so the head merge is a contraction.
            w_qkv_s=w_qkv * col_scale[None, :],
            b_qkv_s=b_qkv * col_scale[None, :],
            w_proj_h=w_proj.reshape(H, hd, D),
        ))
    return params


def vit_reference(x_img, params, *, n_heads, patch_size):
    """Plain-JAX replica of the PyTorch forward. Matmul operands are cast to bf16
    (same as the kernels' MXU dtype) so the comparison isolates kernel errors."""
    B, C, Hi, Wi = x_img.shape
    P = patch_size
    Hp, Wp = Hi // P, Wi // P
    D = params['w_patch'].shape[1]
    hd = D // n_heads
    scale = float(hd) ** 0.5

    def lin(x, w, b):
        return jnp.dot(_bf16(x), _bf16(w), preferred_element_type=jnp.float32) + b

    def ln(x, g, be):
        mu = jnp.mean(x, axis=-1, keepdims=True)
        xc = x - mu
        var = jnp.mean(xc * xc, axis=-1, keepdims=True)
        return xc * jax.lax.rsqrt(var + LN_EPS) * g + be

    patches = x_img.reshape(B, C, Hp, P, Wp, P)
    patches = jnp.transpose(patches, (0, 2, 4, 1, 3, 5)).reshape(B, Hp * Wp, C * P * P)
    emb = lin(patches, params['w_patch'], params['b_patch'])
    tok = jnp.concatenate(
        [jnp.broadcast_to(params['class_token'], (B, 1, D)), emb], axis=1)
    x = tok + params['pos_emb']

    for blk in params['blocks']:
        xn = ln(x, blk['g1'], blk['be1'])
        qkv = lin(xn, blk['w_qkv'], blk['b_qkv'])
        Bq, T, _ = qkv.shape
        qkv = qkv.reshape(Bq, T, 3, n_heads, hd)
        q = jnp.transpose(qkv[:, :, 0], (0, 2, 1, 3))
        k = jnp.transpose(qkv[:, :, 1], (0, 2, 1, 3))
        v = jnp.transpose(qkv[:, :, 2], (0, 2, 1, 3))
        s = jnp.einsum('bhtd,bhsd->bhts', _bf16(q), _bf16(k),
                       preferred_element_type=jnp.float32) / scale
        w = jax.nn.softmax(s, axis=-1)
        o = jnp.einsum('bhts,bhsd->bhtd', _bf16(w), _bf16(v),
                       preferred_element_type=jnp.float32)
        o = jnp.transpose(o, (0, 2, 1, 3)).reshape(Bq, T, D)
        x1 = xn + lin(o, blk['w_proj'], blk['b_proj'])
        y = ln(x1, blk['g2'], blk['be2'])
        h = jnp.maximum(lin(y, blk['w_fc1'], blk['b_fc1']), 0.0)
        x = y + lin(h, blk['w_fc2'], blk['b_fc2'])

    ct = x[:, 0, :]
    return lin(ct, params['w_logits'], params['b_logits'])


if __name__ == "__main__":
    # Small shapes consistent with the module (dim divisible by n_heads,
    # lane-friendly embedding width).
    cfg = dict(img_size=32, patch_size=8, in_channels=3, n_classes=10,
               dim=128, depth=2, n_heads=4, mlp_ratio=4)

    key = jax.random.PRNGKey(0)
    kp, kx = jax.random.split(key)
    params = init_params(kp, cfg)
    x_img = jax.random.normal(
        kx, (2, cfg['in_channels'], cfg['img_size'], cfg['img_size']),
        dtype=jnp.float32)

    fwd = jax.jit(functools.partial(
        vit_forward, n_heads=cfg['n_heads'], patch_size=cfg['patch_size']))
    logits = fwd(x_img, params)
    logits = jax.block_until_ready(logits)

    ref = vit_reference(x_img, params, n_heads=cfg['n_heads'],
                        patch_size=cfg['patch_size'])
    ref = jax.block_until_ready(ref)

    assert logits.shape == (2, cfg['n_classes'])
    assert bool(jnp.all(jnp.isfinite(logits)))
    # Tolerance covers the EUP approximate reciprocal in the softmax and the
    # bf16 rounding-order difference from folding 1/sqrt(head_dim) into w_qkv.
    max_err = float(jnp.max(jnp.abs(logits - ref)))
    assert jnp.allclose(logits, ref, atol=3e-2, rtol=3e-2), max_err

    print("KERNEL_OK")
</pallas_src>

<mosaic_0001>
module attributes {stable_mosaic.version = 11 : i64} {
  func.func @_linear_kernel(%arg0: i32, %arg1: memref<16x192xf32, #tpu.memory_space<vmem>>, %arg2: memref<192x128xbf16, #tpu.memory_space<vmem>>, %arg3: memref<1x128xf32, #tpu.memory_space<vmem>>, %arg4: memref<16x128xf32, #tpu.memory_space<vmem>>) attributes {dimension_semantics = [#tpu.dimension_semantics<parallel>], iteration_bounds = array<i64: 2>, scalar_prefetch = 0 : i64, scratch_operands = 0 : i64, tpu.core_type = #tpu.core_type<tc>, window_params = [{transform_indices = @transform_0, window_bounds = array<i64: 16, 192>}, {pipeline_mode = #tpu.pipeline_mode<synchronous>, transform_indices = @transform_1, window_bounds = array<i64: 192, 128>}, {pipeline_mode = #tpu.pipeline_mode<synchronous>, transform_indices = @transform_2, window_bounds = array<i64: 1, 128>}, {transform_indices = @transform_3, window_bounds = array<i64: 16, 128>}]} {
    %c0 = arith.constant 0 : index
    %c0_0 = arith.constant 0 : index
    %0 = vector.load %arg1[%c0, %c0_0] : memref<16x192xf32, #tpu.memory_space<vmem>>, vector<16x192xf32>
    %1 = arith.truncf %0 : vector<16x192xf32> to vector<16x192xbf16>
    %c0_1 = arith.constant 0 : index
    %c0_2 = arith.constant 0 : index
    %2 = vector.load %arg2[%c0_1, %c0_2] : memref<192x128xbf16, #tpu.memory_space<vmem>>, vector<192x128xbf16>
    %cst = arith.constant dense<0.000000e+00> : vector<16x128xf32>
    %3 = tpu.matmul %1, %2, %cst {dimension_numbers = #tpu.dot_dimension_numbers<[1], [0], [0], [1], [0, 0, 1, 1], [], []>} : vector<16x192xbf16>, vector<192x128xbf16>, vector<16x128xf32> -> vector<16x128xf32>
    %c0_3 = arith.constant 0 : index
    %c0_4 = arith.constant 0 : index
    %4 = vector.load %arg3[%c0_3, %c0_4] : memref<1x128xf32, #tpu.memory_space<vmem>>, vector<1x128xf32>
    %5 = vector.broadcast %4 : vector<1x128xf32> to vector<16x128xf32>
    %6 = arith.addf %3, %5 : vector<16x128xf32>
    %c0_5 = arith.constant 0 : index
    %c0_6 = arith.constant 0 : index
    %7 = vector.load %arg4[%c0_5, %c0_6] : memref<16x128xf32, #tpu.memory_space<vmem>>, vector<16x128xf32>
    tpu.vector_store %arg4[%c0_5, %c0_6], %6 {strides = array<i32>} : memref<16x128xf32, #tpu.memory_space<vmem>>, vector<16x128xf32>,
    return
  }
  func.func @transform_0(%arg0: i32) -> (i32, i32) {
    %c0_i32 = arith.constant 0 : i32
    %c0_i32_0 = arith.constant 0 : i32
    return %arg0, %c0_i32 : i32, i32
  }
  func.func @transform_1(%arg0: i32) -> (i32, i32) {
    %c0_i32 = arith.constant 0 : i32
    %c0_i32_0 = arith.constant 0 : i32
    %c0_i32_1 = arith.constant 0 : i32
    return %c0_i32, %c0_i32_0 : i32, i32
  }
  func.func @transform_2(%arg0: i32) -> (i32, i32) {
    %c0_i32 = arith.constant 0 : i32
    %c0_i32_0 = arith.constant 0 : i32
    %c0_i32_1 = arith.constant 0 : i32
    return %c0_i32, %c0_i32_0 : i32, i32
  }
  func.func @transform_3(%arg0: i32) -> (i32, i32) {
    %c0_i32 = arith.constant 0 : i32
    %c0_i32_0 = arith.constant 0 : i32
    return %arg0, %c0_i32 : i32, i32
  }
}

module attributes {stable_mosaic.version = 11 : i64} {
  func.func @_ln_qkv_kernel(%arg0: i32, %arg1: memref<1x24x128xf32, #tpu.memory_space<vmem>>, %arg2: memref<1x128xf32, #tpu.memory_space<vmem>>, %arg3: memref<1x128xf32, #tpu.memory_space<vmem>>, %arg4: memref<128x384xbf16, #tpu.memory_space<vmem>>, %arg5: memref<1x384xf32, #tpu.memory_space<vmem>>, %arg6: memref<1x24x128xf32, #tpu.memory_space<vmem>>, %arg7: memref<1x24x384xbf16, #tpu.memory_space<vmem>>) attributes {dimension_semantics = [#tpu.dimension_semantics<parallel>], iteration_bounds = array<i64: 2>, scalar_prefetch = 0 : i64, scratch_operands = 0 : i64, tpu.core_type = #tpu.core_type<tc>, window_params = [{transform_indices = @transform_0, window_bounds = array<i64: 1, 24, 128>}, {pipeline_mode = #tpu.pipeline_mode<synchronous>, transform_indices = @transform_1, window_bounds = array<i64: 1, 128>}, {pipeline_mode = #tpu.pipeline_mode<synchronous>, transform_indices = @transform_2, window_bounds = array<i64: 1, 128>}, {pipeline_mode = #tpu.pipeline_mode<synchronous>, transform_indices = @transform_3, window_bounds = array<i64: 128, 384>}, {pipeline_mode = #tpu.pipeline_mode<synchronous>, transform_indices = @transform_4, window_bounds = array<i64: 1, 384>}, {transform_indices = @transform_5, window_bounds = array<i64: 1, 24, 128>}, {transform_indices = @transform_6, window_bounds = array<i64: 1, 24, 384>}]} {
    %c0 = arith.constant 0 : index
    %c0_0 = arith.constant 0 : index
    %c0_1 = arith.constant 0 : index
    %0 = vector.load %arg1[%c0, %c0_0, %c0_1] : memref<1x24x128xf32, #tpu.memory_space<vmem>>, vector<1x24x128xf32>
    %1 = vector.shape_cast %0 : vector<1x24x128xf32> to vector<24x128xf32>
    %cst = arith.constant dense<0.000000e+00> : vector<24xf32>
    %2 = vector.multi_reduction <add>, %1, %cst [1] : vector<24x128xf32> to vector<24xf32>
    %3 = vector.shape_cast %2 : vector<24xf32> to vector<24x1xf32>
    %cst_2 = arith.constant 1.280000e+02 : f32
    %4 = vector.broadcast %cst_2 : f32 to vector<24x1xf32>
    %5 = arith.divf %3, %4 : vector<24x1xf32>
    %6 = vector.broadcast %5 : vector<24x1xf32> to vector<24x128xf32>
    %7 = arith.subf %1, %6 : vector<24x128xf32>
    %8 = arith.mulf %7, %7 : vector<24x128xf32>
    %cst_3 = arith.constant dense<0.000000e+00> : vector<24xf32>
    %9 = vector.multi_reduction <add>, %8, %cst_3 [1] : vector<24x128xf32> to vector<24xf32>
    %10 = vector.shape_cast %9 : vector<24xf32> to vector<24x1xf32>
    %cst_4 = arith.constant 1.280000e+02 : f32
    %11 = vector.broadcast %cst_4 : f32 to vector<24x1xf32>
    %12 = arith.divf %10, %11 : vector<24x1xf32>
    %cst_5 = arith.constant 9.99999974E-6 : f32
    %13 = vector.broadcast %cst_5 : f32 to vector<24x1xf32>
    %14 = arith.addf %12, %13 : vector<24x1xf32>
    %15 = math.rsqrt %14 : vector<24x1xf32>
    %16 = vector.broadcast %15 : vector<24x1xf32> to vector<24x128xf32>
    %17 = arith.mulf %7, %16 : vector<24x128xf32>
    %c0_6 = arith.constant 0 : index
    %c0_7 = arith.constant 0 : index
    %18 = vector.load %arg2[%c0_6, %c0_7] : memref<1x128xf32, #tpu.memory_space<vmem>>, vector<1x128xf32>
    %19 = vector.broadcast %18 : vector<1x128xf32> to vector<24x128xf32>
    %20 = arith.mulf %17, %19 : vector<24x128xf32>
    %c0_8 = arith.constant 0 : index
    %c0_9 = arith.constant 0 : index
    %21 = vector.load %arg3[%c0_8, %c0_9] : memref<1x128xf32, #tpu.memory_space<vmem>>, vector<1x128xf32>
    %22 = vector.broadcast %21 : vector<1x128xf32> to vector<24x128xf32>
    %23 = arith.addf %20, %22 : vector<24x128xf32>
    %c0_10 = arith.constant 0 : index
    %c0_11 = arith.constant 0 : index
    %c0_12 = arith.constant 0 : index
    %24 = vector.load %arg6[%c0_10, %c0_11, %c0_12] : memref<1x24x128xf32, #tpu.memory_space<vmem>>, vector<1x24x128xf32>
    %25 = vector.shape_cast %24 : vector<1x24x128xf32> to vector<24x128xf32>
    %26 = vector.shape_cast %23 : vector<24x128xf32> to vector<1x24x128xf32>
    tpu.vector_store %arg6[%c0_10, %c0_11, %c0_12], %26 {strides = array<i32>} : memref<1x24x128xf32, #tpu.memory_space<vmem>>, vector<1x24x128xf32>,
    %27 = arith.truncf %23 : vector<24x128xf32> to vector<24x128xbf16>
    %c0_13 = arith.constant 0 : index
    %c0_14 = arith.constant 0 : index
    %28 = vector.load %arg4[%c0_13, %c0_14] : memref<128x384xbf16, #tpu.memory_space<vmem>>, vector<128x384xbf16>
    %cst_15 = arith.constant dense<0.000000e+00> : vector<24x384xf32>
    %29 = tpu.matmul %27, %28, %cst_15 {dimension_numbers = #tpu.dot_dimension_numbers<[1], [0], [0], [1], [0, 0, 1, 1], [], []>} : vector<24x128xbf16>, vector<128x384xbf16>, vector<24x384xf32> -> vector<24x384xf32>
    %c0_16 = arith.constant 0 : index
    %c0_17 = arith.constant 0 : index
    %30 = vector.load %arg5[%c0_16, %c0_17] : memref<1x384xf32, #tpu.memory_space<vmem>>, vector<1x384xf32>
    %31 = vector.broadcast %30 : vector<1x384xf32> to vector<24x384xf32>
    %32 = arith.addf %29, %31 : vector<24x384xf32>
    %33 = arith.truncf %32 : vector<24x384xf32> to vector<24x384xbf16>
    %c0_18 = arith.constant 0 : index
    %c0_19 = arith.constant 0 : index
    %c0_20 = arith.constant 0 : index
    %34 = vector.load %arg7[%c0_18, %c0_19, %c0_20] : memref<1x24x384xbf16, #tpu.memory_space<vmem>>, vector<1x24x384xbf16>
    %35 = vector.shape_cast %34 : vector<1x24x384xbf16> to vector<24x384xbf16>
    %36 = vector.shape_cast %33 : vector<24x384xbf16> to vector<1x24x384xbf16>
    tpu.vector_store %arg7[%c0_18, %c0_19, %c0_20], %36 {strides = array<i32>} : memref<1x24x384xbf16, #tpu.memory_space<vmem>>, vector<1x24x384xbf16>,
    return
  }
  func.func @transform_0(%arg0: i32) -> (i32, i32, i32) {
    %c0_i32 = arith.constant 0 : i32
    %c0_i32_0 = arith.constant 0 : i32
    %c0_i32_1 = arith.constant 0 : i32
    return %arg0, %c0_i32, %c0_i32_0 : i32, i32, i32
  }
  func.func @transform_1(%arg0: i32) -> (i32, i32) {
    %c0_i32 = arith.constant 0 : i32
    %c0_i32_0 = arith.constant 0 : i32
    %c0_i32_1 = arith.constant 0 : i32
    return %c0_i32, %c0_i32_0 : i32, i32
  }
  func.func @transform_2(%arg0: i32) -> (i32, i32) {
    %c0_i32 = arith.constant 0 : i32
    %c0_i32_0 = arith.constant 0 : i32
    %c0_i32_1 = arith.constant 0 : i32
    return %c0_i32, %c0_i32_0 : i32, i32
  }
  func.func @transform_3(%arg0: i32) -> (i32, i32) {
    %c0_i32 = arith.constant 0 : i32
    %c0_i32_0 = arith.constant 0 : i32
    %c0_i32_1 = arith.constant 0 : i32
    return %c0_i32, %c0_i32_0 : i32, i32
  }
  func.func @transform_4(%arg0: i32) -> (i32, i32) {
    %c0_i32 = arith.constant 0 : i32
    %c0_i32_0 = arith.constant 0 : i32
    %c0_i32_1 = arith.constant 0 : i32
    return %c0_i32, %c0_i32_0 : i32, i32
  }
  func.func @transform_5(%arg0: i32) -> (i32, i32, i32) {
    %c0_i32 = arith.constant 0 : i32
    %c0_i32_0 = arith.constant 0 : i32
    %c0_i32_1 = arith.constant 0 : i32
    return %arg0, %c0_i32, %c0_i32_0 : i32, i32, i32
  }
  func.func @transform_6(%arg0: i32) -> (i32, i32, i32) {
    %c0_i32 = arith.constant 0 : i32
    %c0_i32_0 = arith.constant 0 : i32
    %c0_i32_1 = arith.constant 0 : i32
    return %arg0, %c0_i32, %c0_i32_0 : i32, i32, i32
  }
}

module attributes {stable_mosaic.version = 11 : i64} {
  func.func @kernel(%arg0: i32, %arg1: memref<1x4x24x32xbf16, #tpu.memory_space<vmem>>, %arg2: memref<1x4x32x24xbf16, #tpu.memory_space<vmem>>, %arg3: memref<1x4x24x32xbf16, #tpu.memory_space<vmem>>, %arg4: memref<1x24x128xf32, #tpu.memory_space<vmem>>, %arg5: memref<4x32x128xbf16, #tpu.memory_space<vmem>>, %arg6: memref<1x128xf32, #tpu.memory_space<vmem>>, %arg7: memref<1x128xf32, #tpu.memory_space<vmem>>, %arg8: memref<1x128xf32, #tpu.memory_space<vmem>>, %arg9: memref<128x512xbf16, #tpu.memory_space<vmem>>, %arg10: memref<1x512xf32, #tpu.memory_space<vmem>>, %arg11: memref<512x128xbf16, #tpu.memory_space<vmem>>, %arg12: memref<1x128xf32, #tpu.memory_space<vmem>>, %arg13: memref<1x24x128xf32, #tpu.memory_space<vmem>>) attributes {dimension_semantics = [#tpu.dimension_semantics<parallel>], iteration_bounds = array<i64: 2>, scalar_prefetch = 0 : i64, scratch_operands = 0 : i64, tpu.core_type = #tpu.core_type<tc>, window_params = [{transform_indices = @transform_0, window_bounds = array<i64: 1, 4, 24, 32>}, {transform_indices = @transform_1, window_bounds = array<i64: 1, 4, 32, 24>}, {transform_indices = @transform_2, window_bounds = array<i64: 1, 4, 24, 32>}, {transform_indices = @transform_3, window_bounds = array<i64: 1, 24, 128>}, {pipeline_mode = #tpu.pipeline_mode<synchronous>, transform_indices = @transform_4, window_bounds = array<i64: 4, 32, 128>}, {pipeline_mode = #tpu.pipeline_mode<synchronous>, transform_indices = @transform_5, window_bounds = array<i64: 1, 128>}, {pipeline_mode = #tpu.pipeline_mode<synchronous>, transform_indices = @transform_6, window_bounds = array<i64: 1, 128>}, {pipeline_mode = #tpu.pipeline_mode<synchronous>, transform_indices = @transform_7, window_bounds = array<i64: 1, 128>}, {pipeline_mode = #tpu.pipeline_mode<synchronous>, transform_indices = @transform_8, window_bounds = array<i64: 128, 512>}, {pipeline_mode = #tpu.pipeline_mode<synchronous>, transform_indices = @transform_9, window_bounds = array<i64: 1, 512>}, {pipeline_mode = #tpu.pipeline_mode<synchronous>, transform_indices = @transform_10, window_bounds = array<i64: 512, 128>}, {pipeline_mode = #tpu.pipeline_mode<synchronous>, transform_indices = @transform_11, window_bounds = array<i64: 1, 128>}, {transform_indices = @transform_12, window_bounds = array<i64: 1, 24, 128>}]} {
    %c0 = arith.constant 0 : index
    %c0_0 = arith.constant 0 : index
    %c0_1 = arith.constant 0 : index
    %c0_2 = arith.constant 0 : index
    %0 = vector.load %arg1[%c0, %c0_0, %c0_1, %c0_2] : memref<1x4x24x32xbf16, #tpu.memory_space<vmem>>, vector<1x4x24x32xbf16>
    %1 = vector.shape_cast %0 : vector<1x4x24x32xbf16> to vector<4x24x32xbf16>
    %c0_3 = arith.constant 0 : index
    %c0_4 = arith.constant 0 : index
    %c0_5 = arith.constant 0 : index
    %c0_6 = arith.constant 0 : index
    %2 = vector.load %arg2[%c0_3, %c0_4, %c0_5, %c0_6] : memref<1x4x32x24xbf16, #tpu.memory_space<vmem>>, vector<1x4x32x24xbf16>
    %3 = vector.shape_cast %2 : vector<1x4x32x24xbf16> to vector<4x32x24xbf16>
    "tpu.trace_start"() <{level = 10 : i32, message = "htd,hds->hts"}> : () -> ()
    %cst = arith.constant dense<0.000000e+00> : vector<4x24x24xf32>
    %4 = tpu.matmul %1, %3, %cst {dimension_numbers = #tpu.dot_dimension_numbers<[2], [1], [1], [2], [0, 0, 0, 1, 1, 2], [0], [0]>} : vector<4x24x32xbf16>, vector<4x32x24xbf16>, vector<4x24x24xf32> -> vector<4x24x24xf32>
    "tpu.trace_stop"() : () -> ()
    %5 = tpu.iota {dimensions = array<i32: 2>} : vector<4x24x24xi32>
    %c17_i32 = arith.constant 17 : i32
    %6 = vector.broadcast %c17_i32 : i32 to vector<4x24x24xi32>
    %7 = arith.cmpi slt, %5, %6 : vector<4x24x24xi32>
    %cst_7 = arith.constant -1.000000e+30 : f32
    %8 = vector.broadcast %cst_7 : f32 to vector<4x24x24xf32>
    %9 = arith.select %7, %4, %8 : vector<4x24x24xi1>, vector<4x24x24xf32>
    %cst_8 = arith.constant dense<0xFF800000> : vector<4x24xf32>
    %10 = vector.multi_reduction <maximumf>, %9, %cst_8 [2] : vector<4x24x24xf32> to vector<4x24xf32>
    %11 = vector.shape_cast %10 : vector<4x24xf32> to vector<4x24x1xf32>
    %12 = vector.broadcast %11 : vector<4x24x1xf32> to vector<4x24x24xf32>
    %13 = arith.subf %9, %12 : vector<4x24x24xf32>
    %14 = math.exp %13 : vector<4x24x24xf32>
    %cst_9 = arith.constant dense<0.000000e+00> : vector<4x24xf32>
    %15 = vector.multi_reduction <add>, %14, %cst_9 [2] : vector<4x24x24xf32> to vector<4x24xf32>
    %16 = vector.shape_cast %15 : vector<4x24xf32> to vector<4x24x1xf32>
    %17 = tpu.reciprocal %16 {approx = true} : vector<4x24x1xf32> -> vector<4x24x1xf32>
    %18 = vector.broadcast %17 : vector<4x24x1xf32> to vector<4x24x24xf32>
    %19 = arith.mulf %14, %18 : vector<4x24x24xf32>
    %20 = arith.truncf %19 : vector<4x24x24xf32> to vector<4x24x24xbf16>
    %c0_10 = arith.constant 0 : index
    %c0_11 = arith.constant 0 : index
    %c0_12 = arith.constant 0 : index
    %c0_13 = arith.constant 0 : index
    %21 = vector.load %arg3[%c0_10, %c0_11, %c0_12, %c0_13] : memref<1x4x24x32xbf16, #tpu.memory_space<vmem>>, vector<1x4x24x32xbf16>
    %22 = vector.shape_cast %21 : vector<1x4x24x32xbf16> to vector<4x24x32xbf16>
    "tpu.trace_start"() <{level = 10 : i32, message = "hts,hsd->htd"}> : () -> ()
    %cst_14 = arith.constant dense<0.000000e+00> : vector<4x24x32xf32>
    %23 = tpu.matmul %20, %22, %cst_14 {dimension_numbers = #tpu.dot_dimension_numbers<[2], [1], [1], [2], [0, 0, 0, 1, 1, 2], [0], [0]>} : vector<4x24x24xbf16>, vector<4x24x32xbf16>, vector<4x24x32xf32> -> vector<4x24x32xf32>
    "tpu.trace_stop"() : () -> ()
    %24 = arith.truncf %23 : vector<4x24x32xf32> to vector<4x24x32xbf16>
    %c0_15 = arith.constant 0 : index
    %c0_16 = arith.constant 0 : index
    %c0_17 = arith.constant 0 : index
    %25 = vector.load %arg5[%c0_15, %c0_16, %c0_17] : memref<4x32x128xbf16, #tpu.memory_space<vmem>>, vector<4x32x128xbf16>
    "tpu.trace_start"() <{level = 10 : i32, message = "htd,hdn->htn"}> : () -> ()
    %cst_18 = arith.constant dense<0.000000e+00> : vector<4x24x128xf32>
    %26 = tpu.matmul %24, %25, %cst_18 {dimension_numbers = #tpu.dot_dimension_numbers<[2], [1], [1], [2], [0, 0, 0, 1, 1, 2], [0], [0]>} : vector<4x24x32xbf16>, vector<4x32x128xbf16>, vector<4x24x128xf32> -> vector<4x24x128xf32>
    "tpu.trace_stop"() : () -> ()
    %c0_19 = arith.constant 0 : index
    %c0_20 = arith.constant 0 : index
    %c0_21 = arith.constant 0 : index
    %27 = vector.load %arg4[%c0_19, %c0_20, %c0_21] : memref<1x24x128xf32, #tpu.memory_space<vmem>>, vector<1x24x128xf32>
    %28 = vector.shape_cast %27 : vector<1x24x128xf32> to vector<24x128xf32>
    %cst_22 = arith.constant dense<0.000000e+00> : vector<24x128xf32>
    %29 = vector.multi_reduction <add>, %26, %cst_22 [0] : vector<4x24x128xf32> to vector<24x128xf32>
    %30 = arith.addf %28, %29 : vector<24x128xf32>
    %c0_23 = arith.constant 0 : index
    %c0_24 = arith.constant 0 : index
    %31 = vector.load %arg6[%c0_23, %c0_24] : memref<1x128xf32, #tpu.memory_space<vmem>>, vector<1x128xf32>
    %32 = vector.broadcast %31 : vector<1x128xf32> to vector<24x128xf32>
    %33 = arith.addf %30, %32 : vector<24x128xf32>
    %cst_25 = arith.constant dense<0.000000e+00> : vector<24xf32>
    %34 = vector.multi_reduction <add>, %33, %cst_25 [1] : vector<24x128xf32> to vector<24xf32>
    %35 = vector.shape_cast %34 : vector<24xf32> to vector<24x1xf32>
    %cst_26 = arith.constant 1.280000e+02 : f32
    %36 = vector.broadcast %cst_26 : f32 to vector<24x1xf32>
    %37 = arith.divf %35, %36 : vector<24x1xf32>
    %38 = vector.broadcast %37 : vector<24x1xf32> to vector<24x128xf32>
    %39 = arith.subf %33, %38 : vector<24x128xf32>
    %40 = arith.mulf %39, %39 : vector<24x128xf32>
    %cst_27 = arith.constant dense<0.000000e+00> : vector<24xf32>
    %41 = vector.multi_reduction <add>, %40, %cst_27 [1] : vector<24x128xf32> to vector<24xf32>
    %42 = vector.shape_cast %41 : vector<24xf32> to vector<24x1xf32>
    %cst_28 = arith.constant 1.280000e+02 : f32
    %43 = vector.broadcast %cst_28 : f32 to vector<24x1xf32>
    %44 = arith.divf %42, %43 : vector<24x1xf32>
    %cst_29 = arith.constant 9.99999974E-6 : f32
    %45 = vector.broadcast %cst_29 : f32 to vector<24x1xf32>
    %46 = arith.addf %44, %45 : vector<24x1xf32>
    %47 = math.rsqrt %46 : vector<24x1xf32>
    %48 = vector.broadcast %47 : vector<24x1xf32> to vector<24x128xf32>
    %49 = arith.mulf %39, %48 : vector<24x128xf32>
    %c0_30 = arith.constant 0 : index
    %c0_31 = arith.constant 0 : index
    %50 = vector.load %arg7[%c0_30, %c0_31] : memref<1x128xf32, #tpu.memory_space<vmem>>, vector<1x128xf32>
    %51 = vector.broadcast %50 : vector<1x128xf32> to vector<24x128xf32>
    %52 = arith.mulf %49, %51 : vector<24x128xf32>
    %c0_32 = arith.constant 0 : index
    %c0_33 = arith.constant 0 : index
    %53 = vector.load %arg8[%c0_32, %c0_33] : memref<1x128xf32, #tpu.memory_space<vmem>>, vector<1x128xf32>
    %54 = vector.broadcast %53 : vector<1x128xf32> to vector<24x128xf32>
    %55 = arith.addf %52, %54 : vector<24x128xf32>
    %56 = arith.truncf %55 : vector<24x128xf32> to vector<24x128xbf16>
    %c0_34 = arith.constant 0 : index
    %c0_35 = arith.constant 0 : index
    %57 = vector.load %arg9[%c0_34, %c0_35] : memref<128x512xbf16, #tpu.memory_space<vmem>>, vector<128x512xbf16>
    %cst_36 = arith.constant dense<0.000000e+00> : vector<24x512xf32>
    %58 = tpu.matmul %56, %57, %cst_36 {dimension_numbers = #tpu.dot_dimension_numbers<[1], [0], [0], [1], [0, 0, 1, 1], [], []>} : vector<24x128xbf16>, vector<128x512xbf16>, vector<24x512xf32> -> vector<24x512xf32>
    %c0_37 = arith.constant 0 : index
    %c0_38 = arith.constant 0 : index
    %59 = vector.load %arg10[%c0_37, %c0_38] : memref<1x512xf32, #tpu.memory_space<vmem>>, vector<1x512xf32>
    %60 = vector.broadcast %59 : vector<1x512xf32> to vector<24x512xf32>
    %61 = arith.addf %58, %60 : vector<24x512xf32>
    %cst_39 = arith.constant 0.000000e+00 : f32
    %62 = vector.broadcast %cst_39 : f32 to vector<24x512xf32>
    %63 = arith.maximumf %61, %62 : vector<24x512xf32>
    %64 = arith.truncf %63 : vector<24x512xf32> to vector<24x512xbf16>
    %c0_40 = arith.constant 0 : index
    %c0_41 = arith.constant 0 : index
    %65 = vector.load %arg11[%c0_40, %c0_41] : memref<512x128xbf16, #tpu.memory_space<vmem>>, vector<512x128xbf16>
    %cst_42 = arith.constant dense<0.000000e+00> : vector<24x128xf32>
    %66 = tpu.matmul %64, %65, %cst_42 {dimension_numbers = #tpu.dot_dimension_numbers<[1], [0], [0], [1], [0, 0, 1, 1], [], []>} : vector<24x512xbf16>, vector<512x128xbf16>, vector<24x128xf32> -> vector<24x128xf32>
    %c0_43 = arith.constant 0 : index
    %c0_44 = arith.constant 0 : index
    %67 = vector.load %arg12[%c0_43, %c0_44] : memref<1x128xf32, #tpu.memory_space<vmem>>, vector<1x128xf32>
    %68 = vector.broadcast %67 : vector<1x128xf32> to vector<24x128xf32>
    %69 = arith.addf %66, %68 : vector<24x128xf32>
    %70 = arith.addf %55, %69 : vector<24x128xf32>
    %c0_45 = arith.constant 0 : index
    %c0_46 = arith.constant 0 : index
    %c0_47 = arith.constant 0 : index
    %71 = vector.load %arg13[%c0_45, %c0_46, %c0_47] : memref<1x24x128xf32, #tpu.memory_space<vmem>>, vector<1x24x128xf32>
    %72 = vector.shape_cast %71 : vector<1x24x128xf32> to vector<24x128xf32>
    %73 = vector.shape_cast %70 : vector<24x128xf32> to vector<1x24x128xf32>
    tpu.vector_store %arg13[%c0_45, %c0_46, %c0_47], %73 {strides = array<i32>} : memref<1x24x128xf32, #tpu.memory_space<vmem>>, vector<1x24x128xf32>,
    return
  }
  func.func @transform_0(%arg0: i32) -> (i32, i32, i32, i32) {
    %c0_i32 = arith.constant 0 : i32
    %c0_i32_0 = arith.constant 0 : i32
    %c0_i32_1 = arith.constant 0 : i32
    %c0_i32_2 = arith.constant 0 : i32
    return %arg0, %c0_i32, %c0_i32_0, %c0_i32_1 : i32, i32, i32, i32
  }
  func.func @transform_1(%arg0: i32) -> (i32, i32, i32, i32) {
    %c0_i32 = arith.constant 0 : i32
    %c0_i32_0 = arith.constant 0 : i32
    %c0_i32_1 = arith.constant 0 : i32
    %c0_i32_2 = arith.constant 0 : i32
    return %arg0, %c0_i32, %c0_i32_0, %c0_i32_1 : i32, i32, i32, i32
  }
  func.func @transform_2(%arg0: i32) -> (i32, i32, i32, i32) {
    %c0_i32 = arith.constant 0 : i32
    %c0_i32_0 = arith.constant 0 : i32
    %c0_i32_1 = arith.constant 0 : i32
    %c0_i32_2 = arith.constant 0 : i32
    return %arg0, %c0_i32, %c0_i32_0, %c0_i32_1 : i32, i32, i32, i32
  }
  func.func @transform_3(%arg0: i32) -> (i32, i32, i32) {
    %c0_i32 = arith.constant 0 : i32
    %c0_i32_0 = arith.constant 0 : i32
    %c0_i32_1 = arith.constant 0 : i32
    return %arg0, %c0_i32, %c0_i32_0 : i32, i32, i32
  }
  func.func @transform_4(%arg0: i32) -> (i32, i32, i32) {
    %c0_i32 = arith.constant 0 : i32
    %c0_i32_0 = arith.constant 0 : i32
    %c0_i32_1 = arith.constant 0 : i32
    %c0_i32_2 = arith.constant 0 : i32
    return %c0_i32, %c0_i32_0, %c0_i32_1 : i32, i32, i32
  }
  func.func @transform_5(%arg0: i32) -> (i32, i32) {
    %c0_i32 = arith.constant 0 : i32
    %c0_i32_0 = arith.constant 0 : i32
    %c0_i32_1 = arith.constant 0 : i32
    return %c0_i32, %c0_i32_0 : i32, i32
  }
  func.func @transform_6(%arg0: i32) -> (i32, i32) {
    %c0_i32 = arith.constant 0 : i32
    %c0_i32_0 = arith.constant 0 : i32
    %c0_i32_1 = arith.constant 0 : i32
    return %c0_i32, %c0_i32_0 : i32, i32
  }
  func.func @transform_7(%arg0: i32) -> (i32, i32) {
    %c0_i32 = arith.constant 0 : i32
    %c0_i32_0 = arith.constant 0 : i32
    %c0_i32_1 = arith.constant 0 : i32
    return %c0_i32, %c0_i32_0 : i32, i32
  }
  func.func @transform_8(%arg0: i32) -> (i32, i32) {
    %c0_i32 = arith.constant 0 : i32
    %c0_i32_0 = arith.constant 0 : i32
    %c0_i32_1 = arith.constant 0 : i32
    return %c0_i32, %c0_i32_0 : i32, i32
  }
  func.func @transform_9(%arg0: i32) -> (i32, i32) {
    %c0_i32 = arith.constant 0 : i32
    %c0_i32_0 = arith.constant 0 : i32
    %c0_i32_1 = arith.constant 0 : i32
    return %c0_i32, %c0_i32_0 : i32, i32
  }
  func.func @transform_10(%arg0: i32) -> (i32, i32) {
    %c0_i32 = arith.constant 0 : i32
    %c0_i32_0 = arith.constant 0 : i32
    %c0_i32_1 = arith.constant 0 : i32
    return %c0_i32, %c0_i32_0 : i32, i32
  }
  func.func @transform_11(%arg0: i32) -> (i32, i32) {
    %c0_i32 = arith.constant 0 : i32
    %c0_i32_0 = arith.constant 0 : i32
    %c0_i32_1 = arith.constant 0 : i32
    return %c0_i32, %c0_i32_0 : i32, i32
  }
  func.func @transform_12(%arg0: i32) -> (i32, i32, i32) {
    %c0_i32 = arith.constant 0 : i32
    %c0_i32_0 = arith.constant 0 : i32
    %c0_i32_1 = arith.constant 0 : i32
    return %arg0, %c0_i32, %c0_i32_0 : i32, i32, i32
  }
}

module attributes {stable_mosaic.version = 11 : i64} {
  func.func @_linear_kernel(%arg0: i32, %arg1: memref<2x128xf32, #tpu.memory_space<vmem>>, %arg2: memref<128x10xbf16, #tpu.memory_space<vmem>>, %arg3: memref<1x10xf32, #tpu.memory_space<vmem>>, %arg4: memref<2x10xf32, #tpu.memory_space<vmem>>) attributes {dimension_semantics = [#tpu.dimension_semantics<parallel>], iteration_bounds = array<i64: 1>, scalar_prefetch = 0 : i64, scratch_operands = 0 : i64, tpu.core_type = #tpu.core_type<tc>, window_params = [{transform_indices = @transform_0, window_bounds = array<i64: 2, 128>}, {pipeline_mode = #tpu.pipeline_mode<synchronous>, transform_indices = @transform_1, window_bounds = array<i64: 128, 10>}, {pipeline_mode = #tpu.pipeline_mode<synchronous>, transform_indices = @transform_2, window_bounds = array<i64: 1, 10>}, {transform_indices = @transform_3, window_bounds = array<i64: 2, 10>}]} {
    %c0 = arith.constant 0 : index
    %c0_0 = arith.constant 0 : index
    %0 = vector.load %arg1[%c0, %c0_0] : memref<2x128xf32, #tpu.memory_space<vmem>>, vector<2x128xf32>
    %1 = arith.truncf %0 : vector<2x128xf32> to vector<2x128xbf16>
    %c0_1 = arith.constant 0 : index
    %c0_2 = arith.constant 0 : index
    %2 = vector.load %arg2[%c0_1, %c0_2] : memref<128x10xbf16, #tpu.memory_space<vmem>>, vector<128x10xbf16>
    %cst = arith.constant dense<0.000000e+00> : vector<2x10xf32>
    %3 = tpu.matmul %1, %2, %cst {dimension_numbers = #tpu.dot_dimension_numbers<[1], [0], [0], [1], [0, 0, 1, 1], [], []>} : vector<2x128xbf16>, vector<128x10xbf16>, vector<2x10xf32> -> vector<2x10xf32>
    %c0_3 = arith.constant 0 : index
    %c0_4 = arith.constant 0 : index
    %4 = vector.load %arg3[%c0_3, %c0_4] : memref<1x10xf32, #tpu.memory_space<vmem>>, vector<1x10xf32>
    %5 = vector.broadcast %4 : vector<1x10xf32> to vector<2x10xf32>
    %6 = arith.addf %3, %5 : vector<2x10xf32>
    %c0_5 = arith.constant 0 : index
    %c0_6 = arith.constant 0 : index
    %7 = vector.load %arg4[%c0_5, %c0_6] : memref<2x10xf32, #tpu.memory_space<vmem>>, vector<2x10xf32>
    tpu.vector_store %arg4[%c0_5, %c0_6], %6 {strides = array<i32>} : memref<2x10xf32, #tpu.memory_space<vmem>>, vector<2x10xf32>,
    return
  }
  func.func @transform_0(%arg0: i32) -> (i32, i32) {
    %c0_i32 = arith.constant 0 : i32
    %c0_i32_0 = arith.constant 0 : i32
    return %arg0, %c0_i32 : i32, i32
  }
  func.func @transform_1(%arg0: i32) -> (i32, i32) {
    %c0_i32 = arith.constant 0 : i32
    %c0_i32_0 = arith.constant 0 : i32
    %c0_i32_1 = arith.constant 0 : i32
    return %c0_i32, %c0_i32_0 : i32, i32
  }
  func.func @transform_2(%arg0: i32) -> (i32, i32) {
    %c0_i32 = arith.constant 0 : i32
    %c0_i32_0 = arith.constant 0 : i32
    %c0_i32_1 = arith.constant 0 : i32
    return %c0_i32, %c0_i32_0 : i32, i32
  }
  func.func @transform_3(%arg0: i32) -> (i32, i32) {
    %c0_i32 = arith.constant 0 : i32
    %c0_i32_0 = arith.constant 0 : i32
    return %arg0, %c0_i32 : i32, i32
  }
}

</mosaic_0001>

<llo_original>
// kernel: vit_forward.6
$region0: #{vit_forward.6}
  #allocation0 [shape = 'u32[]', space=smem, size = 0x4, offset = 0x4, fixed_abs, tag = 'smem constant byte address 0x4 - core index']
  #allocation1 [shape = 'u32[144,128]{1,0:T(1,128)}', space=vmem, size = 0x12000, scoped, tag = 'internal scratch']
  %s0 = inlined_call_operand.vmem [shape: f32[32,192], index: 0, kind: input, shape index: {}]
  %s1 = inlined_call_operand.vmem [shape: bf16[192,128], index: 1, kind: input, shape index: {}]
  %s2 = inlined_call_operand.vmem [shape: f32[1,128], index: 2, kind: input, shape index: {}]
  %s3 = inlined_call_operand.vmem [shape: f32[32,128], index: 3, kind: output, shape index: {}]
  %s4 = sld [smem:[#allocation0]]
  $region45: #{vit_forward.6} parent=0
    _
  %s6 = ssub.s32 1, %s4
  %s7 = scalar_select 0, %s6, %s4
  loop: start=0, step=1, limit=4
  $region2: #{vit_forward.6} parent=0 // loop_pre_header
    _
  $region3: #{vit_forward.6} parent=0 // loop_header
    %s9 = sphi 0, %s13
    %p10 = scmp.ge.s32.totalorder %s9, 4
    %s19 = sphi 0, %s21
    %s22 = sphi 0, %s19
    %s23 = sphi 0, %s22
    %s39 = sphi 0, %s23
    %s43 = sphi 0, %s43
    %s45 = sphi 0, %s43
    %s46 = sphi 0, %s45
    %s60 = sphi 0, %s46
    %s64 = sphi 0, %s64
    %s66 = sphi 0, %s64
    %s67 = sphi 0, %s66
    %s81 = sphi 0, %s67
    %s87 = sphi 0, %s89
    %s90 = sphi 0, %s87
    %s91 = sphi 0, %s90
    %s107 = sphi 0, %s91
  $region4: #{vit_forward.6} parent=0 // loop_header_branch
    %12 = sbr.rel (%p10) target = $region8
  $region5: #{vit_forward.6} parent=0 // loop_body
    %s14 = ssub.s32 %s9, 1
    %s15 = ssub.s32 %s9, 2
    %s16 = sadd.s32 %s9, 1
    %s17 = ssub.s32 %s9, %s16
    %p18 = scmp.eq.s32.totalorder %s17, 0
    %s20 = sadd.s32 %s19, 1
    %s21 = scalar_select %p18, %s19, %s20
    %p24 = pneg %p18
    %p25 = scmp.eq.s32.totalorder %s9, 1
    %p26 = por %p24, %p25
    %p27 = scmp.ne.s32.totalorder %s19, %s22
    %p28 = scmp.eq.s32.totalorder %s9, 0
    %p29 = por %p27, %p28
    %p30 = scmp.ne.s32.totalorder %s19, %s22
    %p31 = scmp.eq.s32.totalorder %s14, 1
    %p32 = por %p30, %p31
    %p33 = scmp.ne.s32.totalorder %s22, %s23
    %p34 = scmp.eq.s32.totalorder %s14, 0
    %p35 = por %p33, %p34
    %p36 = scmp.ne.s32.totalorder %s22, %s23
    %p37 = scmp.eq.s32.totalorder %s15, 1
    %p38 = por %p36, %p37
    %p40 = scmp.ne.s32.totalorder %s23, %s39
    %p41 = scmp.eq.s32.totalorder %s15, 0
    %p42 = por %p40, %p41
    %s44 = sadd.s32 %s43, 1
    %p47 = scmp.eq.s32.totalorder %s9, 1
    %p48 = scmp.ne.s32.totalorder %s43, %s45
    %p49 = scmp.eq.s32.totalorder %s9, 0
    %p50 = por %p48, %p49
    %p51 = scmp.ne.s32.totalorder %s43, %s45
    %p52 = scmp.eq.s32.totalorder %s14, 1
    %p53 = por %p51, %p52
    %p54 = scmp.ne.s32.totalorder %s45, %s46
    %p55 = scmp.eq.s32.totalorder %s14, 0
    %p56 = por %p54, %p55
    %p57 = scmp.ne.s32.totalorder %s45, %s46
    %p58 = scmp.eq.s32.totalorder %s15, 1
    %p59 = por %p57, %p58
    %p61 = scmp.ne.s32.totalorder %s46, %s60
    %p62 = scmp.eq.s32.totalorder %s15, 0
    %p63 = por %p61, %p62
    %s65 = sadd.s32 %s64, 1
    %p68 = scmp.eq.s32.totalorder %s9, 1
    %p69 = scmp.ne.s32.totalorder %s64, %s66
    %p70 = scmp.eq.s32.totalorder %s9, 0
    %p71 = por %p69, %p70
    %p72 = scmp.ne.s32.totalorder %s64, %s66
    %p73 = scmp.eq.s32.totalorder %s14, 1
    %p74 = por %p72, %p73
    %p75 = scmp.ne.s32.totalorder %s66, %s67
    %p76 = scmp.eq.s32.totalorder %s14, 0
    %p77 = por %p75, %p76
    %p78 = scmp.ne.s32.totalorder %s66, %s67
    %p79 = scmp.eq.s32.totalorder %s15, 1
    %p80 = por %p78, %p79
    %p82 = scmp.ne.s32.totalorder %s67, %s81
    %p83 = scmp.eq.s32.totalorder %s15, 0
    %p84 = por %p82, %p83
    %s85 = ssub.s32 %s9, %s16
    %p86 = scmp.eq.s32.totalorder %s85, 0
    %s88 = sadd.s32 %s87, 1
    %s89 = scalar_select %p86, %s87, %s88
    %p92 = pneg %p86
    %p93 = scmp.eq.s32.totalorder %s9, 1
    %p94 = por %p92, %p93
    %p95 = scmp.ne.s32.totalorder %s87, %s90
    %p96 = scmp.eq.s32.totalorder %s9, 0
    %p97 = por %p95, %p96
    %p98 = scmp.ne.s32.totalorder %s87, %s90
    %p99 = scmp.eq.s32.totalorder %s14, 1
    %p100 = por %p98, %p99
    %p101 = scmp.ne.s32.totalorder %s90, %s91
    %p102 = scmp.eq.s32.totalorder %s14, 0
    %p103 = por %p101, %p102
    %p104 = scmp.ne.s32.totalorder %s90, %s91
    %p105 = scmp.eq.s32.totalorder %s15, 1
    %p106 = por %p104, %p105
    %p108 = scmp.ne.s32.totalorder %s91, %s107
    %p109 = scmp.eq.s32.totalorder %s15, 0
    %p110 = por %p108, %p109
    %p111 = scmp.le.s32.totalorder 1, %s9
    %p112 = scmp.lt.s32.totalorder %s9, 3
    %p113 = pnand %p111, %p112
    %p114 = pneg %p113
    // Predicated region
    $region9: #{vit_forward.6} parent=5 // pred_check
      _
    $region10: #{vit_forward.6} parent=5 // pred_check_branch
      %116 = sbr.rel (%p113) target = $region12
    $region11: #{vit_forward.6} parent=5 // pred_region
      %s117 = ssub.s32 %s9, 1
      // Predicated region
      $region13: #{vit_forward.6} parent=11 // pred_check
        %p118 = pneg %p56
      $region14: #{vit_forward.6} parent=11 // pred_check_branch
        %120 = sbr.rel (%p118) target = $region16
      $region15: #{vit_forward.6} parent=11 // pred_region
        _
      $region16: #{vit_forward.6} parent=11 // pred_fallthru
        _
      // Predicated region
      $region17: #{vit_forward.6} parent=11 // pred_check
        %p121 = pneg %p77
      $region18: #{vit_forward.6} parent=11 // pred_check_branch
        %123 = sbr.rel (%p121) target = $region20
      $region19: #{vit_forward.6} parent=11 // pred_region
        _
      $region20: #{vit_forward.6} parent=11 // pred_fallthru
        _
    $region12: #{vit_forward.6} parent=5 // pred_fallthru
      _
    %p124 = scmp.lt.s32.totalorder %s9, 2
    // Predicated region
    $region21: #{vit_forward.6} parent=5 // pred_check
      %p125 = pneg %p124
    $region22: #{vit_forward.6} parent=5 // pred_check_branch
      %127 = sbr.rel (%p125) target = $region24
    $region23: #{vit_forward.6} parent=5 // pred_region
      // Predicated region
      $region25: #{vit_forward.6} parent=23 // pred_check
        %p128 = pneg %p29
      $region26: #{vit_forward.6} parent=23 // pred_check_branch
        %130 = sbr.rel (%p128) target = $region28
      $region27: #{vit_forward.6} parent=23 // pred_region
        %s131 = smul.u32 2, %s9
        %p132 = scmp.lt.s32.totalorder %s131, 3
        %s133 = scalar_select %p132, %s131, 3
        %s134 = smul.addr %s133, 2
        %s135 = smul.addr %s134, 8
        %s136 = scalar_lea.vmem %s0, %s135
        %s137 = smul.u32 2, %s9
      $region28: #{vit_forward.6} parent=23 // pred_fallthru
        _
    $region24: #{vit_forward.6} parent=5 // pred_fallthru
      _
    %p138 = scmp.le.s32.totalorder 1, %s9
    %p139 = scmp.lt.s32.totalorder %s9, 3
    %p140 = pnand %p138, %p139
    %p141 = pneg %p140
    // Predicated region
    $region29: #{vit_forward.6} parent=5 // pred_check
      _
    $region30: #{vit_forward.6} parent=5 // pred_check_branch
      %143 = sbr.rel (%p140) target = $region32
    $region31: #{vit_forward.6} parent=5 // pred_region
      %s144 = ssub.s32 %s9, 1
      %s145 = smul.u32 2, %s14
      %p146 = scmp.lt.s32.totalorder %s145, 3
      %s147 = scalar_select %p146, %s145, 3
      %s148 = smul.addr %s147, 2
      %s149 = smul.addr %s148, 8
      %s150 = scalar_lea.vmem %s0, %s149
      %p151 = pneg %p35
      %p152 = pneg %p32
      %p153 = pneg %p56
      %p154 = pneg %p53
      %p155 = pneg %p77
      %p156 = pneg %p74
      %p157 = pneg %p103
      %p158 = pneg %p100
      %s159 = smul.u32 2, %s14
      %p160 = scmp.lt.s32.totalorder %s159, 3
      %s161 = scalar_select %p160, %s159, 3
      %s162 = smul.addr %s161, 8
      %s163 = scalar_lea.vmem %s3, %s162
      %s164 = smul.u32 2, %s14
      %p165 = scmp.lt.s32.totalorder %s164, 3
      %s166 = scalar_select %p165, %s164, 3
      %s167 = smul.addr %s166, 2
      %s168 = smul.addr %s167, 8
      %s169 = scalar_lea.vmem %s0, %s168
      %s170 = smul.u32 2, %s14
      %s171 = smul.u32 2, %s14
      %p172 = scmp.lt.s32.totalorder %s171, 3
      %s173 = scalar_select %p172, %s171, 3
      %s174 = smul.addr %s173, 8
      %s175 = scalar_lea.vmem %s3, %s174
      %s176 = smul.u32 2, %s14
      %v178 = vld [vmem:[%s169] sm:$0xff]
      %v179 = vld [vmem:[%s169 + $0x8] sm:$0xff]
      %v180 = vld [vmem:[%s169 + $0x10] sm:$0xff]
      %v181 = vld [vmem:[%s169 + $0x18] sm:$0xff]
      %v182 = vpack.c.bf16 %v180, %v178
      %v183 = vpack.c.bf16 %v181, %v179
      %v184 = vld [vmem:[%s1] sm:$0xf]
      %v185 = vld [vmem:[%s1 + $0x4] sm:$0xf]
      %v186 = vld [vmem:[%s1 + $0x8] sm:$0xf]
      %v187 = vld [vmem:[%s1 + $0xc] sm:$0xf]
      %v188 = vld [vmem:[%s1 + $0x10] sm:$0xf]
      %v189 = vld [vmem:[%s1 + $0x14] sm:$0xf]
      %v190 = vld [vmem:[%s1 + $0x18] sm:$0xf]
      %v191 = vld [vmem:[%s1 + $0x1c] sm:$0xf]
      %v192 = vld [vmem:[%s1 + $0x20] sm:$0xf]
      %v193 = vld [vmem:[%s1 + $0x24] sm:$0xf]
      %v194 = vld [vmem:[%s1 + $0x28] sm:$0xf]
      %v195 = vld [vmem:[%s1 + $0x2c] sm:$0xf]
      %v196 = vld [vmem:[%s1 + $0x30] sm:$0xf]
      %v197 = vld [vmem:[%s1 + $0x34] sm:$0xf]
      %v198 = vld [vmem:[%s1 + $0x38] sm:$0xf]
      %v199 = vld [vmem:[%s1 + $0x3c] sm:$0xf]
      %v200 = vld [vmem:[%s1 + $0x40] sm:$0xf]
      %v201 = vld [vmem:[%s1 + $0x44] sm:$0xf]
      %v202 = vld [vmem:[%s1 + $0x48] sm:$0xf]
      %v203 = vld [vmem:[%s1 + $0x4c] sm:$0xf]
      %v204 = vld [vmem:[%s1 + $0x50] sm:$0xf]
      %v205 = vld [vmem:[%s1 + $0x54] sm:$0xf]
      %v206 = vld [vmem:[%s1 + $0x58] sm:$0xf]
      %v207 = vld [vmem:[%s1 + $0x5c] sm:$0xf]
      %v208 = vld [vmem:[%s2] sm:$0x1]
      %v210 = vlaneseq
      %v211 = vshrl.u32 %v210, 7
      %v212 = vsub.s32 0, %v211
      %v213 = vrot.slane %v208, %v212
      %v239 = vunpack.c.l.b16 %v184
      %v240 = vunpack.c.l.b16 %v185
      %v241 = vunpack.c.l.b16 %v186
      %v242 = vunpack.c.l.b16 %v187
      %v243 = vunpack.c.l.b16 %v188
      %v244 = vunpack.c.l.b16 %v189
      %v245 = vunpack.c.l.b16 %v190
      %v246 = vunpack.c.l.b16 %v191
      %v247 = vunpack.c.l.b16 %v192
      %v248 = vunpack.c.l.b16 %v193
      %v249 = vunpack.c.l.b16 %v194
      %v250 = vunpack.c.l.b16 %v195
      %v251 = vunpack.c.l.b16 %v196
      %v252 = vunpack.c.l.b16 %v197
      %v253 = vunpack.c.l.b16 %v198
      %v254 = vunpack.c.l.b16 %v199
      %v255 = vunpack.c.l.b16 %v200
      %v256 = vunpack.c.l.b16 %v201
      %v257 = vunpack.c.l.b16 %v202
      %v258 = vunpack.c.l.b16 %v203
      %v259 = vunpack.c.l.b16 %v204
      %v260 = vunpack.c.l.b16 %v205
      %v261 = vunpack.c.l.b16 %v206
      %v262 = vunpack.c.l.b16 %v207
      %v263 = vpack.c.b16 %v240, %v239
      %v264 = vpack.c.b16 %v242, %v241
      %v265 = vpack.c.b16 %v244, %v243
      %v266 = vpack.c.b16 %v246, %v245
      %v267 = vpack.c.b16 %v248, %v247
      %v268 = vpack.c.b16 %v250, %v249
      %v269 = vpack.c.b16 %v252, %v251
      %v270 = vpack.c.b16 %v254, %v253
      %v271 = vpack.c.b16 %v256, %v255
      %v272 = vpack.c.b16 %v258, %v257
      %v273 = vpack.c.b16 %v260, %v259
      %v274 = vpack.c.b16 %v262, %v261
      %vm287 = vcmask 523264
      %v289 = vsel %vm287, %v183, 0
      %291 = vmatprep.subr.bf16.mxu0 0
      %292 = vmatpush1.bf16.msra.mxu0 %v263
      %293 = vmatprep.subr.bf16.mxu0 0
      %294 = vmatpush1.bf16.msra.mxu0 %v264
      %295 = vmatprep.subr.bf16.mxu0 0
      %296 = vmatpush1.bf16.msra.mxu0 %v265
      %297 = vmatprep.subr.bf16.mxu0 0
      %298 = vmatpush1.bf16.msra.mxu0 %v266
      %299 = vmatprep.subr.bf16.mxu0 0
      %300 = vmatpush1.bf16.msra.mxu0 %v267
      %301 = vmatprep.subr.bf16.mxu0 0
      %302 = vmatpush1.bf16.msra.mxu0 %v268
      %303 = vmatprep.subr.bf16.mxu0 0
      %304 = vmatpush1.bf16.msra.mxu0 %v269
      %305 = vmatprep.subr.bf16.mxu0 0
      %306 = vmatpush1.bf16.msra.mxu0 %v270
      %307 = vmatprep.subr.bf16.mxu0 0
      %308 = vmatpush1.bf16.msra.mxu0 %v271
      %309 = vmatprep.subr.bf16.mxu0 0
      %310 = vmatpush1.bf16.msra.mxu0 %v272
      %311 = vmatprep.subr.bf16.mxu0 0
      %312 = vmatpush1.bf16.msra.mxu0 %v273
      %313 = vmatprep.subr.bf16.mxu0 0
      %314 = vmatpush1.bf16.msra.mxu0 %v274
      %315 = vmatprep.subr.bf16.mxu0 0
      %316 = vmatpush1.bf16.msra.mxu0 0
      %317 = vmatprep.subr.bf16.mxu0 0
      %318 = vmatpush1.bf16.msra.mxu0 0
      %319 = vmatprep.subr.bf16.mxu0 0
      %320 = vmatpush1.bf16.msra.mxu0 0
      %321 = vmatprep.subr.bf16.mxu0 0
      %322 = vmatpush1.bf16.msra.mxu0 0
      %323 = vmatprep.mubr.bf16.mxu0 %v289
      %324 = vmatmul.mubr.bf16.gmra.mrb[0].mxu0 %v182
      %v325 = vpop.f32.mrb[0].mxu0
      %v326 = vadd.f32 %v213, %v325
      %v327 = vpop.f32.mrb[0].mxu0
      %v328 = vpop.f32.mrb[0].mxu0
      %v329 = vadd.f32 %v213, %v328
      %v330 = vpop.f32.mrb[0].mxu0
      %331 = vdwg.mxu0
      %332 = vst [vmem:[%s175] sm:$0xff] %v326
      %333 = vst [vmem:[%s175 + $0x8] sm:$0xff] %v329
      %s334 = smul.u32 2, %s14
      %p335 = scmp.lt.s32.totalorder %s334, 3
      %s336 = scalar_select %p335, %s334, 3
      %s337 = smul.addr %s336, 8
      %s338 = scalar_lea.vmem %s3, %s337
      // Predicated region
      $region33: #{vit_forward.6} parent=31 // pred_check
        %p339 = pneg %p100
      $region34: #{vit_forward.6} parent=31 // pred_check_branch
        %341 = sbr.rel (%p339) target = $region36
      $region35: #{vit_forward.6} parent=31 // pred_region
        %s342 = smul.u32 2, %s14
      $region36: #{vit_forward.6} parent=31 // pred_fallthru
        _
    $region32: #{vit_forward.6} parent=5 // pred_fallthru
      _
    %p343 = scmp.le.s32.totalorder 2, %s9
    // Predicated region
    $region37: #{vit_forward.6} parent=5 // pred_check
      %p344 = pneg %p343
    $region38: #{vit_forward.6} parent=5 // pred_check_branch
      %346 = sbr.rel (%p344) target = $region40
    $region39: #{vit_forward.6} parent=5 // pred_region
      %s347 = ssub.s32 %s9, 2
      // Predicated region
      $region41: #{vit_forward.6} parent=39 // pred_check
        %p348 = pneg %p106
      $region42: #{vit_forward.6} parent=39 // pred_check_branch
        %350 = sbr.rel (%p348) target = $region44
      $region43: #{vit_forward.6} parent=39 // pred_region
        %s351 = smul.u32 2, %s15
        %p352 = scmp.lt.s32.totalorder %s351, 3
        %s353 = scalar_select %p352, %s351, 3
        %s354 = smul.addr %s353, 8
        %s355 = scalar_lea.vmem %s3, %s354
      $region44: #{vit_forward.6} parent=39 // pred_fallthru
        _
    $region40: #{vit_forward.6} parent=5 // pred_fallthru
      _
  $region6: #{vit_forward.6} parent=0 // loop_footer
    %s13 = sadd.s32 1, %s9
  $region7: #{vit_forward.6} parent=0 // loop_footer_branch
    %8 = sbr.rel target = $region3
  $region8: #{vit_forward.6} parent=0 // loop_exit
    _

// kernel: vit_forward.7
$region0: #{vit_forward.7}
  #allocation0 [shape = 'u32[]', space=smem, size = 0x4, offset = 0x4, fixed_abs, tag = 'smem constant byte address 0x4 - core index']
  #allocation1 [shape = 'u32[144,128]{1,0:T(1,128)}', space=vmem, size = 0x12000, scoped, tag = 'internal scratch']
  %s0 = inlined_call_operand.vmem [shape: f32[2,24,128], index: 0, kind: input, shape index: {}]
  %s1 = inlined_call_operand.vmem [shape: f32[1,128], index: 1, kind: input, shape index: {}]
  %s2 = inlined_call_operand.vmem [shape: f32[1,128], index: 2, kind: input, shape index: {}]
  %s3 = inlined_call_operand.vmem [shape: bf16[128,384], index: 3, kind: input, shape index: {}]
  %s4 = inlined_call_operand.vmem [shape: f32[1,384], index: 4, kind: input, shape index: {}]
  %s5 = inlined_call_operand.vmem [shape: f32[2,24,128], index: 5, kind: output, shape index: {0}]
  %s6 = inlined_call_operand.vmem [shape: bf16[2,24,384], index: 6, kind: output, shape index: {1}]
  %7 = xla_tuple %s5, %s6
  %s8 = sld [smem:[#allocation0]]
  $region61: #{vit_forward.7} parent=0
    _
  %s10 = ssub.s32 1, %s8
  %s11 = scalar_select 0, %s10, %s8
  loop: start=0, step=1, limit=4
  $region2: #{vit_forward.7} parent=0 // loop_pre_header
    _
  $region3: #{vit_forward.7} parent=0 // loop_header
    %s13 = sphi 0, %s17
    %p14 = scmp.ge.s32.totalorder %s13, 4
    %s23 = sphi 0, %s25
    %s26 = sphi 0, %s23
    %s27 = sphi 0, %s26
    %s43 = sphi 0, %s27
    %s47 = sphi 0, %s47
    %s49 = sphi 0, %s47
    %s50 = sphi 0, %s49
    %s64 = sphi 0, %s50
    %s68 = sphi 0, %s68
    %s70 = sphi 0, %s68
    %s71 = sphi 0, %s70
    %s85 = sphi 0, %s71
    %s89 = sphi 0, %s89
    %s91 = sphi 0, %s89
    %s92 = sphi 0, %s91
    %s106 = sphi 0, %s92
    %s110 = sphi 0, %s110
    %s112 = sphi 0, %s110
    %s113 = sphi 0, %s112
    %s127 = sphi 0, %s113
    %s133 = sphi 0, %s135
    %s136 = sphi 0, %s133
    %s137 = sphi 0, %s136
    %s153 = sphi 0, %s137
    %s159 = sphi 0, %s161
    %s162 = sphi 0, %s159
    %s163 = sphi 0, %s162
    %s179 = sphi 0, %s163
  $region4: #{vit_forward.7} parent=0 // loop_header_branch
    %16 = sbr.rel (%p14) target = $region8
  $region5: #{vit_forward.7} parent=0 // loop_body
    %s18 = ssub.s32 %s13, 1
    %s19 = ssub.s32 %s13, 2
    %s20 = sadd.s32 %s13, 1
    %s21 = ssub.s32 %s13, %s20
    %p22 = scmp.eq.s32.totalorder %s21, 0
    %s24 = sadd.s32 %s23, 1
    %s25 = scalar_select %p22, %s23, %s24
    %p28 = pneg %p22
    %p29 = scmp.eq.s32.totalorder %s13, 1
    %p30 = por %p28, %p29
    %p31 = scmp.ne.s32.totalorder %s23, %s26
    %p32 = scmp.eq.s32.totalorder %s13, 0
    %p33 = por %p31, %p32
    %p34 = scmp.ne.s32.totalorder %s23, %s26
    %p35 = scmp.eq.s32.totalorder %s18, 1
    %p36 = por %p34, %p35
    %p37 = scmp.ne.s32.totalorder %s26, %s27
    %p38 = scmp.eq.s32.totalorder %s18, 0
    %p39 = por %p37, %p38
    %p40 = scmp.ne.s32.totalorder %s26, %s27
    %p41 = scmp.eq.s32.totalorder %s19, 1
    %p42 = por %p40, %p41
    %p44 = scmp.ne.s32.totalorder %s27, %s43
    %p45 = scmp.eq.s32.totalorder %s19, 0
    %p46 = por %p44, %p45
    %s48 = sadd.s32 %s47, 1
    %p51 = scmp.eq.s32.totalorder %s13, 1
    %p52 = scmp.ne.s32.totalorder %s47, %s49
    %p53 = scmp.eq.s32.totalorder %s13, 0
    %p54 = por %p52, %p53
    %p55 = scmp.ne.s32.totalorder %s47, %s49
    %p56 = scmp.eq.s32.totalorder %s18, 1
    %p57 = por %p55, %p56
    %p58 = scmp.ne.s32.totalorder %s49, %s50
    %p59 = scmp.eq.s32.totalorder %s18, 0
    %p60 = por %p58, %p59
    %p61 = scmp.ne.s32.totalorder %s49, %s50
    %p62 = scmp.eq.s32.totalorder %s19, 1
    %p63 = por %p61, %p62
    %p65 = scmp.ne.s32.totalorder %s50, %s64
    %p66 = scmp.eq.s32.totalorder %s19, 0
    %p67 = por %p65, %p66
    %s69 = sadd.s32 %s68, 1
    %p72 = scmp.eq.s32.totalorder %s13, 1
    %p73 = scmp.ne.s32.totalorder %s68, %s70
    %p74 = scmp.eq.s32.totalorder %s13, 0
    %p75 = por %p73, %p74
    %p76 = scmp.ne.s32.totalorder %s68, %s70
    %p77 = scmp.eq.s32.totalorder %s18, 1
    %p78 = por %p76, %p77
    %p79 = scmp.ne.s32.totalorder %s70, %s71
    %p80 = scmp.eq.s32.totalorder %s18, 0
    %p81 = por %p79, %p80
    %p82 = scmp.ne.s32.totalorder %s70, %s71
    %p83 = scmp.eq.s32.totalorder %s19, 1
    %p84 = por %p82, %p83
    %p86 = scmp.ne.s32.totalorder %s71, %s85
    %p87 = scmp.eq.s32.totalorder %s19, 0
    %p88 = por %p86, %p87
    %s90 = sadd.s32 %s89, 1
    %p93 = scmp.eq.s32.totalorder %s13, 1
    %p94 = scmp.ne.s32.totalorder %s89, %s91
    %p95 = scmp.eq.s32.totalorder %s13, 0
    %p96 = por %p94, %p95
    %p97 = scmp.ne.s32.totalorder %s89, %s91
    %p98 = scmp.eq.s32.totalorder %s18, 1
    %p99 = por %p97, %p98
    %p100 = scmp.ne.s32.totalorder %s91, %s92
    %p101 = scmp.eq.s32.totalorder %s18, 0
    %p102 = por %p100, %p101
    %p103 = scmp.ne.s32.totalorder %s91, %s92
    %p104 = scmp.eq.s32.totalorder %s19, 1
    %p105 = por %p103, %p104
    %p107 = scmp.ne.s32.totalorder %s92, %s106
    %p108 = scmp.eq.s32.totalorder %s19, 0
    %p109 = por %p107, %p108
    %s111 = sadd.s32 %s110, 1
    %p114 = scmp.eq.s32.totalorder %s13, 1
    %p115 = scmp.ne.s32.totalorder %s110, %s112
    %p116 = scmp.eq.s32.totalorder %s13, 0
    %p117 = por %p115, %p116
    %p118 = scmp.ne.s32.totalorder %s110, %s112
    %p119 = scmp.eq.s32.totalorder %s18, 1
    %p120 = por %p118, %p119
    %p121 = scmp.ne.s32.totalorder %s112, %s113
    %p122 = scmp.eq.s32.totalorder %s18, 0
    %p123 = por %p121, %p122
    %p124 = scmp.ne.s32.totalorder %s112, %s113
    %p125 = scmp.eq.s32.totalorder %s19, 1
    %p126 = por %p124, %p125
    %p128 = scmp.ne.s32.totalorder %s113, %s127
    %p129 = scmp.eq.s32.totalorder %s19, 0
    %p130 = por %p128, %p129
    %s131 = ssub.s32 %s13, %s20
    %p132 = scmp.eq.s32.totalorder %s131, 0
    %s134 = sadd.s32 %s133, 1
    %s135 = scalar_select %p132, %s133, %s134
    %p138 = pneg %p132
    %p139 = scmp.eq.s32.totalorder %s13, 1
    %p140 = por %p138, %p139
    %p141 = scmp.ne.s32.totalorder %s133, %s136
    %p142 = scmp.eq.s32.totalorder %s13, 0
    %p143 = por %p141, %p142
    %p144 = scmp.ne.s32.totalorder %s133, %s136
    %p145 = scmp.eq.s32.totalorder %s18, 1
    %p146 = por %p144, %p145
    %p147 = scmp.ne.s32.totalorder %s136, %s137
    %p148 = scmp.eq.s32.totalorder %s18, 0
    %p149 = por %p147, %p148
    %p150 = scmp.ne.s32.totalorder %s136, %s137
    %p151 = scmp.eq.s32.totalorder %s19, 1
    %p152 = por %p150, %p151
    %p154 = scmp.ne.s32.totalorder %s137, %s153
    %p155 = scmp.eq.s32.totalorder %s19, 0
    %p156 = por %p154, %p155
    %s157 = ssub.s32 %s13, %s20
    %p158 = scmp.eq.s32.totalorder %s157, 0
    %s160 = sadd.s32 %s159, 1
    %s161 = scalar_select %p158, %s159, %s160
    %p164 = pneg %p158
    %p165 = scmp.eq.s32.totalorder %s13, 1
    %p166 = por %p164, %p165
    %p167 = scmp.ne.s32.totalorder %s159, %s162
    %p168 = scmp.eq.s32.totalorder %s13, 0
    %p169 = por %p167, %p168
    %p170 = scmp.ne.s32.totalorder %s159, %s162
    %p171 = scmp.eq.s32.totalorder %s18, 1
    %p172 = por %p170, %p171
    %p173 = scmp.ne.s32.totalorder %s162, %s163
    %p174 = scmp.eq.s32.totalorder %s18, 0
    %p175 = por %p173, %p174
    %p176 = scmp.ne.s32.totalorder %s162, %s163
    %p177 = scmp.eq.s32.totalorder %s19, 1
    %p178 = por %p176, %p177
    %p180 = scmp.ne.s32.totalorder %s163, %s179
    %p181 = scmp.eq.s32.totalorder %s19, 0
    %p182 = por %p180, %p181
    %p183 = scmp.le.s32.totalorder 1, %s13
    %p184 = scmp.lt.s32.totalorder %s13, 3
    %p185 = pnand %p183, %p184
    %p186 = pneg %p185
    // Predicated region
    $region9: #{vit_forward.7} parent=5 // pred_check
      _
    $region10: #{vit_forward.7} parent=5 // pred_check_branch
      %188 = sbr.rel (%p185) target = $region12
    $region11: #{vit_forward.7} parent=5 // pred_region
      %s189 = ssub.s32 %s13, 1
      // Predicated region
      $region13: #{vit_forward.7} parent=11 // pred_check
        %p190 = pneg %p60
      $region14: #{vit_forward.7} parent=11 // pred_check_branch
        %192 = sbr.rel (%p190) target = $region16
      $region15: #{vit_forward.7} parent=11 // pred_region
        _
      $region16: #{vit_forward.7} parent=11 // pred_fallthru
        _
      // Predicated region
      $region17: #{vit_forward.7} parent=11 // pred_check
        %p193 = pneg %p81
      $region18: #{vit_forward.7} parent=11 // pred_check_branch
        %195 = sbr.rel (%p193) target = $region20
      $region19: #{vit_forward.7} parent=11 // pred_region
        _
      $region20: #{vit_forward.7} parent=11 // pred_fallthru
        _
      // Predicated region
      $region21: #{vit_forward.7} parent=11 // pred_check
        %p196 = pneg %p102
      $region22: #{vit_forward.7} parent=11 // pred_check_branch
        %198 = sbr.rel (%p196) target = $region24
      $region23: #{vit_forward.7} parent=11 // pred_region
        _
      $region24: #{vit_forward.7} parent=11 // pred_fallthru
        _
      // Predicated region
      $region25: #{vit_forward.7} parent=11 // pred_check
        %p199 = pneg %p123
      $region26: #{vit_forward.7} parent=11 // pred_check_branch
        %201 = sbr.rel (%p199) target = $region28
      $region27: #{vit_forward.7} parent=11 // pred_region
        _
      $region28: #{vit_forward.7} parent=11 // pred_fallthru
        _
    $region12: #{vit_forward.7} parent=5 // pred_fallthru
      _
    %p202 = scmp.lt.s32.totalorder %s13, 2
    // Predicated region
    $region29: #{vit_forward.7} parent=5 // pred_check
      %p203 = pneg %p202
    $region30: #{vit_forward.7} parent=5 // pred_check_branch
      %205 = sbr.rel (%p203) target = $region32
    $region31: #{vit_forward.7} parent=5 // pred_region
      // Predicated region
      $region33: #{vit_forward.7} parent=31 // pred_check
        %p206 = pneg %p33
      $region34: #{vit_forward.7} parent=31 // pred_check_branch
        %208 = sbr.rel (%p206) target = $region36
      $region35: #{vit_forward.7} parent=31 // pred_region
        %p209 = scmp.lt.s32.totalorder %s13, 1
        %s210 = scalar_select %p209, %s13, 1
        %s211 = smul.addr %s210, 3
        %s212 = smul.addr %s211, 8
        %s213 = scalar_lea.vmem %s0, %s212
      $region36: #{vit_forward.7} parent=31 // pred_fallthru
        _
    $region32: #{vit_forward.7} parent=5 // pred_fallthru
      _
    %p214 = scmp.le.s32.totalorder 1, %s13
    %p215 = scmp.lt.s32.totalorder %s13, 3
    %p216 = pnand %p214, %p215
    %p217 = pneg %p216
    // Predicated region
    $region37: #{vit_forward.7} parent=5 // pred_check
      _
    $region38: #{vit_forward.7} parent=5 // pred_check_branch
      %219 = sbr.rel (%p216) target = $region40
    $region39: #{vit_forward.7} parent=5 // pred_region
      %s220 = ssub.s32 %s13, 1
      %p221 = scmp.lt.s32.totalorder %s18, 1
      %s222 = scalar_select %p221, %s18, 1
      %s223 = smul.addr %s222, 3
      %s224 = smul.addr %s223, 8
      %s225 = scalar_lea.vmem %s0, %s224
      %p226 = pneg %p39
      %p227 = pneg %p36
      %p228 = pneg %p60
      %p229 = pneg %p57
      %p230 = pneg %p81
      %p231 = pneg %p78
      %p232 = pneg %p102
      %p233 = pneg %p99
      %p234 = pneg %p123
      %p235 = pneg %p120
      %p236 = pneg %p149
      %p237 = pneg %p146
      %p238 = scmp.lt.s32.totalorder %s18, 1
      %s239 = scalar_select %p238, %s18, 1
      %s240 = smul.addr %s239, 3
      %s241 = smul.addr %s240, 8
      %s242 = scalar_lea.vmem %s5, %s241
      %p243 = pneg %p175
      %p244 = pneg %p172
      %p245 = scmp.lt.s32.totalorder %s18, 1
      %s246 = scalar_select %p245, %s18, 1
      %s247 = smul.addr %s246, 9
      %s248 = smul.addr %s247, 4
      %s249 = scalar_lea.vmem %s6, %s248
      %p250 = scmp.lt.s32.totalorder %s18, 1
      %s251 = scalar_select %p250, %s18, 1
      %s252 = smul.addr %s251, 3
      %s253 = smul.addr %s252, 8
      %s254 = scalar_lea.vmem %s0, %s253
      %p255 = scmp.lt.s32.totalorder %s18, 1
      %s256 = scalar_select %p255, %s18, 1
      %s257 = smul.addr %s256, 3
      %s258 = smul.addr %s257, 8
      %s259 = scalar_lea.vmem %s5, %s258
      %p260 = scmp.lt.s32.totalorder %s18, 1
      %s261 = scalar_select %p260, %s18, 1
      %s262 = smul.addr %s261, 9
      %s263 = smul.addr %s262, 4
      %s264 = scalar_lea.vmem %s6, %s263
      %v266 = vld [vmem:[%s254] sm:$0xff]
      %v267 = vld [vmem:[%s254 + $0x8] sm:$0xff]
      %v268 = vld [vmem:[%s254 + $0x10] sm:$0xff]
      %269 = vadd.xlane.f32.xlu0 %v266
      %v270 = vpop.xlane.xlu0 %269
      %271 = vadd.xlane.f32.xlu0 %v267
      %v272 = vpop.xlane.xlu0 %271
      %273 = vadd.xlane.f32.xlu0 %v268
      %v274 = vpop.xlane.xlu0 %273
      %v275 = vrcp.pop 128.0
      %v276 = vmul.f32 %v270, %v275
      %v277 = vmul.f32 %v272, %v275
      %v278 = vmul.f32 %v274, %v275
      %v279 = vsub.f32 %v266, %v276
      %v280 = vsub.f32 %v267, %v277
      %v281 = vsub.f32 %v268, %v278
      %v282 = vmul.f32 %v279, %v279
      %v283 = vmul.f32 %v280, %v280
      %v284 = vmul.f32 %v281, %v281
      %285 = vadd.xlane.f32.xlu0 %v282
      %v286 = vpop.xlane.xlu0 %285
      %287 = vadd.xlane.f32.xlu0 %v283
      %v288 = vpop.xlane.xlu0 %287
      %289 = vadd.xlane.f32.xlu0 %v284
      %v290 = vpop.xlane.xlu0 %289
      %v291 = vmul.f32 %v286, %v275
      %v292 = vmul.f32 %v288, %v275
      %v293 = vmul.f32 %v290, %v275
      %v294 = vadd.f32 %v291, 1e-05
      %v295 = vadd.f32 %v292, 1e-05
      %v296 = vadd.f32 %v293, 1e-05
      %v297 = vrsqrt.pop %v294
      %v298 = vrsqrt.pop %v295
      %v299 = vrsqrt.pop %v296
      %v300 = vmul.f32 %v279, %v297
      %v301 = vmul.f32 %v280, %v298
      %v302 = vmul.f32 %v281, %v299
      %v303 = vld [vmem:[%s1] sm:$0x1]
      %v305 = vlaneseq
      %v306 = vshrl.u32 %v305, 7
      %v307 = vsub.s32 0, %v306
      %v308 = vrot.slane %v303, %v307
      %v310 = vmul.f32 %v300, %v308
      %v311 = vmul.f32 %v301, %v308
      %v312 = vmul.f32 %v302, %v308
      %v313 = vld [vmem:[%s2] sm:$0x1]
      %v315 = vlaneseq
      %v316 = vshrl.u32 %v315, 7
      %v317 = vsub.s32 0, %v316
      %v318 = vrot.slane %v313, %v317
      %v320 = vadd.f32 %v310, %v318
      %v321 = vadd.f32 %v311, %v318
      %v322 = vadd.f32 %v312, %v318
      %323 = vst [vmem:[%s259] sm:$0xff] %v320
      %324 = vst [vmem:[%s259 + $0x8] sm:$0xff] %v321
      %325 = vst [vmem:[%s259 + $0x10] sm:$0xff] %v322
      %v326 = vpack.c.bf16 %v321, %v320
      %v327 = vpack.c.bf16 %v322, %v322
      %v328 = vld [vmem:[%s3] sm:$0xff]
      %v329 = vld [vmem:[%s3 + $0x8] sm:$0xf]
      %v330 = vld [vmem:[%s3 + $0xc] sm:$0xff]
      %v331 = vld [vmem:[%s3 + $0x14] sm:$0xf]
      %v332 = vld [vmem:[%s3 + $0x18] sm:$0xff]
      %v333 = vld [vmem:[%s3 + $0x20] sm:$0xf]
      %v334 = vld [vmem:[%s3 + $0x24] sm:$0xff]
      %v335 = vld [vmem:[%s3 + $0x2c] sm:$0xf]
      %v336 = vld [vmem:[%s3 + $0x30] sm:$0xff]
      %v337 = vld [vmem:[%s3 + $0x38] sm:$0xf]
      %v338 = vld [vmem:[%s3 + $0x3c] sm:$0xff]
      %v339 = vld [vmem:[%s3 + $0x44] sm:$0xf]
      %v340 = vld [vmem:[%s3 + $0x48] sm:$0xff]
      %v341 = vld [vmem:[%s3 + $0x50] sm:$0xf]
      %v342 = vld [vmem:[%s3 + $0x54] sm:$0xff]
      %v343 = vld [vmem:[%s3 + $0x5c] sm:$0xf]
      %v344 = vld [vmem:[%s3 + $0x60] sm:$0xff]
      %v345 = vld [vmem:[%s3 + $0x68] sm:$0xf]
      %v346 = vld [vmem:[%s3 + $0x6c] sm:$0xff]
      %v347 = vld [vmem:[%s3 + $0x74] sm:$0xf]
      %v348 = vld [vmem:[%s3 + $0x78] sm:$0xff]
      %v349 = vld [vmem:[%s3 + $0x80] sm:$0xf]
      %v350 = vld [vmem:[%s3 + $0x84] sm:$0xff]
      %v351 = vld [vmem:[%s3 + $0x8c] sm:$0xf]
      %v352 = vld [vmem:[%s3 + $0x90] sm:$0xff]
      %v353 = vld [vmem:[%s3 + $0x98] sm:$0xf]
      %v354 = vld [vmem:[%s3 + $0x9c] sm:$0xff]
      %v355 = vld [vmem:[%s3 + $0xa4] sm:$0xf]
      %v356 = vld [vmem:[%s3 + $0xa8] sm:$0xff]
      %v357 = vld [vmem:[%s3 + $0xb0] sm:$0xf]
      %v358 = vld [vmem:[%s3 + $0xb4] sm:$0xff]
      %v359 = vld [vmem:[%s3 + $0xbc] sm:$0xf]
      %v360 = vld [vmem:[%s4] sm:$0x7]
      %v362 = vlaneseq
      %v363 = vshrl.u32 %v362, 7
      %v364 = vsub.s32 0, %v363
      %v365 = vrot.slane %v360, %v364
      %v366 = vlaneseq
      %v367 = vshrl.u32 %v366, 7
      %v368 = vsub.s32 1, %v367
      %v369 = vrot.slane %v360, %v368
      %v370 = vlaneseq
      %v371 = vshrl.u32 %v370, 7
      %v372 = vsub.s32 2, %v371
      %v373 = vrot.slane %v360, %v372
      %v409 = vunpack.c.l.b16 %v328
      %v410 = vunpack.c.h.b16 %v328
      %v411 = vunpack.c.l.b16 %v329
      %v412 = vunpack.c.l.b16 %v330
      %v413 = vunpack.c.h.b16 %v330
      %v414 = vunpack.c.l.b16 %v331
      %v415 = vunpack.c.l.b16 %v332
      %v416 = vunpack.c.h.b16 %v332
      %v417 = vunpack.c.l.b16 %v333
      %v418 = vunpack.c.l.b16 %v334
      %v419 = vunpack.c.h.b16 %v334
      %v420 = vunpack.c.l.b16 %v335
      %v421 = vunpack.c.l.b16 %v336
      %v422 = vunpack.c.h.b16 %v336
      %v423 = vunpack.c.l.b16 %v337
      %v424 = vunpack.c.l.b16 %v338
      %v425 = vunpack.c.h.b16 %v338
      %v426 = vunpack.c.l.b16 %v339
      %v427 = vunpack.c.l.b16 %v340
      %v428 = vunpack.c.h.b16 %v340
      %v429 = vunpack.c.l.b16 %v341
      %v430 = vunpack.c.l.b16 %v342
      %v431 = vunpack.c.h.b16 %v342
      %v432 = vunpack.c.l.b16 %v343
      %v433 = vunpack.c.l.b16 %v344
      %v434 = vunpack.c.h.b16 %v344
      %v435 = vunpack.c.l.b16 %v345
      %v436 = vunpack.c.l.b16 %v346
      %v437 = vunpack.c.h.b16 %v346
      %v438 = vunpack.c.l.b16 %v347
      %v439 = vunpack.c.l.b16 %v348
      %v440 = vunpack.c.h.b16 %v348
      %v441 = vunpack.c.l.b16 %v349
      %v442 = vunpack.c.l.b16 %v350
      %v443 = vunpack.c.h.b16 %v350
      %v444 = vunpack.c.l.b16 %v351
      %v445 = vunpack.c.l.b16 %v352
      %v446 = vunpack.c.h.b16 %v352
      %v447 = vunpack.c.l.b16 %v353
      %v448 = vunpack.c.l.b16 %v354
      %v449 = vunpack.c.h.b16 %v354
      %v450 = vunpack.c.l.b16 %v355
      %v451 = vunpack.c.l.b16 %v356
      %v452 = vunpack.c.h.b16 %v356
      %v453 = vunpack.c.l.b16 %v357
      %v454 = vunpack.c.l.b16 %v358
      %v455 = vunpack.c.h.b16 %v358
      %v456 = vunpack.c.l.b16 %v359
      %v457 = vpack.c.b16 %v412, %v409
      %v458 = vpack.c.b16 %v413, %v410
      %v459 = vpack.c.b16 %v414, %v411
      %v460 = vpack.c.b16 %v418, %v415
      %v461 = vpack.c.b16 %v419, %v416
      %v462 = vpack.c.b16 %v420, %v417
      %v463 = vpack.c.b16 %v424, %v421
      %v464 = vpack.c.b16 %v425, %v422
      %v465 = vpack.c.b16 %v426, %v423
      %v466 = vpack.c.b16 %v430, %v427
      %v467 = vpack.c.b16 %v431, %v428
      %v468 = vpack.c.b16 %v432, %v429
      %v469 = vpack.c.b16 %v436, %v433
      %v470 = vpack.c.b16 %v437, %v434
      %v471 = vpack.c.b16 %v438, %v435
      %v472 = vpack.c.b16 %v442, %v439
      %v473 = vpack.c.b16 %v443, %v440
      %v474 = vpack.c.b16 %v444, %v441
      %v475 = vpack.c.b16 %v448, %v445
      %v476 = vpack.c.b16 %v449, %v446
      %v477 = vpack.c.b16 %v450, %v447
      %v478 = vpack.c.b16 %v454, %v451
      %v479 = vpack.c.b16 %v455, %v452
      %v480 = vpack.c.b16 %v456, %v453
      %505 = vmatprep.subr.bf16.mxu0 %v458
      %506 = vmatpush1.bf16.msra.mxu0 %v457
      %507 = vmatprep.subr.bf16.mxu0 %v461
      %508 = vmatpush1.bf16.msra.mxu0 %v460
      %509 = vmatprep.subr.bf16.mxu0 %v464
      %510 = vmatpush1.bf16.msra.mxu0 %v463
      %511 = vmatprep.subr.bf16.mxu0 %v467
      %512 = vmatpush1.bf16.msra.mxu0 %v466
      %513 = vmatprep.subr.bf16.mxu0 %v470
      %514 = vmatpush1.bf16.msra.mxu0 %v469
      %515 = vmatprep.subr.bf16.mxu0 %v473
      %516 = vmatpush1.bf16.msra.mxu0 %v472
      %517 = vmatprep.subr.bf16.mxu0 %v476
      %518 = vmatpush1.bf16.msra.mxu0 %v475
      %519 = vmatprep.subr.bf16.mxu0 %v479
      %520 = vmatpush1.bf16.msra.mxu0 %v478
      %521 = vmatprep.subr.bf16.mxu0 0
      %522 = vmatpush1.bf16.msra.mxu0 0
      %523 = vmatprep.subr.bf16.mxu0 0
      %524 = vmatpush1.bf16.msra.mxu0 0
      %525 = vmatprep.subr.bf16.mxu0 0
      %526 = vmatpush1.bf16.msra.mxu0 0
      %527 = vmatprep.subr.bf16.mxu0 0
      %528 = vmatpush1.bf16.msra.mxu0 0
      %529 = vmatprep.subr.bf16.mxu0 0
      %530 = vmatpush1.bf16.msra.mxu0 0
      %531 = vmatprep.subr.bf16.mxu0 0
      %532 = vmatpush1.bf16.msra.mxu0 0
      %533 = vmatprep.subr.bf16.mxu0 0
      %534 = vmatpush1.bf16.msra.mxu0 0
      %535 = vmatprep.subr.bf16.mxu0 0
      %536 = vmatpush1.bf16.msra.mxu0 0
      %537 = vmatprep.mubr.bf16.mxu0 0
      %538 = vmatmul.mubr.bf16.gmra.mrb[0].mxu0 %v326
      %v539 = vpop.f32.mrb[0].mxu0
      %v540 = vadd.f32 %v365, %v539
      %v541 = vpop.f32.mrb[0].mxu0
      %v542 = vadd.f32 %v369, %v541
      %v543 = vpop.f32.mrb[0].mxu0
      %v544 = vadd.f32 %v365, %v543
      %v545 = vpop.f32.mrb[0].mxu0
      %v546 = vadd.f32 %v369, %v545
      %547 = vmatprep.mubr.bf16.mxu0 0
      %548 = vmatmul.mubr.bf16.gmra.mrb[0].mxu0 %v327
      %v549 = vpop.f32.mrb[0].mxu0
      %v550 = vadd.f32 %v365, %v549
      %v551 = vpop.f32.mrb[0].mxu0
      %v552 = vadd.f32 %v369, %v551
      %v553 = vpop.f32.mrb[0].mxu0
      %v554 = vpop.f32.mrb[0].mxu0
      %555 = vdwg.mxu0
      %556 = vmatprep.subr.bf16.mxu0 0
      %557 = vmatpush1.bf16.msra.mxu0 %v459
      %558 = vmatprep.subr.bf16.mxu0 0
      %559 = vmatpush1.bf16.msra.mxu0 %v462
      %560 = vmatprep.subr.bf16.mxu0 0
      %561 = vmatpush1.bf16.msra.mxu0 %v465
      %562 = vmatprep.subr.bf16.mxu0 0
      %563 = vmatpush1.bf16.msra.mxu0 %v468
      %564 = vmatprep.subr.bf16.mxu0 0
      %565 = vmatpush1.bf16.msra.mxu0 %v471
      %566 = vmatprep.subr.bf16.mxu0 0
      %567 = vmatpush1.bf16.msra.mxu0 %v474
      %568 = vmatprep.subr.bf16.mxu0 0
      %569 = vmatpush1.bf16.msra.mxu0 %v477
      %570 = vmatprep.subr.bf16.mxu0 0
      %571 = vmatpush1.bf16.msra.mxu0 %v480
      %572 = vmatprep.subr.bf16.mxu0 0
      %573 = vmatpush1.bf16.msra.mxu0 0
      %574 = vmatprep.subr.bf16.mxu0 0
      %575 = vmatpush1.bf16.msra.mxu0 0
      %576 = vmatprep.subr.bf16.mxu0 0
      %577 = vmatpush1.bf16.msra.mxu0 0
      %578 = vmatprep.subr.bf16.mxu0 0
      %579 = vmatpush1.bf16.msra.mxu0 0
      %580 = vmatprep.subr.bf16.mxu0 0
      %581 = vmatpush1.bf16.msra.mxu0 0
      %582 = vmatprep.subr.bf16.mxu0 0
      %583 = vmatpush1.bf16.msra.mxu0 0
      %584 = vmatprep.subr.bf16.mxu0 0
      %585 = vmatpush1.bf16.msra.mxu0 0
      %586 = vmatprep.subr.bf16.mxu0 0
      %587 = vmatpush1.bf16.msra.mxu0 0
      %588 = vmatprep.mubr.bf16.mxu0 0
      %589 = vmatmul.mubr.bf16.gmra.mrb[0].mxu0 %v326
      %v590 = vpop.f32.mrb[0].mxu0
      %v591 = vadd.f32 %v373, %v590
      %v592 = vpop.f32.mrb[0].mxu0
      %v593 = vpop.f32.mrb[0].mxu0
      %v594 = vadd.f32 %v373, %v593
      %v595 = vpop.f32.mrb[0].mxu0
      %596 = vmatprep.mubr.bf16.mxu0 0
      %597 = vmatmul.mubr.bf16.gmra.mrb[0].mxu0 %v327
      %v598 = vpop.f32.mrb[0].mxu0
      %v599 = vadd.f32 %v373, %v598
      %v600 = vpop.f32.mrb[0].mxu0
      %v601 = vpop.f32.mrb[0].mxu0
      %v602 = vpop.f32.mrb[0].mxu0
      %603 = vdwg.mxu0
      %v604 = vpack.c.bf16 %v544, %v540
      %v605 = vpack.c.bf16 %v546, %v542
      %v606 = vpack.c.bf16 %v594, %v591
      %v607 = vpack.c.bf16 %v550, %v550
      %v608 = vpack.c.bf16 %v552, %v552
      %v609 = vpack.c.bf16 %v599, %v599
      %v616 = vunpack.c.l.b16 %v604
      %v617 = vunpack.c.l.b16 %v605
      %v618 = vunpack.c.l.b16 %v606
      %v619 = vunpack.c.h.b16 %v604
      %v620 = vunpack.c.h.b16 %v605
      %v621 = vunpack.c.h.b16 %v606
      %v622 = vunpack.c.l.b16 %v607
      %v623 = vunpack.c.l.b16 %v608
      %v624 = vunpack.c.l.b16 %v609
      %v625 = vpack.c.b16 %v617, %v616
      %v626 = vpack.c.b16 %v618, %v618
      %v627 = vpack.c.b16 %v620, %v619
      %v628 = vpack.c.b16 %v621, %v621
      %v629 = vpack.c.b16 %v623, %v622
      %v630 = vpack.c.b16 %v624, %v624
      %637 = vst [vmem:[%s264] sm:$0xff] %v625
      %638 = vst [vmem:[%s264 + $0x8] sm:$0xf] %v626
      %639 = vst [vmem:[%s264 + $0xc] sm:$0xff] %v627
      %640 = vst [vmem:[%s264 + $0x14] sm:$0xf] %v628
      %641 = vst [vmem:[%s264 + $0x18] sm:$0xff] %v629
      %642 = vst [vmem:[%s264 + $0x20] sm:$0xf] %v630
      %p643 = scmp.lt.s32.totalorder %s18, 1
      %s644 = scalar_select %p643, %s18, 1
      %s645 = smul.addr %s644, 3
      %s646 = smul.addr %s645, 8
      %s647 = scalar_lea.vmem %s5, %s646
      %p648 = scmp.lt.s32.totalorder %s18, 1
      %s649 = scalar_select %p648, %s18, 1
      %s650 = smul.addr %s649, 9
      %s651 = smul.addr %s650, 4
      %s652 = scalar_lea.vmem %s6, %s651
      // Predicated region
      $region41: #{vit_forward.7} parent=39 // pred_check
        %p653 = pneg %p146
      $region42: #{vit_forward.7} parent=39 // pred_check_branch
        %655 = sbr.rel (%p653) target = $region44
      $region43: #{vit_forward.7} parent=39 // pred_region
        _
      $region44: #{vit_forward.7} parent=39 // pred_fallthru
        _
      // Predicated region
      $region45: #{vit_forward.7} parent=39 // pred_check
        %p656 = pneg %p172
      $region46: #{vit_forward.7} parent=39 // pred_check_branch
        %658 = sbr.rel (%p656) target = $region48
      $region47: #{vit_forward.7} parent=39 // pred_region
        _
      $region48: #{vit_forward.7} parent=39 // pred_fallthru
        _
    $region40: #{vit_forward.7} parent=5 // pred_fallthru
      _
    %p659 = scmp.le.s32.totalorder 2, %s13
    // Predicated region
    $region49: #{vit_forward.7} parent=5 // pred_check
      %p660 = pneg %p659
    $region50: #{vit_forward.7} parent=5 // pred_check_branch
      %662 = sbr.rel (%p660) target = $region52
    $region51: #{vit_forward.7} parent=5 // pred_region
      %s663 = ssub.s32 %s13, 2
      // Predicated region
      $region53: #{vit_forward.7} parent=51 // pred_check
        %p664 = pneg %p152
      $region54: #{vit_forward.7} parent=51 // pred_check_branch
        %666 = sbr.rel (%p664) target = $region56
      $region55: #{vit_forward.7} parent=51 // pred_region
        %p667 = scmp.lt.s32.totalorder %s19, 1
        %s668 = scalar_select %p667, %s19, 1
        %s669 = smul.addr %s668, 3
        %s670 = smul.addr %s669, 8
        %s671 = scalar_lea.vmem %s5, %s670
      $region56: #{vit_forward.7} parent=51 // pred_fallthru
        _
      // Predicated region
      $region57: #{vit_forward.7} parent=51 // pred_check
        %p672 = pneg %p178
      $region58: #{vit_forward.7} parent=51 // pred_check_branch
        %674 = sbr.rel (%p672) target = $region60
      $region59: #{vit_forward.7} parent=51 // pred_region
        %p675 = scmp.lt.s32.totalorder %s19, 1
        %s676 = scalar_select %p675, %s19, 1
        %s677 = smul.addr %s676, 9
        %s678 = smul.addr %s677, 4
        %s679 = scalar_lea.vmem %s6, %s678
      $region60: #{vit_forward.7} parent=51 // pred_fallthru
        _
    $region52: #{vit_forward.7} parent=5 // pred_fallthru
      _
  $region6: #{vit_forward.7} parent=0 // loop_footer
    %s17 = sadd.s32 1, %s13
  $region7: #{vit_forward.7} parent=0 // loop_footer_branch
    %12 = sbr.rel target = $region3
  $region8: #{vit_forward.7} parent=0 // loop_exit
    _

// kernel: vit_forward.11
$region0: #{vit_forward.11}
  #allocation0 [shape = 'u32[]', space=smem, size = 0x4, offset = 0x4, fixed_abs, tag = 'smem constant byte address 0x4 - core index']
  #allocation1 [shape = 'u32[144,128]{1,0:T(1,128)}', space=vmem, size = 0x12000, scoped, tag = 'internal scratch']
  %s0 = inlined_call_operand.vmem [shape: f32[2,128], index: 0, kind: input, shape index: {}]
  %s1 = inlined_call_operand.vmem [shape: bf16[128,10], index: 1, kind: input, shape index: {}]
  %s2 = inlined_call_operand.vmem [shape: f32[1,10], index: 2, kind: input, shape index: {}]
  %s3 = inlined_call_operand.hbm [shape: f32[2,10], index: 3, kind: output, shape index: {}]
  %s4 = sld [smem:[#allocation0]]
  $region22: #{vit_forward.11} parent=0
    _
  %s6 = ssub.s32 1, %s4
  %s7 = scalar_select 0, %s6, %s4
  $region1: #{vit_forward.11} parent=0
    #allocation2 [shape = 'u8[1024]{0}', space=vmem, size = 0x400, scoped, tag = 'output window, operand 0, single buffered']
    #allocation3 [shape = 's32[1]{0}', space=sflag, size = 0x4, scoped, tag = 'scoped memory for vit_forward.11']
    %8 = vsyncpa [#allocation3], 0
    // Predicated region
    $region2: #{vit_forward.11} parent=1 // pred_check
      _
    $region3: #{vit_forward.11} parent=1 // pred_check_branch
      %10 = sbr.rel (0) target = $region5
    $region4: #{vit_forward.11} parent=1 // pred_region
      _
    $region5: #{vit_forward.11} parent=1 // pred_fallthru
      _
    // Predicated region
    $region6: #{vit_forward.11} parent=1 // pred_check
      _
    $region7: #{vit_forward.11} parent=1 // pred_check_branch
      %12 = sbr.rel (0) target = $region9
    $region8: #{vit_forward.11} parent=1 // pred_region
      _
    $region9: #{vit_forward.11} parent=1 // pred_fallthru
      _
    // Predicated region
    $region10: #{vit_forward.11} parent=1 // pred_check
      _
    $region11: #{vit_forward.11} parent=1 // pred_check_branch
      %14 = sbr.rel (0) target = $region13
    $region12: #{vit_forward.11} parent=1 // pred_region
      _
    $region13: #{vit_forward.11} parent=1 // pred_fallthru
      _
    %v16 = vld [vmem:[%s0] sm:$0x3]
    %v17 = vpack.c.bf16 %v16, %v16
    %v18 = vld [vmem:[%s1] sm:$0xf]
    %v19 = vld [vmem:[%s1 + $0x4] sm:$0xf]
    %v20 = vld [vmem:[%s1 + $0x8] sm:$0xf]
    %v21 = vld [vmem:[%s1 + $0xc] sm:$0xf]
    %v22 = vld [vmem:[%s1 + $0x10] sm:$0xf]
    %v23 = vld [vmem:[%s1 + $0x14] sm:$0xf]
    %v24 = vld [vmem:[%s1 + $0x18] sm:$0xf]
    %v25 = vld [vmem:[%s1 + $0x1c] sm:$0xf]
    %v26 = vld [vmem:[%s1 + $0x20] sm:$0xf]
    %v27 = vld [vmem:[%s1 + $0x24] sm:$0xf]
    %v28 = vld [vmem:[%s1 + $0x28] sm:$0xf]
    %v29 = vld [vmem:[%s1 + $0x2c] sm:$0xf]
    %v30 = vld [vmem:[%s1 + $0x30] sm:$0xf]
    %v31 = vld [vmem:[%s1 + $0x34] sm:$0xf]
    %v32 = vld [vmem:[%s1 + $0x38] sm:$0xf]
    %v33 = vld [vmem:[%s1 + $0x3c] sm:$0xf]
    %v34 = vld [vmem:[%s2] sm:$0x1]
    %v36 = vlaneseq
    %v37 = vshrl.u32 %v36, 7
    %v38 = vsub.s32 0, %v37
    %v39 = vrot.slane %v34, %v38
    %v57 = vunpack.c.l.b16 %v18
    %v58 = vunpack.c.l.b16 %v19
    %v59 = vunpack.c.l.b16 %v20
    %v60 = vunpack.c.l.b16 %v21
    %v61 = vunpack.c.l.b16 %v22
    %v62 = vunpack.c.l.b16 %v23
    %v63 = vunpack.c.l.b16 %v24
    %v64 = vunpack.c.l.b16 %v25
    %v65 = vunpack.c.l.b16 %v26
    %v66 = vunpack.c.l.b16 %v27
    %v67 = vunpack.c.l.b16 %v28
    %v68 = vunpack.c.l.b16 %v29
    %v69 = vunpack.c.l.b16 %v30
    %v70 = vunpack.c.l.b16 %v31
    %v71 = vunpack.c.l.b16 %v32
    %v72 = vunpack.c.l.b16 %v33
    %v73 = vpack.c.b16 %v58, %v57
    %v74 = vpack.c.b16 %v60, %v59
    %v75 = vpack.c.b16 %v62, %v61
    %v76 = vpack.c.b16 %v64, %v63
    %v77 = vpack.c.b16 %v66, %v65
    %v78 = vpack.c.b16 %v68, %v67
    %v79 = vpack.c.b16 %v70, %v69
    %v80 = vpack.c.b16 %v72, %v71
    %89 = vmatprep.subr.bf16.mxu0 0
    %90 = vmatpush1.bf16.msra.mxu0 %v73
    %91 = vmatprep.subr.bf16.mxu0 0
    %92 = vmatpush1.bf16.msra.mxu0 %v74
    %93 = vmatprep.subr.bf16.mxu0 0
    %94 = vmatpush1.bf16.msra.mxu0 %v75
    %95 = vmatprep.subr.bf16.mxu0 0
    %96 = vmatpush1.bf16.msra.mxu0 %v76
    %97 = vmatprep.subr.bf16.mxu0 0
    %98 = vmatpush1.bf16.msra.mxu0 %v77
    %99 = vmatprep.subr.bf16.mxu0 0
    %100 = vmatpush1.bf16.msra.mxu0 %v78
    %101 = vmatprep.subr.bf16.mxu0 0
    %102 = vmatpush1.bf16.msra.mxu0 %v79
    %103 = vmatprep.subr.bf16.mxu0 0
    %104 = vmatpush1.bf16.msra.mxu0 %v80
    %105 = vmatprep.subr.bf16.mxu0 0
    %106 = vmatpush1.bf16.msra.mxu0 0
    %107 = vmatprep.subr.bf16.mxu0 0
    %108 = vmatpush1.bf16.msra.mxu0 0
    %109 = vmatprep.subr.bf16.mxu0 0
    %110 = vmatpush1.bf16.msra.mxu0 0
    %111 = vmatprep.subr.bf16.mxu0 0
    %112 = vmatpush1.bf16.msra.mxu0 0
    %113 = vmatprep.subr.bf16.mxu0 0
    %114 = vmatpush1.bf16.msra.mxu0 0
    %115 = vmatprep.subr.bf16.mxu0 0
    %116 = vmatpush1.bf16.msra.mxu0 0
    %117 = vmatprep.subr.bf16.mxu0 0
    %118 = vmatpush1.bf16.msra.mxu0 0
    %119 = vmatprep.subr.bf16.mxu0 0
    %120 = vmatpush1.bf16.msra.mxu0 0
    %121 = vmatprep.mubr.bf16.mxu0 0
    %122 = vmatmul.mubr.bf16.gmra.mrb[0].mxu0 %v17
    %v123 = vpop.f32.mrb[0].mxu0
    %v124 = vadd.f32 %v39, %v123
    %v125 = vpop.f32.mrb[0].mxu0
    %v126 = vpop.f32.mrb[0].mxu0
    %v127 = vpop.f32.mrb[0].mxu0
    %128 = vdwg.mxu0
    %vm129 = vcmask 74752
    %130 = vst.msk [vmem:[#allocation2] sm:$0x3] %vm129, %v124
    // Predicated region
    $region14: #{vit_forward.11} parent=1 // pred_check
      _
    $region15: #{vit_forward.11} parent=1 // pred_check_branch
      %132 = sbr.rel (0) target = $region17
    $region16: #{vit_forward.11} parent=1 // pred_region
      %s134 = ssub.s32 32, 32
      %135 = vsyncadd [#allocation3], %s134
      %s137 = sshll.u32 [#allocation2], 4
      %s138 = int_to_ptr.vmem [resolvable:$true] %s137
      %140 = dma.vmem_to_hbm [thread:$0]  %s138, 32, %s3, [#allocation3]
    $region17: #{vit_forward.11} parent=1 // pred_fallthru
      _
    // Predicated region
    $region18: #{vit_forward.11} parent=1 // pred_check
      _
    $region19: #{vit_forward.11} parent=1 // pred_check_branch
      %142 = sbr.rel (0) target = $region21
    $region20: #{vit_forward.11} parent=1 // pred_region
      %143 = dma.done [#allocation3], 32
    $region21: #{vit_forward.11} parent=1 // pred_fallthru
      _
    %144 = vsyncpa [#allocation3], 1

// kernel: vit_forward.8
$region0: #{vit_forward.8}
  #allocation0 [shape = 'u32[]', space=smem, size = 0x4, offset = 0x4, fixed_abs, tag = 'smem constant byte address 0x4 - core index']
  #allocation1 [shape = 'u32[144,128]{1,0:T(1,128)}', space=vmem, size = 0x12000, scoped, tag = 'internal scratch']
  %s0 = inlined_call_operand.vmem [shape: bf16[2,4,24,32], index: 0, kind: input, shape index: {}]
  %s1 = inlined_call_operand.vmem [shape: bf16[2,4,32,24], index: 1, kind: input, shape index: {}]
  %s2 = inlined_call_operand.vmem [shape: bf16[2,4,24,32], index: 2, kind: input, shape index: {}]
  %s3 = inlined_call_operand.vmem [shape: f32[2,24,128], index: 3, kind: input, shape index: {}]
  %s4 = inlined_call_operand.vmem [shape: bf16[4,32,128], index: 4, kind: input, shape index: {}]
  %s5 = inlined_call_operand.vmem [shape: f32[1,128], index: 5, kind: input, shape index: {}]
  %s6 = inlined_call_operand.vmem [shape: f32[1,128], index: 6, kind: input, shape index: {}]
  %s7 = inlined_call_operand.vmem [shape: f32[1,128], index: 7, kind: input, shape index: {}]
  %s8 = inlined_call_operand.vmem [shape: bf16[128,512], index: 8, kind: input, shape index: {}]
  %s9 = inlined_call_operand.vmem [shape: f32[1,512], index: 9, kind: input, shape index: {}]
  %s10 = inlined_call_operand.vmem [shape: bf16[512,128], index: 10, kind: input, shape index: {}]
  %s11 = inlined_call_operand.vmem [shape: f32[1,128], index: 11, kind: input, shape index: {}]
  %s12 = inlined_call_operand.vmem [shape: f32[2,24,128], index: 12, kind: output, shape index: {}]
  %s13 = sld [smem:[#allocation0]]
  $region81: #{vit_forward.8} parent=0
    _
  %s15 = ssub.s32 1, %s13
  %s16 = scalar_select 0, %s15, %s13
  loop: start=0, step=1, limit=4
  $region2: #{vit_forward.8} parent=0 // loop_pre_header
    _
  $region3: #{vit_forward.8} parent=0 // loop_header
    %s18 = sphi 0, %s22
    %p19 = scmp.ge.s32.totalorder %s18, 4
    %s28 = sphi 0, %s30
    %s31 = sphi 0, %s28
    %s32 = sphi 0, %s31
    %s48 = sphi 0, %s32
    %s54 = sphi 0, %s56
    %s57 = sphi 0, %s54
    %s58 = sphi 0, %s57
    %s74 = sphi 0, %s58
    %s80 = sphi 0, %s82
    %s83 = sphi 0, %s80
    %s84 = sphi 0, %s83
    %s100 = sphi 0, %s84
    %s106 = sphi 0, %s108
    %s109 = sphi 0, %s106
    %s110 = sphi 0, %s109
    %s126 = sphi 0, %s110
    %s130 = sphi 0, %s130
    %s132 = sphi 0, %s130
    %s133 = sphi 0, %s132
    %s147 = sphi 0, %s133
    %s151 = sphi 0, %s151
    %s153 = sphi 0, %s151
    %s154 = sphi 0, %s153
    %s168 = sphi 0, %s154
    %s172 = sphi 0, %s172
    %s174 = sphi 0, %s172
    %s175 = sphi 0, %s174
    %s189 = sphi 0, %s175
    %s193 = sphi 0, %s193
    %s195 = sphi 0, %s193
    %s196 = sphi 0, %s195
    %s210 = sphi 0, %s196
    %s214 = sphi 0, %s214
    %s216 = sphi 0, %s214
    %s217 = sphi 0, %s216
    %s231 = sphi 0, %s217
    %s235 = sphi 0, %s235
    %s237 = sphi 0, %s235
    %s238 = sphi 0, %s237
    %s252 = sphi 0, %s238
    %s256 = sphi 0, %s256
    %s258 = sphi 0, %s256
    %s259 = sphi 0, %s258
    %s273 = sphi 0, %s259
    %s277 = sphi 0, %s277
    %s279 = sphi 0, %s277
    %s280 = sphi 0, %s279
    %s294 = sphi 0, %s280
    %s300 = sphi 0, %s302
    %s303 = sphi 0, %s300
    %s304 = sphi 0, %s303
    %s320 = sphi 0, %s304
  $region4: #{vit_forward.8} parent=0 // loop_header_branch
    %21 = sbr.rel (%p19) target = $region8
  $region5: #{vit_forward.8} parent=0 // loop_body
    %s23 = ssub.s32 %s18, 1
    %s24 = ssub.s32 %s18, 2
    %s25 = sadd.s32 %s18, 1
    %s26 = ssub.s32 %s18, %s25
    %p27 = scmp.eq.s32.totalorder %s26, 0
    %s29 = sadd.s32 %s28, 1
    %s30 = scalar_select %p27, %s28, %s29
    %p33 = pneg %p27
    %p34 = scmp.eq.s32.totalorder %s18, 1
    %p35 = por %p33, %p34
    %p36 = scmp.ne.s32.totalorder %s28, %s31
    %p37 = scmp.eq.s32.totalorder %s18, 0
    %p38 = por %p36, %p37
    %p39 = scmp.ne.s32.totalorder %s28, %s31
    %p40 = scmp.eq.s32.totalorder %s23, 1
    %p41 = por %p39, %p40
    %p42 = scmp.ne.s32.totalorder %s31, %s32
    %p43 = scmp.eq.s32.totalorder %s23, 0
    %p44 = por %p42, %p43
    %p45 = scmp.ne.s32.totalorder %s31, %s32
    %p46 = scmp.eq.s32.totalorder %s24, 1
    %p47 = por %p45, %p46
    %p49 = scmp.ne.s32.totalorder %s32, %s48
    %p50 = scmp.eq.s32.totalorder %s24, 0
    %p51 = por %p49, %p50
    %s52 = ssub.s32 %s18, %s25
    %p53 = scmp.eq.s32.totalorder %s52, 0
    %s55 = sadd.s32 %s54, 1
    %s56 = scalar_select %p53, %s54, %s55
    %p59 = pneg %p53
    %p60 = scmp.eq.s32.totalorder %s18, 1
    %p61 = por %p59, %p60
    %p62 = scmp.ne.s32.totalorder %s54, %s57
    %p63 = scmp.eq.s32.totalorder %s18, 0
    %p64 = por %p62, %p63
    %p65 = scmp.ne.s32.totalorder %s54, %s57
    %p66 = scmp.eq.s32.totalorder %s23, 1
    %p67 = por %p65, %p66
    %p68 = scmp.ne.s32.totalorder %s57, %s58
    %p69 = scmp.eq.s32.totalorder %s23, 0
    %p70 = por %p68, %p69
    %p71 = scmp.ne.s32.totalorder %s57, %s58
    %p72 = scmp.eq.s32.totalorder %s24, 1
    %p73 = por %p71, %p72
    %p75 = scmp.ne.s32.totalorder %s58, %s74
    %p76 = scmp.eq.s32.totalorder %s24, 0
    %p77 = por %p75, %p76
    %s78 = ssub.s32 %s18, %s25
    %p79 = scmp.eq.s32.totalorder %s78, 0
    %s81 = sadd.s32 %s80, 1
    %s82 = scalar_select %p79, %s80, %s81
    %p85 = pneg %p79
    %p86 = scmp.eq.s32.totalorder %s18, 1
    %p87 = por %p85, %p86
    %p88 = scmp.ne.s32.totalorder %s80, %s83
    %p89 = scmp.eq.s32.totalorder %s18, 0
    %p90 = por %p88, %p89
    %p91 = scmp.ne.s32.totalorder %s80, %s83
    %p92 = scmp.eq.s32.totalorder %s23, 1
    %p93 = por %p91, %p92
    %p94 = scmp.ne.s32.totalorder %s83, %s84
    %p95 = scmp.eq.s32.totalorder %s23, 0
    %p96 = por %p94, %p95
    %p97 = scmp.ne.s32.totalorder %s83, %s84
    %p98 = scmp.eq.s32.totalorder %s24, 1
    %p99 = por %p97, %p98
    %p101 = scmp.ne.s32.totalorder %s84, %s100
    %p102 = scmp.eq.s32.totalorder %s24, 0
    %p103 = por %p101, %p102
    %s104 = ssub.s32 %s18, %s25
    %p105 = scmp.eq.s32.totalorder %s104, 0
    %s107 = sadd.s32 %s106, 1
    %s108 = scalar_select %p105, %s106, %s107
    %p111 = pneg %p105
    %p112 = scmp.eq.s32.totalorder %s18, 1
    %p113 = por %p111, %p112
    %p114 = scmp.ne.s32.totalorder %s106, %s109
    %p115 = scmp.eq.s32.totalorder %s18, 0
    %p116 = por %p114, %p115
    %p117 = scmp.ne.s32.totalorder %s106, %s109
    %p118 = scmp.eq.s32.totalorder %s23, 1
    %p119 = por %p117, %p118
    %p120 = scmp.ne.s32.totalorder %s109, %s110
    %p121 = scmp.eq.s32.totalorder %s23, 0
    %p122 = por %p120, %p121
    %p123 = scmp.ne.s32.totalorder %s109, %s110
    %p124 = scmp.eq.s32.totalorder %s24, 1
    %p125 = por %p123, %p124
    %p127 = scmp.ne.s32.totalorder %s110, %s126
    %p128 = scmp.eq.s32.totalorder %s24, 0
    %p129 = por %p127, %p128
    %s131 = sadd.s32 %s130, 1
    %p134 = scmp.eq.s32.totalorder %s18, 1
    %p135 = scmp.ne.s32.totalorder %s130, %s132
    %p136 = scmp.eq.s32.totalorder %s18, 0
    %p137 = por %p135, %p136
    %p138 = scmp.ne.s32.totalorder %s130, %s132
    %p139 = scmp.eq.s32.totalorder %s23, 1
    %p140 = por %p138, %p139
    %p141 = scmp.ne.s32.totalorder %s132, %s133
    %p142 = scmp.eq.s32.totalorder %s23, 0
    %p143 = por %p141, %p142
    %p144 = scmp.ne.s32.totalorder %s132, %s133
    %p145 = scmp.eq.s32.totalorder %s24, 1
    %p146 = por %p144, %p145
    %p148 = scmp.ne.s32.totalorder %s133, %s147
    %p149 = scmp.eq.s32.totalorder %s24, 0
    %p150 = por %p148, %p149
    %s152 = sadd.s32 %s151, 1
    %p155 = scmp.eq.s32.totalorder %s18, 1
    %p156 = scmp.ne.s32.totalorder %s151, %s153
    %p157 = scmp.eq.s32.totalorder %s18, 0
    %p158 = por %p156, %p157
    %p159 = scmp.ne.s32.totalorder %s151, %s153
    %p160 = scmp.eq.s32.totalorder %s23, 1
    %p161 = por %p159, %p160
    %p162 = scmp.ne.s32.totalorder %s153, %s154
    %p163 = scmp.eq.s32.totalorder %s23, 0
    %p164 = por %p162, %p163
    %p165 = scmp.ne.s32.totalorder %s153, %s154
    %p166 = scmp.eq.s32.totalorder %s24, 1
    %p167 = por %p165, %p166
    %p169 = scmp.ne.s32.totalorder %s154, %s168
    %p170 = scmp.eq.s32.totalorder %s24, 0
    %p171 = por %p169, %p170
    %s173 = sadd.s32 %s172, 1
    %p176 = scmp.eq.s32.totalorder %s18, 1
    %p177 = scmp.ne.s32.totalorder %s172, %s174
    %p178 = scmp.eq.s32.totalorder %s18, 0
    %p179 = por %p177, %p178
    %p180 = scmp.ne.s32.totalorder %s172, %s174
    %p181 = scmp.eq.s32.totalorder %s23, 1
    %p182 = por %p180, %p181
    %p183 = scmp.ne.s32.totalorder %s174, %s175
    %p184 = scmp.eq.s32.totalorder %s23, 0
    %p185 = por %p183, %p184
    %p186 = scmp.ne.s32.totalorder %s174, %s175
    %p187 = scmp.eq.s32.totalorder %s24, 1
    %p188 = por %p186, %p187
    %p190 = scmp.ne.s32.totalorder %s175, %s189
    %p191 = scmp.eq.s32.totalorder %s24, 0
    %p192 = por %p190, %p191
    %s194 = sadd.s32 %s193, 1
    %p197 = scmp.eq.s32.totalorder %s18, 1
    %p198 = scmp.ne.s32.totalorder %s193, %s195
    %p199 = scmp.eq.s32.totalorder %s18, 0
    %p200 = por %p198, %p199
    %p201 = scmp.ne.s32.totalorder %s193, %s195
    %p202 = scmp.eq.s32.totalorder %s23, 1
    %p203 = por %p201, %p202
    %p204 = scmp.ne.s32.totalorder %s195, %s196
    %p205 = scmp.eq.s32.totalorder %s23, 0
    %p206 = por %p204, %p205
    %p207 = scmp.ne.s32.totalorder %s195, %s196
    %p208 = scmp.eq.s32.totalorder %s24, 1
    %p209 = por %p207, %p208
    %p211 = scmp.ne.s32.totalorder %s196, %s210
    %p212 = scmp.eq.s32.totalorder %s24, 0
    %p213 = por %p211, %p212
    %s215 = sadd.s32 %s214, 1
    %p218 = scmp.eq.s32.totalorder %s18, 1
    %p219 = scmp.ne.s32.totalorder %s214, %s216
    %p220 = scmp.eq.s32.totalorder %s18, 0
    %p221 = por %p219, %p220
    %p222 = scmp.ne.s32.totalorder %s214, %s216
    %p223 = scmp.eq.s32.totalorder %s23, 1
    %p224 = por %p222, %p223
    %p225 = scmp.ne.s32.totalorder %s216, %s217
    %p226 = scmp.eq.s32.totalorder %s23, 0
    %p227 = por %p225, %p226
    %p228 = scmp.ne.s32.totalorder %s216, %s217
    %p229 = scmp.eq.s32.totalorder %s24, 1
    %p230 = por %p228, %p229
    %p232 = scmp.ne.s32.totalorder %s217, %s231
    %p233 = scmp.eq.s32.totalorder %s24, 0
    %p234 = por %p232, %p233
    %s236 = sadd.s32 %s235, 1
    %p239 = scmp.eq.s32.totalorder %s18, 1
    %p240 = scmp.ne.s32.totalorder %s235, %s237
    %p241 = scmp.eq.s32.totalorder %s18, 0
    %p242 = por %p240, %p241
    %p243 = scmp.ne.s32.totalorder %s235, %s237
    %p244 = scmp.eq.s32.totalorder %s23, 1
    %p245 = por %p243, %p244
    %p246 = scmp.ne.s32.totalorder %s237, %s238
    %p247 = scmp.eq.s32.totalorder %s23, 0
    %p248 = por %p246, %p247
    %p249 = scmp.ne.s32.totalorder %s237, %s238
    %p250 = scmp.eq.s32.totalorder %s24, 1
    %p251 = por %p249, %p250
    %p253 = scmp.ne.s32.totalorder %s238, %s252
    %p254 = scmp.eq.s32.totalorder %s24, 0
    %p255 = por %p253, %p254
    %s257 = sadd.s32 %s256, 1
    %p260 = scmp.eq.s32.totalorder %s18, 1
    %p261 = scmp.ne.s32.totalorder %s256, %s258
    %p262 = scmp.eq.s32.totalorder %s18, 0
    %p263 = por %p261, %p262
    %p264 = scmp.ne.s32.totalorder %s256, %s258
    %p265 = scmp.eq.s32.totalorder %s23, 1
    %p266 = por %p264, %p265
    %p267 = scmp.ne.s32.totalorder %s258, %s259
    %p268 = scmp.eq.s32.totalorder %s23, 0
    %p269 = por %p267, %p268
    %p270 = scmp.ne.s32.totalorder %s258, %s259
    %p271 = scmp.eq.s32.totalorder %s24, 1
    %p272 = por %p270, %p271
    %p274 = scmp.ne.s32.totalorder %s259, %s273
    %p275 = scmp.eq.s32.totalorder %s24, 0
    %p276 = por %p274, %p275
    %s278 = sadd.s32 %s277, 1
    %p281 = scmp.eq.s32.totalorder %s18, 1
    %p282 = scmp.ne.s32.totalorder %s277, %s279
    %p283 = scmp.eq.s32.totalorder %s18, 0
    %p284 = por %p282, %p283
    %p285 = scmp.ne.s32.totalorder %s277, %s279
    %p286 = scmp.eq.s32.totalorder %s23, 1
    %p287 = por %p285, %p286
    %p288 = scmp.ne.s32.totalorder %s279, %s280
    %p289 = scmp.eq.s32.totalorder %s23, 0
    %p290 = por %p288, %p289
    %p291 = scmp.ne.s32.totalorder %s279, %s280
    %p292 = scmp.eq.s32.totalorder %s24, 1
    %p293 = por %p291, %p292
    %p295 = scmp.ne.s32.totalorder %s280, %s294
    %p296 = scmp.eq.s32.totalorder %s24, 0
    %p297 = por %p295, %p296
    %s298 = ssub.s32 %s18, %s25
    %p299 = scmp.eq.s32.totalorder %s298, 0
    %s301 = sadd.s32 %s300, 1
    %s302 = scalar_select %p299, %s300, %s301
    %p305 = pneg %p299
    %p306 = scmp.eq.s32.totalorder %s18, 1
    %p307 = por %p305, %p306
    %p308 = scmp.ne.s32.totalorder %s300, %s303
    %p309 = scmp.eq.s32.totalorder %s18, 0
    %p310 = por %p308, %p309
    %p311 = scmp.ne.s32.totalorder %s300, %s303
    %p312 = scmp.eq.s32.totalorder %s23, 1
    %p313 = por %p311, %p312
    %p314 = scmp.ne.s32.totalorder %s303, %s304
    %p315 = scmp.eq.s32.totalorder %s23, 0
    %p316 = por %p314, %p315
    %p317 = scmp.ne.s32.totalorder %s303, %s304
    %p318 = scmp.eq.s32.totalorder %s24, 1
    %p319 = por %p317, %p318
    %p321 = scmp.ne.s32.totalorder %s304, %s320
    %p322 = scmp.eq.s32.totalorder %s24, 0
    %p323 = por %p321, %p322
    %p324 = scmp.le.s32.totalorder 1, %s18
    %p325 = scmp.lt.s32.totalorder %s18, 3
    %p326 = pnand %p324, %p325
    %p327 = pneg %p326
    // Predicated region
    $region9: #{vit_forward.8} parent=5 // pred_check
      _
    $region10: #{vit_forward.8} parent=5 // pred_check_branch
      %329 = sbr.rel (%p326) target = $region12
    $region11: #{vit_forward.8} parent=5 // pred_region
      %s330 = ssub.s32 %s18, 1
      // Predicated region
      $region13: #{vit_forward.8} parent=11 // pred_check
        %p331 = pneg %p143
      $region14: #{vit_forward.8} parent=11 // pred_check_branch
        %333 = sbr.rel (%p331) target = $region16
      $region15: #{vit_forward.8} parent=11 // pred_region
        _
      $region16: #{vit_forward.8} parent=11 // pred_fallthru
        _
      // Predicated region
      $region17: #{vit_forward.8} parent=11 // pred_check
        %p334 = pneg %p164
      $region18: #{vit_forward.8} parent=11 // pred_check_branch
        %336 = sbr.rel (%p334) target = $region20
      $region19: #{vit_forward.8} parent=11 // pred_region
        _
      $region20: #{vit_forward.8} parent=11 // pred_fallthru
        _
      // Predicated region
      $region21: #{vit_forward.8} parent=11 // pred_check
        %p337 = pneg %p185
      $region22: #{vit_forward.8} parent=11 // pred_check_branch
        %339 = sbr.rel (%p337) target = $region24
      $region23: #{vit_forward.8} parent=11 // pred_region
        _
      $region24: #{vit_forward.8} parent=11 // pred_fallthru
        _
      // Predicated region
      $region25: #{vit_forward.8} parent=11 // pred_check
        %p340 = pneg %p206
      $region26: #{vit_forward.8} parent=11 // pred_check_branch
        %342 = sbr.rel (%p340) target = $region28
      $region27: #{vit_forward.8} parent=11 // pred_region
        _
      $region28: #{vit_forward.8} parent=11 // pred_fallthru
        _
      // Predicated region
      $region29: #{vit_forward.8} parent=11 // pred_check
        %p343 = pneg %p227
      $region30: #{vit_forward.8} parent=11 // pred_check_branch
        %345 = sbr.rel (%p343) target = $region32
      $region31: #{vit_forward.8} parent=11 // pred_region
        _
      $region32: #{vit_forward.8} parent=11 // pred_fallthru
        _
      // Predicated region
      $region33: #{vit_forward.8} parent=11 // pred_check
        %p346 = pneg %p248
      $region34: #{vit_forward.8} parent=11 // pred_check_branch
        %348 = sbr.rel (%p346) target = $region36
      $region35: #{vit_forward.8} parent=11 // pred_region
        _
      $region36: #{vit_forward.8} parent=11 // pred_fallthru
        _
      // Predicated region
      $region37: #{vit_forward.8} parent=11 // pred_check
        %p349 = pneg %p269
      $region38: #{vit_forward.8} parent=11 // pred_check_branch
        %351 = sbr.rel (%p349) target = $region40
      $region39: #{vit_forward.8} parent=11 // pred_region
        _
      $region40: #{vit_forward.8} parent=11 // pred_fallthru
        _
      // Predicated region
      $region41: #{vit_forward.8} parent=11 // pred_check
        %p352 = pneg %p290
      $region42: #{vit_forward.8} parent=11 // pred_check_branch
        %354 = sbr.rel (%p352) target = $region44
      $region43: #{vit_forward.8} parent=11 // pred_region
        _
      $region44: #{vit_forward.8} parent=11 // pred_fallthru
        _
    $region12: #{vit_forward.8} parent=5 // pred_fallthru
      _
    %p355 = scmp.lt.s32.totalorder %s18, 2
    // Predicated region
    $region45: #{vit_forward.8} parent=5 // pred_check
      %p356 = pneg %p355
    $region46: #{vit_forward.8} parent=5 // pred_check_branch
      %358 = sbr.rel (%p356) target = $region48
    $region47: #{vit_forward.8} parent=5 // pred_region
      // Predicated region
      $region49: #{vit_forward.8} parent=47 // pred_check
        %p359 = pneg %p38
      $region50: #{vit_forward.8} parent=47 // pred_check_branch
        %361 = sbr.rel (%p359) target = $region52
      $region51: #{vit_forward.8} parent=47 // pred_region
        %p362 = scmp.lt.s32.totalorder %s18, 1
        %s363 = scalar_select %p362, %s18, 1
        %s364 = smul.addr %s363, 12
        %s365 = smul.addr %s364, 4
        %s366 = scalar_lea.vmem %s0, %s365
      $region52: #{vit_forward.8} parent=47 // pred_fallthru
        _
      // Predicated region
      $region53: #{vit_forward.8} parent=47 // pred_check
        %p367 = pneg %p64
      $region54: #{vit_forward.8} parent=47 // pred_check_branch
        %369 = sbr.rel (%p367) target = $region56
      $region55: #{vit_forward.8} parent=47 // pred_region
        %p370 = scmp.lt.s32.totalorder %s18, 1
        %s371 = scalar_select %p370, %s18, 1
        %s372 = smul.addr %s371, 16
        %s373 = smul.addr %s372, 4
        %s374 = scalar_lea.vmem %s1, %s373
      $region56: #{vit_forward.8} parent=47 // pred_fallthru
        _
      // Predicated region
      $region57: #{vit_forward.8} parent=47 // pred_check
        %p375 = pneg %p90
      $region58: #{vit_forward.8} parent=47 // pred_check_branch
        %377 = sbr.rel (%p375) target = $region60
      $region59: #{vit_forward.8} parent=47 // pred_region
        %p378 = scmp.lt.s32.totalorder %s18, 1
        %s379 = scalar_select %p378, %s18, 1
        %s380 = smul.addr %s379, 12
        %s381 = smul.addr %s380, 4
        %s382 = scalar_lea.vmem %s2, %s381
      $region60: #{vit_forward.8} parent=47 // pred_fallthru
        _
      // Predicated region
      $region61: #{vit_forward.8} parent=47 // pred_check
        %p383 = pneg %p116
      $region62: #{vit_forward.8} parent=47 // pred_check_branch
        %385 = sbr.rel (%p383) target = $region64
      $region63: #{vit_forward.8} parent=47 // pred_region
        %p386 = scmp.lt.s32.totalorder %s18, 1
        %s387 = scalar_select %p386, %s18, 1
        %s388 = smul.addr %s387, 3
        %s389 = smul.addr %s388, 8
        %s390 = scalar_lea.vmem %s3, %s389
      $region64: #{vit_forward.8} parent=47 // pred_fallthru
        _
    $region48: #{vit_forward.8} parent=5 // pred_fallthru
      _
    %p391 = scmp.le.s32.totalorder 1, %s18
    %p392 = scmp.lt.s32.totalorder %s18, 3
    %p393 = pnand %p391, %p392
    %p394 = pneg %p393
    // Predicated region
    $region65: #{vit_forward.8} parent=5 // pred_check
      _
    $region66: #{vit_forward.8} parent=5 // pred_check_branch
      %396 = sbr.rel (%p393) target = $region68
    $region67: #{vit_forward.8} parent=5 // pred_region
      %s397 = ssub.s32 %s18, 1
      %p398 = scmp.lt.s32.totalorder %s23, 1
      %s399 = scalar_select %p398, %s23, 1
      %s400 = smul.addr %s399, 12
      %s401 = smul.addr %s400, 4
      %s402 = scalar_lea.vmem %s0, %s401
      %p403 = pneg %p44
      %p404 = pneg %p41
      %p405 = scmp.lt.s32.totalorder %s23, 1
      %s406 = scalar_select %p405, %s23, 1
      %s407 = smul.addr %s406, 16
      %s408 = smul.addr %s407, 4
      %s409 = scalar_lea.vmem %s1, %s408
      %p410 = pneg %p70
      %p411 = pneg %p67
      %p412 = scmp.lt.s32.totalorder %s23, 1
      %s413 = scalar_select %p412, %s23, 1
      %s414 = smul.addr %s413, 12
      %s415 = smul.addr %s414, 4
      %s416 = scalar_lea.vmem %s2, %s415
      %p417 = pneg %p96
      %p418 = pneg %p93
      %p419 = scmp.lt.s32.totalorder %s23, 1
      %s420 = scalar_select %p419, %s23, 1
      %s421 = smul.addr %s420, 3
      %s422 = smul.addr %s421, 8
      %s423 = scalar_lea.vmem %s3, %s422
      %p424 = pneg %p122
      %p425 = pneg %p119
      %p426 = pneg %p143
      %p427 = pneg %p140
      %p428 = pneg %p164
      %p429 = pneg %p161
      %p430 = pneg %p185
      %p431 = pneg %p182
      %p432 = pneg %p206
      %p433 = pneg %p203
      %p434 = pneg %p227
      %p435 = pneg %p224
      %p436 = pneg %p248
      %p437 = pneg %p245
      %p438 = pneg %p269
      %p439 = pneg %p266
      %p440 = pneg %p290
      %p441 = pneg %p287
      %p442 = pneg %p316
      %p443 = pneg %p313
      %p444 = scmp.lt.s32.totalorder %s23, 1
      %s445 = scalar_select %p444, %s23, 1
      %s446 = smul.addr %s445, 3
      %s447 = smul.addr %s446, 8
      %s448 = scalar_lea.vmem %s12, %s447
      %p449 = scmp.lt.s32.totalorder %s23, 1
      %s450 = scalar_select %p449, %s23, 1
      %s451 = smul.addr %s450, 12
      %s452 = smul.addr %s451, 4
      %s453 = scalar_lea.vmem %s0, %s452
      %p454 = scmp.lt.s32.totalorder %s23, 1
      %s455 = scalar_select %p454, %s23, 1
      %s456 = smul.addr %s455, 16
      %s457 = smul.addr %s456, 4
      %s458 = scalar_lea.vmem %s1, %s457
      %p459 = scmp.lt.s32.totalorder %s23, 1
      %s460 = scalar_select %p459, %s23, 1
      %s461 = smul.addr %s460, 12
      %s462 = smul.addr %s461, 4
      %s463 = scalar_lea.vmem %s2, %s462
      %p464 = scmp.lt.s32.totalorder %s23, 1
      %s465 = scalar_select %p464, %s23, 1
      %s466 = smul.addr %s465, 3
      %s467 = smul.addr %s466, 8
      %s468 = scalar_lea.vmem %s3, %s467
      %p469 = scmp.lt.s32.totalorder %s23, 1
      %s470 = scalar_select %p469, %s23, 1
      %s471 = smul.addr %s470, 3
      %s472 = smul.addr %s471, 8
      %s473 = scalar_lea.vmem %s12, %s472
      %v475 = vld [vmem:[%s453] sm:$0xf]
      %v476 = vld [vmem:[%s453 + $0x4] sm:$0xf]
      %v477 = vld [vmem:[%s453 + $0x8] sm:$0xf]
      %v478 = vld [vmem:[%s453 + $0xc] sm:$0xf]
      %v479 = vld [vmem:[%s453 + $0x10] sm:$0xf]
      %v480 = vld [vmem:[%s453 + $0x14] sm:$0xf]
      %v481 = vld [vmem:[%s453 + $0x18] sm:$0xf]
      %v482 = vld [vmem:[%s453 + $0x1c] sm:$0xf]
      %v483 = vld [vmem:[%s453 + $0x20] sm:$0xf]
      %v484 = vld [vmem:[%s453 + $0x24] sm:$0xf]
      %v485 = vld [vmem:[%s453 + $0x28] sm:$0xf]
      %v486 = vld [vmem:[%s453 + $0x2c] sm:$0xf]
      %v487 = vld [vmem:[%s458] sm:$0xf]
      %v488 = vld [vmem:[%s458 + $0x4] sm:$0xf]
      %v489 = vld [vmem:[%s458 + $0x8] sm:$0xf]
      %v490 = vld [vmem:[%s458 + $0xc] sm:$0xf]
      %v491 = vld [vmem:[%s458 + $0x10] sm:$0xf]
      %v492 = vld [vmem:[%s458 + $0x14] sm:$0xf]
      %v493 = vld [vmem:[%s458 + $0x18] sm:$0xf]
      %v494 = vld [vmem:[%s458 + $0x1c] sm:$0xf]
      %v495 = vld [vmem:[%s458 + $0x20] sm:$0xf]
      %v496 = vld [vmem:[%s458 + $0x24] sm:$0xf]
      %v497 = vld [vmem:[%s458 + $0x28] sm:$0xf]
      %v498 = vld [vmem:[%s458 + $0x2c] sm:$0xf]
      %v499 = vld [vmem:[%s458 + $0x30] sm:$0xf]
      %v500 = vld [vmem:[%s458 + $0x34] sm:$0xf]
      %v501 = vld [vmem:[%s458 + $0x38] sm:$0xf]
      %v502 = vld [vmem:[%s458 + $0x3c] sm:$0xf]
      %v506 = vunpack.c.l.b16 %v475
      %v507 = vunpack.c.l.b16 %v476
      %v508 = vunpack.c.l.b16 %v477
      %v509 = vpack.c.b16 %v507, %v506
      %v510 = vpack.c.b16 %v508, %v508
      %v515 = vunpack.c.l.b16 %v487
      %v516 = vunpack.c.l.b16 %v488
      %v517 = vunpack.c.l.b16 %v489
      %v518 = vunpack.c.l.b16 %v490
      %v519 = vpack.c.b16 %v516, %v515
      %v520 = vpack.c.b16 %v518, %v517
      %vm523 = vcmask 261120
      %v525 = vsel %vm523, %v509, 0
      %v528 = vsel %vm523, %v510, 0
      %530 = vmatprep.subr.bf16.mxu0 0
      %531 = vmatpush1.bf16.msra.mxu0 %v519
      %532 = vmatprep.subr.bf16.mxu0 0
      %533 = vmatpush1.bf16.msra.mxu0 %v520
      %534 = vmatprep.subr.bf16.mxu0 0
      %535 = vmatpush1.bf16.msra.mxu0 0
      %536 = vmatprep.subr.bf16.mxu0 0
      %537 = vmatpush1.bf16.msra.mxu0 0
      %538 = vmatprep.subr.bf16.mxu0 0
      %539 = vmatpush1.bf16.msra.mxu0 0
      %540 = vmatprep.subr.bf16.mxu0 0
      %541 = vmatpush1.bf16.msra.mxu0 0
      %542 = vmatprep.subr.bf16.mxu0 0
      %543 = vmatpush1.bf16.msra.mxu0 0
      %544 = vmatprep.subr.bf16.mxu0 0
      %545 = vmatpush1.bf16.msra.mxu0 0
      %546 = vmatprep.subr.bf16.mxu0 0
      %547 = vmatpush1.bf16.msra.mxu0 0
      %548 = vmatprep.subr.bf16.mxu0 0
      %549 = vmatpush1.bf16.msra.mxu0 0
      %550 = vmatprep.subr.bf16.mxu0 0
      %551 = vmatpush1.bf16.msra.mxu0 0
      %552 = vmatprep.subr.bf16.mxu0 0
      %553 = vmatpush1.bf16.msra.mxu0 0
      %554 = vmatprep.subr.bf16.mxu0 0
      %555 = vmatpush1.bf16.msra.mxu0 0
      %556 = vmatprep.subr.bf16.mxu0 0
      %557 = vmatpush1.bf16.msra.mxu0 0
      %558 = vmatprep.subr.bf16.mxu0 0
      %559 = vmatpush1.bf16.msra.mxu0 0
      %560 = vmatprep.subr.bf16.mxu0 0
      %561 = vmatpush1.bf16.msra.mxu0 0
      %562 = vmatprep.mubr.bf16.mxu0 0
      %563 = vmatmul.mubr.bf16.gmra.mrb[0].mxu0 %v525
      %v564 = vpop.f32.mrb[0].mxu0
      %v565 = vadd.f32 0.0, %v564
      %v566 = vpop.f32.mrb[0].mxu0
      %v567 = vpop.f32.mrb[0].mxu0
      %v568 = vadd.f32 0.0, %v567
      %v569 = vpop.f32.mrb[0].mxu0
      %570 = vmatprep.mubr.bf16.mxu0 0
      %571 = vmatmul.mubr.bf16.gmra.mrb[0].mxu0 %v528
      %v572 = vpop.f32.mrb[0].mxu0
      %v573 = vadd.f32 0.0, %v572
      %v574 = vpop.f32.mrb[0].mxu0
      %v575 = vpop.f32.mrb[0].mxu0
      %v576 = vpop.f32.mrb[0].mxu0
      %577 = vdwg.mxu0
      %v581 = vunpack.c.l.b16 %v478
      %v582 = vunpack.c.l.b16 %v479
      %v583 = vunpack.c.l.b16 %v480
      %v584 = vpack.c.b16 %v582, %v581
      %v585 = vpack.c.b16 %v583, %v583
      %v590 = vunpack.c.l.b16 %v491
      %v591 = vunpack.c.l.b16 %v492
      %v592 = vunpack.c.l.b16 %v493
      %v593 = vunpack.c.l.b16 %v494
      %v594 = vpack.c.b16 %v591, %v590
      %v595 = vpack.c.b16 %v593, %v592
      %v599 = vsel %vm523, %v584, 0
      %v602 = vsel %vm523, %v585, 0
      %604 = vmatprep.subr.bf16.mxu0 0
      %605 = vmatpush1.bf16.msra.mxu0 %v594
      %606 = vmatprep.subr.bf16.mxu0 0
      %607 = vmatpush1.bf16.msra.mxu0 %v595
      %608 = vmatprep.subr.bf16.mxu0 0
      %609 = vmatpush1.bf16.msra.mxu0 0
      %610 = vmatprep.subr.bf16.mxu0 0
      %611 = vmatpush1.bf16.msra.mxu0 0
      %612 = vmatprep.subr.bf16.mxu0 0
      %613 = vmatpush1.bf16.msra.mxu0 0
      %614 = vmatprep.subr.bf16.mxu0 0
      %615 = vmatpush1.bf16.msra.mxu0 0
      %616 = vmatprep.subr.bf16.mxu0 0
      %617 = vmatpush1.bf16.msra.mxu0 0
      %618 = vmatprep.subr.bf16.mxu0 0
      %619 = vmatpush1.bf16.msra.mxu0 0
      %620 = vmatprep.subr.bf16.mxu0 0
      %621 = vmatpush1.bf16.msra.mxu0 0
      %622 = vmatprep.subr.bf16.mxu0 0
      %623 = vmatpush1.bf16.msra.mxu0 0
      %624 = vmatprep.subr.bf16.mxu0 0
      %625 = vmatpush1.bf16.msra.mxu0 0
      %626 = vmatprep.subr.bf16.mxu0 0
      %627 = vmatpush1.bf16.msra.mxu0 0
      %628 = vmatprep.subr.bf16.mxu0 0
      %629 = vmatpush1.bf16.msra.mxu0 0
      %630 = vmatprep.subr.bf16.mxu0 0
      %631 = vmatpush1.bf16.msra.mxu0 0
      %632 = vmatprep.subr.bf16.mxu0 0
      %633 = vmatpush1.bf16.msra.mxu0 0
      %634 = vmatprep.subr.bf16.mxu0 0
      %635 = vmatpush1.bf16.msra.mxu0 0
      %636 = vmatprep.mubr.bf16.mxu0 0
      %637 = vmatmul.mubr.bf16.gmra.mrb[0].mxu0 %v599
      %v638 = vpop.f32.mrb[0].mxu0
      %v639 = vadd.f32 0.0, %v638
      %v640 = vpop.f32.mrb[0].mxu0
      %v641 = vpop.f32.mrb[0].mxu0
      %v642 = vadd.f32 0.0, %v641
      %v643 = vpop.f32.mrb[0].mxu0
      %644 = vmatprep.mubr.bf16.mxu0 0
      %645 = vmatmul.mubr.bf16.gmra.mrb[0].mxu0 %v602
      %v646 = vpop.f32.mrb[0].mxu0
      %v647 = vadd.f32 0.0, %v646
      %v648 = vpop.f32.mrb[0].mxu0
      %v649 = vpop.f32.mrb[0].mxu0
      %v650 = vpop.f32.mrb[0].mxu0
      %651 = vdwg.mxu0
      %v655 = vunpack.c.l.b16 %v481
      %v656 = vunpack.c.l.b16 %v482
      %v657 = vunpack.c.l.b16 %v483
      %v658 = vpack.c.b16 %v656, %v655
      %v659 = vpack.c.b16 %v657, %v657
      %v664 = vunpack.c.l.b16 %v495
      %v665 = vunpack.c.l.b16 %v496
      %v666 = vunpack.c.l.b16 %v497
      %v667 = vunpack.c.l.b16 %v498
      %v668 = vpack.c.b16 %v665, %v664
      %v669 = vpack.c.b16 %v667, %v666
      %v673 = vsel %vm523, %v658, 0
      %v676 = vsel %vm523, %v659, 0
      %678 = vmatprep.subr.bf16.mxu0 0
      %679 = vmatpush1.bf16.msra.mxu0 %v668
      %680 = vmatprep.subr.bf16.mxu0 0
      %681 = vmatpush1.bf16.msra.mxu0 %v669
      %682 = vmatprep.subr.bf16.mxu0 0
      %683 = vmatpush1.bf16.msra.mxu0 0
      %684 = vmatprep.subr.bf16.mxu0 0
      %685 = vmatpush1.bf16.msra.mxu0 0
      %686 = vmatprep.subr.bf16.mxu0 0
      %687 = vmatpush1.bf16.msra.mxu0 0
      %688 = vmatprep.subr.bf16.mxu0 0
      %689 = vmatpush1.bf16.msra.mxu0 0
      %690 = vmatprep.subr.bf16.mxu0 0
      %691 = vmatpush1.bf16.msra.mxu0 0
      %692 = vmatprep.subr.bf16.mxu0 0
      %693 = vmatpush1.bf16.msra.mxu0 0
      %694 = vmatprep.subr.bf16.mxu0 0
      %695 = vmatpush1.bf16.msra.mxu0 0
      %696 = vmatprep.subr.bf16.mxu0 0
      %697 = vmatpush1.bf16.msra.mxu0 0
      %698 = vmatprep.subr.bf16.mxu0 0
      %699 = vmatpush1.bf16.msra.mxu0 0
      %700 = vmatprep.subr.bf16.mxu0 0
      %701 = vmatpush1.bf16.msra.mxu0 0
      %702 = vmatprep.subr.bf16.mxu0 0
      %703 = vmatpush1.bf16.msra.mxu0 0
      %704 = vmatprep.subr.bf16.mxu0 0
      %705 = vmatpush1.bf16.msra.mxu0 0
      %706 = vmatprep.subr.bf16.mxu0 0
      %707 = vmatpush1.bf16.msra.mxu0 0
      %708 = vmatprep.subr.bf16.mxu0 0
      %709 = vmatpush1.bf16.msra.mxu0 0
      %710 = vmatprep.mubr.bf16.mxu0 0
      %711 = vmatmul.mubr.bf16.gmra.mrb[0].mxu0 %v673
      %v712 = vpop.f32.mrb[0].mxu0
      %v713 = vadd.f32 0.0, %v712
      %v714 = vpop.f32.mrb[0].mxu0
      %v715 = vpop.f32.mrb[0].mxu0
      %v716 = vadd.f32 0.0, %v715
      %v717 = vpop.f32.mrb[0].mxu0
      %718 = vmatprep.mubr.bf16.mxu0 0
      %719 = vmatmul.mubr.bf16.gmra.mrb[0].mxu0 %v676
      %v720 = vpop.f32.mrb[0].mxu0
      %v721 = vadd.f32 0.0, %v720
      %v722 = vpop.f32.mrb[0].mxu0
      %v723 = vpop.f32.mrb[0].mxu0
      %v724 = vpop.f32.mrb[0].mxu0
      %725 = vdwg.mxu0
      %v729 = vunpack.c.l.b16 %v484
      %v730 = vunpack.c.l.b16 %v485
      %v731 = vunpack.c.l.b16 %v486
      %v732 = vpack.c.b16 %v730, %v729
      %v733 = vpack.c.b16 %v731, %v731
      %v738 = vunpack.c.l.b16 %v499
      %v739 = vunpack.c.l.b16 %v500
      %v740 = vunpack.c.l.b16 %v501
      %v741 = vunpack.c.l.b16 %v502
      %v742 = vpack.c.b16 %v739, %v738
      %v743 = vpack.c.b16 %v741, %v740
      %v747 = vsel %vm523, %v732, 0
      %v750 = vsel %vm523, %v733, 0
      %752 = vmatprep.subr.bf16.mxu0 0
      %753 = vmatpush1.bf16.msra.mxu0 %v742
      %754 = vmatprep.subr.bf16.mxu0 0
      %755 = vmatpush1.bf16.msra.mxu0 %v743
      %756 = vmatprep.subr.bf16.mxu0 0
      %757 = vmatpush1.bf16.msra.mxu0 0
      %758 = vmatprep.subr.bf16.mxu0 0
      %759 = vmatpush1.bf16.msra.mxu0 0
      %760 = vmatprep.subr.bf16.mxu0 0
      %761 = vmatpush1.bf16.msra.mxu0 0
      %762 = vmatprep.subr.bf16.mxu0 0
      %763 = vmatpush1.bf16.msra.mxu0 0
      %764 = vmatprep.subr.bf16.mxu0 0
      %765 = vmatpush1.bf16.msra.mxu0 0
      %766 = vmatprep.subr.bf16.mxu0 0
      %767 = vmatpush1.bf16.msra.mxu0 0
      %768 = vmatprep.subr.bf16.mxu0 0
      %769 = vmatpush1.bf16.msra.mxu0 0
      %770 = vmatprep.subr.bf16.mxu0 0
      %771 = vmatpush1.bf16.msra.mxu0 0
      %772 = vmatprep.subr.bf16.mxu0 0
      %773 = vmatpush1.bf16.msra.mxu0 0
      %774 = vmatprep.subr.bf16.mxu0 0
      %775 = vmatpush1.bf16.msra.mxu0 0
      %776 = vmatprep.subr.bf16.mxu0 0
      %777 = vmatpush1.bf16.msra.mxu0 0
      %778 = vmatprep.subr.bf16.mxu0 0
      %779 = vmatpush1.bf16.msra.mxu0 0
      %780 = vmatprep.subr.bf16.mxu0 0
      %781 = vmatpush1.bf16.msra.mxu0 0
      %782 = vmatprep.subr.bf16.mxu0 0
      %783 = vmatpush1.bf16.msra.mxu0 0
      %784 = vmatprep.mubr.bf16.mxu0 0
      %785 = vmatmul.mubr.bf16.gmra.mrb[0].mxu0 %v747
      %v786 = vpop.f32.mrb[0].mxu0
      %v787 = vadd.f32 0.0, %v786
      %v788 = vpop.f32.mrb[0].mxu0
      %v789 = vpop.f32.mrb[0].mxu0
      %v790 = vadd.f32 0.0, %v789
      %v791 = vpop.f32.mrb[0].mxu0
      %792 = vmatprep.mubr.bf16.mxu0 0
      %793 = vmatmul.mubr.bf16.gmra.mrb[0].mxu0 %v750
      %v794 = vpop.f32.mrb[0].mxu0
      %v795 = vadd.f32 0.0, %v794
      %v796 = vpop.f32.mrb[0].mxu0
      %v797 = vpop.f32.mrb[0].mxu0
      %v798 = vpop.f32.mrb[0].mxu0
      %799 = vdwg.mxu0
      %v800 = vlaneseq
      %v801 = vand.u32 %v800, 127
      %vm802 = vcmp.lt.s32.totalorder %v801, 17
      %v803 = vsel %vm802, %v565, -1e+30
      %v804 = vsel %vm802, %v568, -1e+30
      %v805 = vsel %vm802, %v573, -1e+30
      %v806 = vsel %vm802, %v639, -1e+30
      %v807 = vsel %vm802, %v642, -1e+30
      %v808 = vsel %vm802, %v647, -1e+30
      %v809 = vsel %vm802, %v713, -1e+30
      %v810 = vsel %vm802, %v716, -1e+30
      %v811 = vsel %vm802, %v721, -1e+30
      %v812 = vsel %vm802, %v787, -1e+30
      %v813 = vsel %vm802, %v790, -1e+30
      %v814 = vsel %vm802, %v795, -1e+30
      %vm815 = vcmask 195584
      %v816 = vsel %vm815, %v803, -inf
      %817 = vmax.xlane.f32.xlu0 %v816
      %v818 = vpop.xlane.xlu0 %817
      %v819 = vsel %vm815, %v804, -inf
      %820 = vmax.xlane.f32.xlu0 %v819
      %v821 = vpop.xlane.xlu0 %820
      %v822 = vsel %vm815, %v805, -inf
      %823 = vmax.xlane.f32.xlu0 %v822
      %v824 = vpop.xlane.xlu0 %823
      %v825 = vsel %vm815, %v806, -inf
      %826 = vmax.xlane.f32.xlu0 %v825
      %v827 = vpop.xlane.xlu0 %826
      %v828 = vsel %vm815, %v807, -inf
      %829 = vmax.xlane.f32.xlu0 %v828
      %v830 = vpop.xlane.xlu0 %829
      %v831 = vsel %vm815, %v808, -inf
      %832 = vmax.xlane.f32.xlu0 %v831
      %v833 = vpop.xlane.xlu0 %832
      %v834 = vsel %vm815, %v809, -inf
      %835 = vmax.xlane.f32.xlu0 %v834
      %v836 = vpop.xlane.xlu0 %835
      %v837 = vsel %vm815, %v810, -inf
      %838 = vmax.xlane.f32.xlu0 %v837
      %v839 = vpop.xlane.xlu0 %838
      %v840 = vsel %vm815, %v811, -inf
      %841 = vmax.xlane.f32.xlu0 %v840
      %v842 = vpop.xlane.xlu0 %841
      %v843 = vsel %vm815, %v812, -inf
      %844 = vmax.xlane.f32.xlu0 %v843
      %v845 = vpop.xlane.xlu0 %844
      %v846 = vsel %vm815, %v813, -inf
      %847 = vmax.xlane.f32.xlu0 %v846
      %v848 = vpop.xlane.xlu0 %847
      %v849 = vsel %vm815, %v814, -inf
      %850 = vmax.xlane.f32.xlu0 %v849
      %v851 = vpop.xlane.xlu0 %850
      %v852 = vsub.f32 %v803, %v818
      %v853 = vsub.f32 %v804, %v821
      %v854 = vsub.f32 %v805, %v824
      %v855 = vsub.f32 %v806, %v827
      %v856 = vsub.f32 %v807, %v830
      %v857 = vsub.f32 %v808, %v833
      %v858 = vsub.f32 %v809, %v836
      %v859 = vsub.f32 %v810, %v839
      %v860 = vsub.f32 %v811, %v842
      %v861 = vsub.f32 %v812, %v845
      %v862 = vsub.f32 %v813, %v848
      %v863 = vsub.f32 %v814, %v851
      %v864 = vmul.f32 %v852, 1.442695
      %v865 = vpow.pop %v864
      %v866 = vmul.f32 %v853, 1.442695
      %v867 = vpow.pop %v866
      %v868 = vmul.f32 %v854, 1.442695
      %v869 = vpow.pop %v868
      %v870 = vmul.f32 %v855, 1.442695
      %v871 = vpow.pop %v870
      %v872 = vmul.f32 %v856, 1.442695
      %v873 = vpow.pop %v872
      %v874 = vmul.f32 %v857, 1.442695
      %v875 = vpow.pop %v874
      %v876 = vmul.f32 %v858, 1.442695
      %v877 = vpow.pop %v876
      %v878 = vmul.f32 %v859, 1.442695
      %v879 = vpow.pop %v878
      %v880 = vmul.f32 %v860, 1.442695
      %v881 = vpow.pop %v880
      %v882 = vmul.f32 %v861, 1.442695
      %v883 = vpow.pop %v882
      %v884 = vmul.f32 %v862, 1.442695
      %v885 = vpow.pop %v884
      %v886 = vmul.f32 %v863, 1.442695
      %v887 = vpow.pop %v886
      %v888 = vsel %vm815, %v865, 0.0
      %889 = vadd.xlane.f32.xlu0 %v888
      %v890 = vpop.xlane.xlu0 %889
      %v891 = vsel %vm815, %v867, 0.0
      %892 = vadd.xlane.f32.xlu0 %v891
      %v893 = vpop.xlane.xlu0 %892
      %v894 = vsel %vm815, %v869, 0.0
      %895 = vadd.xlane.f32.xlu0 %v894
      %v896 = vpop.xlane.xlu0 %895
      %v897 = vsel %vm815, %v871, 0.0
      %898 = vadd.xlane.f32.xlu0 %v897
      %v899 = vpop.xlane.xlu0 %898
      %v900 = vsel %vm815, %v873, 0.0
      %901 = vadd.xlane.f32.xlu0 %v900
      %v902 = vpop.xlane.xlu0 %901
      %v903 = vsel %vm815, %v875, 0.0
      %904 = vadd.xlane.f32.xlu0 %v903
      %v905 = vpop.xlane.xlu0 %904
      %v906 = vsel %vm815, %v877, 0.0
      %907 = vadd.xlane.f32.xlu0 %v906
      %v908 = vpop.xlane.xlu0 %907
      %v909 = vsel %vm815, %v879, 0.0
      %910 = vadd.xlane.f32.xlu0 %v909
      %v911 = vpop.xlane.xlu0 %910
      %v912 = vsel %vm815, %v881, 0.0
      %913 = vadd.xlane.f32.xlu0 %v912
      %v914 = vpop.xlane.xlu0 %913
      %v915 = vsel %vm815, %v883, 0.0
      %916 = vadd.xlane.f32.xlu0 %v915
      %v917 = vpop.xlane.xlu0 %916
      %v918 = vsel %vm815, %v885, 0.0
      %919 = vadd.xlane.f32.xlu0 %v918
      %v920 = vpop.xlane.xlu0 %919
      %v921 = vsel %vm815, %v887, 0.0
      %922 = vadd.xlane.f32.xlu0 %v921
      %v923 = vpop.xlane.xlu0 %922
      %v924 = vrcp.pop %v890
      %v925 = vrcp.pop %v893
      %v926 = vrcp.pop %v896
      %v927 = vrcp.pop %v899
      %v928 = vrcp.pop %v902
      %v929 = vrcp.pop %v905
      %v930 = vrcp.pop %v908
      %v931 = vrcp.pop %v911
      %v932 = vrcp.pop %v914
      %v933 = vrcp.pop %v917
      %v934 = vrcp.pop %v920
      %v935 = vrcp.pop %v923
      %v936 = vmul.f32 %v865, %v924
      %v937 = vmul.f32 %v867, %v925
      %v938 = vmul.f32 %v869, %v926
      %v939 = vmul.f32 %v871, %v927
      %v940 = vmul.f32 %v873, %v928
      %v941 = vmul.f32 %v875, %v929
      %v942 = vmul.f32 %v877, %v930
      %v943 = vmul.f32 %v879, %v931
      %v944 = vmul.f32 %v881, %v932
      %v945 = vmul.f32 %v883, %v933
      %v946 = vmul.f32 %v885, %v934
      %v947 = vmul.f32 %v887, %v935
      %v948 = vpack.c.bf16 %v937, %v936
      %v949 = vpack.c.bf16 %v938, %v938
      %v950 = vpack.c.bf16 %v940, %v939
      %v951 = vpack.c.bf16 %v941, %v941
      %v952 = vpack.c.bf16 %v943, %v942
      %v953 = vpack.c.bf16 %v944, %v944
      %v954 = vpack.c.bf16 %v946, %v945
      %v955 = vpack.c.bf16 %v947, %v947
      %v956 = vld [vmem:[%s463] sm:$0xf]
      %v957 = vld [vmem:[%s463 + $0x4] sm:$0xf]
      %v958 = vld [vmem:[%s463 + $0x8] sm:$0xf]
      %v959 = vld [vmem:[%s463 + $0xc] sm:$0xf]
      %v960 = vld [vmem:[%s463 + $0x10] sm:$0xf]
      %v961 = vld [vmem:[%s463 + $0x14] sm:$0xf]
      %v962 = vld [vmem:[%s463 + $0x18] sm:$0xf]
      %v963 = vld [vmem:[%s463 + $0x1c] sm:$0xf]
      %v964 = vld [vmem:[%s463 + $0x20] sm:$0xf]
      %v965 = vld [vmem:[%s463 + $0x24] sm:$0xf]
      %v966 = vld [vmem:[%s463 + $0x28] sm:$0xf]
      %v967 = vld [vmem:[%s463 + $0x2c] sm:$0xf]
      %v971 = vunpack.c.l.b16 %v956
      %v972 = vunpack.c.l.b16 %v957
      %v973 = vunpack.c.l.b16 %v958
      %v974 = vpack.c.b16 %v972, %v971
      %v975 = vpack.c.b16 %v973, %v973
      %v978 = vsel %vm815, %v948, 0
      %v981 = vsel %vm815, %v949, 0
      %vm983 = vcmask 1043456
      %v985 = vsel %vm983, %v975, 0
      %987 = vmatprep.subr.bf16.mxu0 0
      %988 = vmatpush1.bf16.msra.mxu0 %v974
      %989 = vmatprep.subr.bf16.mxu0 0
      %990 = vmatpush1.bf16.msra.mxu0 %v985
      %991 = vmatprep.subr.bf16.mxu0 0
      %992 = vmatpush1.bf16.msra.mxu0 0
      %993 = vmatprep.subr.bf16.mxu0 0
      %994 = vmatpush1.bf16.msra.mxu0 0
      %995 = vmatprep.subr.bf16.mxu0 0
      %996 = vmatpush1.bf16.msra.mxu0 0
      %997 = vmatprep.subr.bf16.mxu0 0
      %998 = vmatpush1.bf16.msra.mxu0 0
      %999 = vmatprep.subr.bf16.mxu0 0
      %1000 = vmatpush1.bf16.msra.mxu0 0
      %1001 = vmatprep.subr.bf16.mxu0 0
      %1002 = vmatpush1.bf16.msra.mxu0 0
      %1003 = vmatprep.subr.bf16.mxu0 0
      %1004 = vmatpush1.bf16.msra.mxu0 0
      %1005 = vmatprep.subr.bf16.mxu0 0
      %1006 = vmatpush1.bf16.msra.mxu0 0
      %1007 = vmatprep.subr.bf16.mxu0 0
      %1008 = vmatpush1.bf16.msra.mxu0 0
      %1009 = vmatprep.subr.bf16.mxu0 0
      %1010 = vmatpush1.bf16.msra.mxu0 0
      %1011 = vmatprep.subr.bf16.mxu0 0
      %1012 = vmatpush1.bf16.msra.mxu0 0
      %1013 = vmatprep.subr.bf16.mxu0 0
      %1014 = vmatpush1.bf16.msra.mxu0 0
      %1015 = vmatprep.subr.bf16.mxu0 0
      %1016 = vmatpush1.bf16.msra.mxu0 0
      %1017 = vmatprep.subr.bf16.mxu0 0
      %1018 = vmatpush1.bf16.msra.mxu0 0
      %1019 = vmatprep.mubr.bf16.mxu0 0
      %1020 = vmatmul.mubr.bf16.gmra.mrb[0].mxu0 %v978
      %v1021 = vpop.f32.mrb[0].mxu0
      %v1022 = vadd.f32 0.0, %v1021
      %v1023 = vpop.f32.mrb[0].mxu0
      %v1024 = vpop.f32.mrb[0].mxu0
      %v1025 = vadd.f32 0.0, %v1024
      %v1026 = vpop.f32.mrb[0].mxu0
      %1027 = vmatprep.mubr.bf16.mxu0 0
      %1028 = vmatmul.mubr.bf16.gmra.mrb[0].mxu0 %v981
      %v1029 = vpop.f32.mrb[0].mxu0
      %v1030 = vadd.f32 0.0, %v1029
      %v1031 = vpop.f32.mrb[0].mxu0
      %v1032 = vpop.f32.mrb[0].mxu0
      %v1033 = vpop.f32.mrb[0].mxu0
      %1034 = vdwg.mxu0
      %v1038 = vunpack.c.l.b16 %v959
      %v1039 = vunpack.c.l.b16 %v960
      %v1040 = vunpack.c.l.b16 %v961
      %v1041 = vpack.c.b16 %v1039, %v1038
      %v1042 = vpack.c.b16 %v1040, %v1040
      %v1045 = vsel %vm815, %v950, 0
      %v1048 = vsel %vm815, %v951, 0
      %v1051 = vsel %vm983, %v1042, 0
      %1053 = vmatprep.subr.bf16.mxu0 0
      %1054 = vmatpush1.bf16.msra.mxu0 %v1041
      %1055 = vmatprep.subr.bf16.mxu0 0
      %1056 = vmatpush1.bf16.msra.mxu0 %v1051
      %1057 = vmatprep.subr.bf16.mxu0 0
      %1058 = vmatpush1.bf16.msra.mxu0 0
      %1059 = vmatprep.subr.bf16.mxu0 0
      %1060 = vmatpush1.bf16.msra.mxu0 0
      %1061 = vmatprep.subr.bf16.mxu0 0
      %1062 = vmatpush1.bf16.msra.mxu0 0
      %1063 = vmatprep.subr.bf16.mxu0 0
      %1064 = vmatpush1.bf16.msra.mxu0 0
      %1065 = vmatprep.subr.bf16.mxu0 0
      %1066 = vmatpush1.bf16.msra.mxu0 0
      %1067 = vmatprep.subr.bf16.mxu0 0
      %1068 = vmatpush1.bf16.msra.mxu0 0
      %1069 = vmatprep.subr.bf16.mxu0 0
      %1070 = vmatpush1.bf16.msra.mxu0 0
      %1071 = vmatprep.subr.bf16.mxu0 0
      %1072 = vmatpush1.bf16.msra.mxu0 0
      %1073 = vmatprep.subr.bf16.mxu0 0
      %1074 = vmatpush1.bf16.msra.mxu0 0
      %1075 = vmatprep.subr.bf16.mxu0 0
      %1076 = vmatpush1.bf16.msra.mxu0 0
      %1077 = vmatprep.subr.bf16.mxu0 0
      %1078 = vmatpush1.bf16.msra.mxu0 0
      %1079 = vmatprep.subr.bf16.mxu0 0
      %1080 = vmatpush1.bf16.msra.mxu0 0
      %1081 = vmatprep.subr.bf16.mxu0 0
      %1082 = vmatpush1.bf16.msra.mxu0 0
      %1083 = vmatprep.subr.bf16.mxu0 0
      %1084 = vmatpush1.bf16.msra.mxu0 0
      %1085 = vmatprep.mubr.bf16.mxu0 0
      %1086 = vmatmul.mubr.bf16.gmra.mrb[0].mxu0 %v1045
      %v1087 = vpop.f32.mrb[0].mxu0
      %v1088 = vadd.f32 0.0, %v1087
      %v1089 = vpop.f32.mrb[0].mxu0
      %v1090 = vpop.f32.mrb[0].mxu0
      %v1091 = vadd.f32 0.0, %v1090
      %v1092 = vpop.f32.mrb[0].mxu0
      %1093 = vmatprep.mubr.bf16.mxu0 0
      %1094 = vmatmul.mubr.bf16.gmra.mrb[0].mxu0 %v1048
      %v1095 = vpop.f32.mrb[0].mxu0
      %v1096 = vadd.f32 0.0, %v1095
      %v1097 = vpop.f32.mrb[0].mxu0
      %v1098 = vpop.f32.mrb[0].mxu0
      %v1099 = vpop.f32.mrb[0].mxu0
      %1100 = vdwg.mxu0
      %v1104 = vunpack.c.l.b16 %v962
      %v1105 = vunpack.c.l.b16 %v963
      %v1106 = vunpack.c.l.b16 %v964
      %v1107 = vpack.c.b16 %v1105, %v1104
      %v1108 = vpack.c.b16 %v1106, %v1106
      %v1111 = vsel %vm815, %v952, 0
      %v1114 = vsel %vm815, %v953, 0
      %v1117 = vsel %vm983, %v1108, 0
      %1119 = vmatprep.subr.bf16.mxu0 0
      %1120 = vmatpush1.bf16.msra.mxu0 %v1107
      %1121 = vmatprep.subr.bf16.mxu0 0
      %1122 = vmatpush1.bf16.msra.mxu0 %v1117
      %1123 = vmatprep.subr.bf16.mxu0 0
      %1124 = vmatpush1.bf16.msra.mxu0 0
      %1125 = vmatprep.subr.bf16.mxu0 0
      %1126 = vmatpush1.bf16.msra.mxu0 0
      %1127 = vmatprep.subr.bf16.mxu0 0
      %1128 = vmatpush1.bf16.msra.mxu0 0
      %1129 = vmatprep.subr.bf16.mxu0 0
      %1130 = vmatpush1.bf16.msra.mxu0 0
      %1131 = vmatprep.subr.bf16.mxu0 0
      %1132 = vmatpush1.bf16.msra.mxu0 0
      %1133 = vmatprep.subr.bf16.mxu0 0
      %1134 = vmatpush1.bf16.msra.mxu0 0
      %1135 = vmatprep.subr.bf16.mxu0 0
      %1136 = vmatpush1.bf16.msra.mxu0 0
      %1137 = vmatprep.subr.bf16.mxu0 0
      %1138 = vmatpush1.bf16.msra.mxu0 0
      %1139 = vmatprep.subr.bf16.mxu0 0
      %1140 = vmatpush1.bf16.msra.mxu0 0
      %1141 = vmatprep.subr.bf16.mxu0 0
      %1142 = vmatpush1.bf16.msra.mxu0 0
      %1143 = vmatprep.subr.bf16.mxu0 0
      %1144 = vmatpush1.bf16.msra.mxu0 0
      %1145 = vmatprep.subr.bf16.mxu0 0
      %1146 = vmatpush1.bf16.msra.mxu0 0
      %1147 = vmatprep.subr.bf16.mxu0 0
      %1148 = vmatpush1.bf16.msra.mxu0 0
      %1149 = vmatprep.subr.bf16.mxu0 0
      %1150 = vmatpush1.bf16.msra.mxu0 0
      %1151 = vmatprep.mubr.bf16.mxu0 0
      %1152 = vmatmul.mubr.bf16.gmra.mrb[0].mxu0 %v1111
      %v1153 = vpop.f32.mrb[0].mxu0
      %v1154 = vadd.f32 0.0, %v1153
      %v1155 = vpop.f32.mrb[0].mxu0
      %v1156 = vpop.f32.mrb[0].mxu0
      %v1157 = vadd.f32 0.0, %v1156
      %v1158 = vpop.f32.mrb[0].mxu0
      %1159 = vmatprep.mubr.bf16.mxu0 0
      %1160 = vmatmul.mubr.bf16.gmra.mrb[0].mxu0 %v1114
      %v1161 = vpop.f32.mrb[0].mxu0
      %v1162 = vadd.f32 0.0, %v1161
      %v1163 = vpop.f32.mrb[0].mxu0
      %v1164 = vpop.f32.mrb[0].mxu0
      %v1165 = vpop.f32.mrb[0].mxu0
      %1166 = vdwg.mxu0
      %v1170 = vunpack.c.l.b16 %v965
      %v1171 = vunpack.c.l.b16 %v966
      %v1172 = vunpack.c.l.b16 %v967
      %v1173 = vpack.c.b16 %v1171, %v1170
      %v1174 = vpack.c.b16 %v1172, %v1172
      %v1177 = vsel %vm815, %v954, 0
      %v1180 = vsel %vm815, %v955, 0
      %v1183 = vsel %vm983, %v1174, 0
      %1185 = vmatprep.subr.bf16.mxu0 0
      %1186 = vmatpush1.bf16.msra.mxu0 %v1173
      %1187 = vmatprep.subr.bf16.mxu0 0
      %1188 = vmatpush1.bf16.msra.mxu0 %v1183
      %1189 = vmatprep.subr.bf16.mxu0 0
      %1190 = vmatpush1.bf16.msra.mxu0 0
      %1191 = vmatprep.subr.bf16.mxu0 0
      %1192 = vmatpush1.bf16.msra.mxu0 0
      %1193 = vmatprep.subr.bf16.mxu0 0
      %1194 = vmatpush1.bf16.msra.mxu0 0
      %1195 = vmatprep.subr.bf16.mxu0 0
      %1196 = vmatpush1.bf16.msra.mxu0 0
      %1197 = vmatprep.subr.bf16.mxu0 0
      %1198 = vmatpush1.bf16.msra.mxu0 0
      %1199 = vmatprep.subr.bf16.mxu0 0
      %1200 = vmatpush1.bf16.msra.mxu0 0
      %1201 = vmatprep.subr.bf16.mxu0 0
      %1202 = vmatpush1.bf16.msra.mxu0 0
      %1203 = vmatprep.subr.bf16.mxu0 0
      %1204 = vmatpush1.bf16.msra.mxu0 0
      %1205 = vmatprep.subr.bf16.mxu0 0
      %1206 = vmatpush1.bf16.msra.mxu0 0
      %1207 = vmatprep.subr.bf16.mxu0 0
      %1208 = vmatpush1.bf16.msra.mxu0 0
      %1209 = vmatprep.subr.bf16.mxu0 0
      %1210 = vmatpush1.bf16.msra.mxu0 0
      %1211 = vmatprep.subr.bf16.mxu0 0
      %1212 = vmatpush1.bf16.msra.mxu0 0
      %1213 = vmatprep.subr.bf16.mxu0 0
      %1214 = vmatpush1.bf16.msra.mxu0 0
      %1215 = vmatprep.subr.bf16.mxu0 0
      %1216 = vmatpush1.bf16.msra.mxu0 0
      %1217 = vmatprep.mubr.bf16.mxu0 0
      %1218 = vmatmul.mubr.bf16.gmra.mrb[0].mxu0 %v1177
      %v1219 = vpop.f32.mrb[0].mxu0
      %v1220 = vadd.f32 0.0, %v1219
      %v1221 = vpop.f32.mrb[0].mxu0
      %v1222 = vpop.f32.mrb[0].mxu0
      %v1223 = vadd.f32 0.0, %v1222
      %v1224 = vpop.f32.mrb[0].mxu0
      %1225 = vmatprep.mubr.bf16.mxu0 0
      %1226 = vmatmul.mubr.bf16.gmra.mrb[0].mxu0 %v1180
      %v1227 = vpop.f32.mrb[0].mxu0
      %v1228 = vadd.f32 0.0, %v1227
      %v1229 = vpop.f32.mrb[0].mxu0
      %v1230 = vpop.f32.mrb[0].mxu0
      %v1231 = vpop.f32.mrb[0].mxu0
      %1232 = vdwg.mxu0
      %v1233 = vpack.c.bf16 %v1025, %v1022
      %v1234 = vpack.c.bf16 %v1030, %v1030
      %v1235 = vpack.c.bf16 %v1091, %v1088
      %v1236 = vpack.c.bf16 %v1096, %v1096
      %v1237 = vpack.c.bf16 %v1157, %v1154
      %v1238 = vpack.c.bf16 %v1162, %v1162
      %v1239 = vpack.c.bf16 %v1223, %v1220
      %v1240 = vpack.c.bf16 %v1228, %v1228
      %v1241 = vld [vmem:[%s4] sm:$0xf]
      %v1242 = vld [vmem:[%s4 + $0x4] sm:$0xf]
      %v1243 = vld [vmem:[%s4 + $0x8] sm:$0xf]
      %v1244 = vld [vmem:[%s4 + $0xc] sm:$0xf]
      %v1245 = vld [vmem:[%s4 + $0x10] sm:$0xf]
      %v1246 = vld [vmem:[%s4 + $0x14] sm:$0xf]
      %v1247 = vld [vmem:[%s4 + $0x18] sm:$0xf]
      %v1248 = vld [vmem:[%s4 + $0x1c] sm:$0xf]
      %v1249 = vld [vmem:[%s4 + $0x20] sm:$0xf]
      %v1250 = vld [vmem:[%s4 + $0x24] sm:$0xf]
      %v1251 = vld [vmem:[%s4 + $0x28] sm:$0xf]
      %v1252 = vld [vmem:[%s4 + $0x2c] sm:$0xf]
      %v1253 = vld [vmem:[%s4 + $0x30] sm:$0xf]
      %v1254 = vld [vmem:[%s4 + $0x34] sm:$0xf]
      %v1255 = vld [vmem:[%s4 + $0x38] sm:$0xf]
      %v1256 = vld [vmem:[%s4 + $0x3c] sm:$0xf]
      %v1261 = vunpack.c.l.b16 %v1241
      %v1262 = vunpack.c.l.b16 %v1242
      %v1263 = vunpack.c.l.b16 %v1243
      %v1264 = vunpack.c.l.b16 %v1244
      %v1265 = vpack.c.b16 %v1262, %v1261
      %v1266 = vpack.c.b16 %v1264, %v1263
      %v1270 = vsel %vm523, %v1233, 0
      %v1273 = vsel %vm523, %v1234, 0
      %1275 = vmatprep.subr.bf16.mxu0 0
      %1276 = vmatpush1.bf16.msra.mxu0 %v1265
      %1277 = vmatprep.subr.bf16.mxu0 0
      %1278 = vmatpush1.bf16.msra.mxu0 %v1266
      %1279 = vmatprep.subr.bf16.mxu0 0
      %1280 = vmatpush1.bf16.msra.mxu0 0
      %1281 = vmatprep.subr.bf16.mxu0 0
      %1282 = vmatpush1.bf16.msra.mxu0 0
      %1283 = vmatprep.subr.bf16.mxu0 0
      %1284 = vmatpush1.bf16.msra.mxu0 0
      %1285 = vmatprep.subr.bf16.mxu0 0
      %1286 = vmatpush1.bf16.msra.mxu0 0
      %1287 = vmatprep.subr.bf16.mxu0 0
      %1288 = vmatpush1.bf16.msra.mxu0 0
      %1289 = vmatprep.subr.bf16.mxu0 0
      %1290 = vmatpush1.bf16.msra.mxu0 0
      %1291 = vmatprep.subr.bf16.mxu0 0
      %1292 = vmatpush1.bf16.msra.mxu0 0
      %1293 = vmatprep.subr.bf16.mxu0 0
      %1294 = vmatpush1.bf16.msra.mxu0 0
      %1295 = vmatprep.subr.bf16.mxu0 0
      %1296 = vmatpush1.bf16.msra.mxu0 0
      %1297 = vmatprep.subr.bf16.mxu0 0
      %1298 = vmatpush1.bf16.msra.mxu0 0
      %1299 = vmatprep.subr.bf16.mxu0 0
      %1300 = vmatpush1.bf16.msra.mxu0 0
      %1301 = vmatprep.subr.bf16.mxu0 0
      %1302 = vmatpush1.bf16.msra.mxu0 0
      %1303 = vmatprep.subr.bf16.mxu0 0
      %1304 = vmatpush1.bf16.msra.mxu0 0
      %1305 = vmatprep.subr.bf16.mxu0 0
      %1306 = vmatpush1.bf16.msra.mxu0 0
      %1307 = vmatprep.mubr.bf16.mxu0 0
      %1308 = vmatmul.mubr.bf16.gmra.mrb[0].mxu0 %v1270
      %v1309 = vpop.f32.mrb[0].mxu0
      %v1310 = vadd.f32 0.0, %v1309
      %v1311 = vpop.f32.mrb[0].mxu0
      %v1312 = vpop.f32.mrb[0].mxu0
      %v1313 = vadd.f32 0.0, %v1312
      %v1314 = vpop.f32.mrb[0].mxu0
      %1315 = vmatprep.mubr.bf16.mxu0 0
      %1316 = vmatmul.mubr.bf16.gmra.mrb[0].mxu0 %v1273
      %v1317 = vpop.f32.mrb[0].mxu0
      %v1318 = vadd.f32 0.0, %v1317
      %v1319 = vpop.f32.mrb[0].mxu0
      %v1320 = vpop.f32.mrb[0].mxu0
      %v1321 = vpop.f32.mrb[0].mxu0
      %1322 = vdwg.mxu0
      %v1327 = vunpack.c.l.b16 %v1245
      %v1328 = vunpack.c.l.b16 %v1246
      %v1329 = vunpack.c.l.b16 %v1247
      %v1330 = vunpack.c.l.b16 %v1248
      %v1331 = vpack.c.b16 %v1328, %v1327
      %v1332 = vpack.c.b16 %v1330, %v1329
      %v1336 = vsel %vm523, %v1235, 0
      %v1339 = vsel %vm523, %v1236, 0
      %1341 = vmatprep.subr.bf16.mxu0 0
      %1342 = vmatpush1.bf16.msra.mxu0 %v1331
      %1343 = vmatprep.subr.bf16.mxu0 0
      %1344 = vmatpush1.bf16.msra.mxu0 %v1332
      %1345 = vmatprep.subr.bf16.mxu0 0
      %1346 = vmatpush1.bf16.msra.mxu0 0
      %1347 = vmatprep.subr.bf16.mxu0 0
      %1348 = vmatpush1.bf16.msra.mxu0 0
      %1349 = vmatprep.subr.bf16.mxu0 0
      %1350 = vmatpush1.bf16.msra.mxu0 0
      %1351 = vmatprep.subr.bf16.mxu0 0
      %1352 = vmatpush1.bf16.msra.mxu0 0
      %1353 = vmatprep.subr.bf16.mxu0 0
      %1354 = vmatpush1.bf16.msra.mxu0 0
      %1355 = vmatprep.subr.bf16.mxu0 0
      %1356 = vmatpush1.bf16.msra.mxu0 0
      %1357 = vmatprep.subr.bf16.mxu0 0
      %1358 = vmatpush1.bf16.msra.mxu0 0
      %1359 = vmatprep.subr.bf16.mxu0 0
      %1360 = vmatpush1.bf16.msra.mxu0 0
      %1361 = vmatprep.subr.bf16.mxu0 0
      %1362 = vmatpush1.bf16.msra.mxu0 0
      %1363 = vmatprep.subr.bf16.mxu0 0
      %1364 = vmatpush1.bf16.msra.mxu0 0
      %1365 = vmatprep.subr.bf16.mxu0 0
      %1366 = vmatpush1.bf16.msra.mxu0 0
      %1367 = vmatprep.subr.bf16.mxu0 0
      %1368 = vmatpush1.bf16.msra.mxu0 0
      %1369 = vmatprep.subr.bf16.mxu0 0
      %1370 = vmatpush1.bf16.msra.mxu0 0
      %1371 = vmatprep.subr.bf16.mxu0 0
      %1372 = vmatpush1.bf16.msra.mxu0 0
      %1373 = vmatprep.mubr.bf16.mxu0 0
      %1374 = vmatmul.mubr.bf16.gmra.mrb[0].mxu0 %v1336
      %v1375 = vpop.f32.mrb[0].mxu0
      %v1376 = vadd.f32 0.0, %v1375
      %v1377 = vpop.f32.mrb[0].mxu0
      %v1378 = vpop.f32.mrb[0].mxu0
      %v1379 = vadd.f32 0.0, %v1378
      %v1380 = vpop.f32.mrb[0].mxu0
      %1381 = vmatprep.mubr.bf16.mxu0 0
      %1382 = vmatmul.mubr.bf16.gmra.mrb[0].mxu0 %v1339
      %v1383 = vpop.f32.mrb[0].mxu0
      %v1384 = vadd.f32 0.0, %v1383
      %v1385 = vpop.f32.mrb[0].mxu0
      %v1386 = vpop.f32.mrb[0].mxu0
      %v1387 = vpop.f32.mrb[0].mxu0
      %1388 = vdwg.mxu0
      %v1393 = vunpack.c.l.b16 %v1249
      %v1394 = vunpack.c.l.b16 %v1250
      %v1395 = vunpack.c.l.b16 %v1251
      %v1396 = vunpack.c.l.b16 %v1252
      %v1397 = vpack.c.b16 %v1394, %v1393
      %v1398 = vpack.c.b16 %v1396, %v1395
      %v1402 = vsel %vm523, %v1237, 0
      %v1405 = vsel %vm523, %v1238, 0
      %1407 = vmatprep.subr.bf16.mxu0 0
      %1408 = vmatpush1.bf16.msra.mxu0 %v1397
      %1409 = vmatprep.subr.bf16.mxu0 0
      %1410 = vmatpush1.bf16.msra.mxu0 %v1398
      %1411 = vmatprep.subr.bf16.mxu0 0
      %1412 = vmatpush1.bf16.msra.mxu0 0
      %1413 = vmatprep.subr.bf16.mxu0 0
      %1414 = vmatpush1.bf16.msra.mxu0 0
      %1415 = vmatprep.subr.bf16.mxu0 0
      %1416 = vmatpush1.bf16.msra.mxu0 0
      %1417 = vmatprep.subr.bf16.mxu0 0
      %1418 = vmatpush1.bf16.msra.mxu0 0
      %1419 = vmatprep.subr.bf16.mxu0 0
      %1420 = vmatpush1.bf16.msra.mxu0 0
      %1421 = vmatprep.subr.bf16.mxu0 0
      %1422 = vmatpush1.bf16.msra.mxu0 0
      %1423 = vmatprep.subr.bf16.mxu0 0
      %1424 = vmatpush1.bf16.msra.mxu0 0
      %1425 = vmatprep.subr.bf16.mxu0 0
      %1426 = vmatpush1.bf16.msra.mxu0 0
      %1427 = vmatprep.subr.bf16.mxu0 0
      %1428 = vmatpush1.bf16.msra.mxu0 0
      %1429 = vmatprep.subr.bf16.mxu0 0
      %1430 = vmatpush1.bf16.msra.mxu0 0
      %1431 = vmatprep.subr.bf16.mxu0 0
      %1432 = vmatpush1.bf16.msra.mxu0 0
      %1433 = vmatprep.subr.bf16.mxu0 0
      %1434 = vmatpush1.bf16.msra.mxu0 0
      %1435 = vmatprep.subr.bf16.mxu0 0
      %1436 = vmatpush1.bf16.msra.mxu0 0
      %1437 = vmatprep.subr.bf16.mxu0 0
      %1438 = vmatpush1.bf16.msra.mxu0 0
      %1439 = vmatprep.mubr.bf16.mxu0 0
      %1440 = vmatmul.mubr.bf16.gmra.mrb[0].mxu0 %v1402
      %v1441 = vpop.f32.mrb[0].mxu0
      %v1442 = vadd.f32 0.0, %v1441
      %v1443 = vpop.f32.mrb[0].mxu0
      %v1444 = vpop.f32.mrb[0].mxu0
      %v1445 = vadd.f32 0.0, %v1444
      %v1446 = vpop.f32.mrb[0].mxu0
      %1447 = vmatprep.mubr.bf16.mxu0 0
      %1448 = vmatmul.mubr.bf16.gmra.mrb[0].mxu0 %v1405
      %v1449 = vpop.f32.mrb[0].mxu0
      %v1450 = vadd.f32 0.0, %v1449
      %v1451 = vpop.f32.mrb[0].mxu0
      %v1452 = vpop.f32.mrb[0].mxu0
      %v1453 = vpop.f32.mrb[0].mxu0
      %1454 = vdwg.mxu0
      %v1459 = vunpack.c.l.b16 %v1253
      %v1460 = vunpack.c.l.b16 %v1254
      %v1461 = vunpack.c.l.b16 %v1255
      %v1462 = vunpack.c.l.b16 %v1256
      %v1463 = vpack.c.b16 %v1460, %v1459
      %v1464 = vpack.c.b16 %v1462, %v1461
      %v1468 = vsel %vm523, %v1239, 0
      %v1471 = vsel %vm523, %v1240, 0
      %1473 = vmatprep.subr.bf16.mxu0 0
      %1474 = vmatpush1.bf16.msra.mxu0 %v1463
      %1475 = vmatprep.subr.bf16.mxu0 0
      %1476 = vmatpush1.bf16.msra.mxu0 %v1464
      %1477 = vmatprep.subr.bf16.mxu0 0
      %1478 = vmatpush1.bf16.msra.mxu0 0
      %1479 = vmatprep.subr.bf16.mxu0 0
      %1480 = vmatpush1.bf16.msra.mxu0 0
      %1481 = vmatprep.subr.bf16.mxu0 0
      %1482 = vmatpush1.bf16.msra.mxu0 0
      %1483 = vmatprep.subr.bf16.mxu0 0
      %1484 = vmatpush1.bf16.msra.mxu0 0
      %1485 = vmatprep.subr.bf16.mxu0 0
      %1486 = vmatpush1.bf16.msra.mxu0 0
      %1487 = vmatprep.subr.bf16.mxu0 0
      %1488 = vmatpush1.bf16.msra.mxu0 0
      %1489 = vmatprep.subr.bf16.mxu0 0
      %1490 = vmatpush1.bf16.msra.mxu0 0
      %1491 = vmatprep.subr.bf16.mxu0 0
      %1492 = vmatpush1.bf16.msra.mxu0 0
      %1493 = vmatprep.subr.bf16.mxu0 0
      %1494 = vmatpush1.bf16.msra.mxu0 0
      %1495 = vmatprep.subr.bf16.mxu0 0
      %1496 = vmatpush1.bf16.msra.mxu0 0
      %1497 = vmatprep.subr.bf16.mxu0 0
      %1498 = vmatpush1.bf16.msra.mxu0 0
      %1499 = vmatprep.subr.bf16.mxu0 0
      %1500 = vmatpush1.bf16.msra.mxu0 0
      %1501 = vmatprep.subr.bf16.mxu0 0
      %1502 = vmatpush1.bf16.msra.mxu0 0
      %1503 = vmatprep.subr.bf16.mxu0 0
      %1504 = vmatpush1.bf16.msra.mxu0 0
      %1505 = vmatprep.mubr.bf16.mxu0 0
      %1506 = vmatmul.mubr.bf16.gmra.mrb[0].mxu0 %v1468
      %v1507 = vpop.f32.mrb[0].mxu0
      %v1508 = vadd.f32 0.0, %v1507
      %v1509 = vpop.f32.mrb[0].mxu0
      %v1510 = vpop.f32.mrb[0].mxu0
      %v1511 = vadd.f32 0.0, %v1510
      %v1512 = vpop.f32.mrb[0].mxu0
      %1513 = vmatprep.mubr.bf16.mxu0 0
      %1514 = vmatmul.mubr.bf16.gmra.mrb[0].mxu0 %v1471
      %v1515 = vpop.f32.mrb[0].mxu0
      %v1516 = vadd.f32 0.0, %v1515
      %v1517 = vpop.f32.mrb[0].mxu0
      %v1518 = vpop.f32.mrb[0].mxu0
      %v1519 = vpop.f32.mrb[0].mxu0
      %1520 = vdwg.mxu0
      %v1521 = vld [vmem:[%s468] sm:$0xff]
      %v1522 = vld [vmem:[%s468 + $0x8] sm:$0xff]
      %v1523 = vld [vmem:[%s468 + $0x10] sm:$0xff]
      %v1524 = vadd.f32 %v1310, %v1376
      %v1525 = vadd.f32 %v1524, %v1442
      %v1526 = vadd.f32 %v1525, %v1508
      %v1527 = vadd.f32 %v1313, %v1379
      %v1528 = vadd.f32 %v1527, %v1445
      %v1529 = vadd.f32 %v1528, %v1511
      %v1530 = vadd.f32 %v1318, %v1384
      %v1531 = vadd.f32 %v1530, %v1450
      %v1532 = vadd.f32 %v1531, %v1516
      %v1533 = vadd.f32 %v1521, %v1526
      %v1534 = vadd.f32 %v1522, %v1529
      %v1535 = vadd.f32 %v1523, %v1532
      %v1536 = vld [vmem:[%s5] sm:$0x1]
      %v1538 = vlaneseq
      %v1539 = vshrl.u32 %v1538, 7
      %v1540 = vsub.s32 0, %v1539
      %v1541 = vrot.slane %v1536, %v1540
      %v1543 = vadd.f32 %v1533, %v1541
      %v1544 = vadd.f32 %v1534, %v1541
      %v1545 = vadd.f32 %v1535, %v1541
      %1546 = vadd.xlane.f32.xlu0 %v1543
      %v1547 = vpop.xlane.xlu0 %1546
      %1548 = vadd.xlane.f32.xlu0 %v1544
      %v1549 = vpop.xlane.xlu0 %1548
      %1550 = vadd.xlane.f32.xlu0 %v1545
      %v1551 = vpop.xlane.xlu0 %1550
      %v1552 = vrcp.pop 128.0
      %v1553 = vmul.f32 %v1547, %v1552
      %v1554 = vmul.f32 %v1549, %v1552
      %v1555 = vmul.f32 %v1551, %v1552
      %v1556 = vsub.f32 %v1543, %v1553
      %v1557 = vsub.f32 %v1544, %v1554
      %v1558 = vsub.f32 %v1545, %v1555
      %v1559 = vmul.f32 %v1556, %v1556
      %v1560 = vmul.f32 %v1557, %v1557
      %v1561 = vmul.f32 %v1558, %v1558
      %1562 = vadd.xlane.f32.xlu0 %v1559
      %v1563 = vpop.xlane.xlu0 %1562
      %1564 = vadd.xlane.f32.xlu0 %v1560
      %v1565 = vpop.xlane.xlu0 %1564
      %1566 = vadd.xlane.f32.xlu0 %v1561
      %v1567 = vpop.xlane.xlu0 %1566
      %v1568 = vmul.f32 %v1563, %v1552
      %v1569 = vmul.f32 %v1565, %v1552
      %v1570 = vmul.f32 %v1567, %v1552
      %v1571 = vadd.f32 %v1568, 1e-05
      %v1572 = vadd.f32 %v1569, 1e-05
      %v1573 = vadd.f32 %v1570, 1e-05
      %v1574 = vrsqrt.pop %v1571
      %v1575 = vrsqrt.pop %v1572
      %v1576 = vrsqrt.pop %v1573
      %v1577 = vmul.f32 %v1556, %v1574
      %v1578 = vmul.f32 %v1557, %v1575
      %v1579 = vmul.f32 %v1558, %v1576
      %v1580 = vld [vmem:[%s6] sm:$0x1]
      %v1582 = vlaneseq
      %v1583 = vshrl.u32 %v1582, 7
      %v1584 = vsub.s32 0, %v1583
      %v1585 = vrot.slane %v1580, %v1584
      %v1587 = vmul.f32 %v1577, %v1585
      %v1588 = vmul.f32 %v1578, %v1585
      %v1589 = vmul.f32 %v1579, %v1585
      %v1590 = vld [vmem:[%s7] sm:$0x1]
      %v1592 = vlaneseq
      %v1593 = vshrl.u32 %v1592, 7
      %v1594 = vsub.s32 0, %v1593
      %v1595 = vrot.slane %v1590, %v1594
      %v1597 = vadd.f32 %v1587, %v1595
      %v1598 = vadd.f32 %v1588, %v1595
      %v1599 = vadd.f32 %v1589, %v1595
      %v1600 = vpack.c.bf16 %v1598, %v1597
      %v1601 = vpack.c.bf16 %v1599, %v1599
      %v1602 = vld [vmem:[%s8] sm:$0xff]
      %v1603 = vld [vmem:[%s8 + $0x8] sm:$0xff]
      %v1604 = vld [vmem:[%s8 + $0x10] sm:$0xff]
      %v1605 = vld [vmem:[%s8 + $0x18] sm:$0xff]
      %v1606 = vld [vmem:[%s8 + $0x20] sm:$0xff]
      %v1607 = vld [vmem:[%s8 + $0x28] sm:$0xff]
      %v1608 = vld [vmem:[%s8 + $0x30] sm:$0xff]
      %v1609 = vld [vmem:[%s8 + $0x38] sm:$0xff]
      %v1610 = vld [vmem:[%s8 + $0x40] sm:$0xff]
      %v1611 = vld [vmem:[%s8 + $0x48] sm:$0xff]
      %v1612 = vld [vmem:[%s8 + $0x50] sm:$0xff]
      %v1613 = vld [vmem:[%s8 + $0x58] sm:$0xff]
      %v1614 = vld [vmem:[%s8 + $0x60] sm:$0xff]
      %v1615 = vld [vmem:[%s8 + $0x68] sm:$0xff]
      %v1616 = vld [vmem:[%s8 + $0x70] sm:$0xff]
      %v1617 = vld [vmem:[%s8 + $0x78] sm:$0xff]
      %v1618 = vld [vmem:[%s8 + $0x80] sm:$0xff]
      %v1619 = vld [vmem:[%s8 + $0x88] sm:$0xff]
      %v1620 = vld [vmem:[%s8 + $0x90] sm:$0xff]
      %v1621 = vld [vmem:[%s8 + $0x98] sm:$0xff]
      %v1622 = vld [vmem:[%s8 + $0xa0] sm:$0xff]
      %v1623 = vld [vmem:[%s8 + $0xa8] sm:$0xff]
      %v1624 = vld [vmem:[%s8 + $0xb0] sm:$0xff]
      %v1625 = vld [vmem:[%s8 + $0xb8] sm:$0xff]
      %v1626 = vld [vmem:[%s8 + $0xc0] sm:$0xff]
      %v1627 = vld [vmem:[%s8 + $0xc8] sm:$0xff]
      %v1628 = vld [vmem:[%s8 + $0xd0] sm:$0xff]
      %v1629 = vld [vmem:[%s8 + $0xd8] sm:$0xff]
      %v1630 = vld [vmem:[%s8 + $0xe0] sm:$0xff]
      %v1631 = vld [vmem:[%s8 + $0xe8] sm:$0xff]
      %v1632 = vld [vmem:[%s8 + $0xf0] sm:$0xff]
      %v1633 = vld [vmem:[%s8 + $0xf8] sm:$0xff]
      %v1634 = vld [vmem:[%s9] sm:$0xf]
      %v1636 = vlaneseq
      %v1637 = vshrl.u32 %v1636, 7
      %v1638 = vsub.s32 0, %v1637
      %v1639 = vrot.slane %v1634, %v1638
      %v1640 = vlaneseq
      %v1641 = vshrl.u32 %v1640, 7
      %v1642 = vsub.s32 1, %v1641
      %v1643 = vrot.slane %v1634, %v1642
      %v1644 = vlaneseq
      %v1645 = vshrl.u32 %v1644, 7
      %v1646 = vsub.s32 2, %v1645
      %v1647 = vrot.slane %v1634, %v1646
      %v1648 = vlaneseq
      %v1649 = vshrl.u32 %v1648, 7
      %v1650 = vsub.s32 3, %v1649
      %v1651 = vrot.slane %v1634, %v1650
      %v1688 = vunpack.c.l.b16 %v1602
      %v1689 = vunpack.c.h.b16 %v1602
      %v1690 = vunpack.c.l.b16 %v1603
      %v1691 = vunpack.c.h.b16 %v1603
      %v1692 = vunpack.c.l.b16 %v1604
      %v1693 = vunpack.c.h.b16 %v1604
      %v1694 = vunpack.c.l.b16 %v1605
      %v1695 = vunpack.c.h.b16 %v1605
      %v1696 = vunpack.c.l.b16 %v1606
      %v1697 = vunpack.c.h.b16 %v1606
      %v1698 = vunpack.c.l.b16 %v1607
      %v1699 = vunpack.c.h.b16 %v1607
      %v1700 = vunpack.c.l.b16 %v1608
      %v1701 = vunpack.c.h.b16 %v1608
      %v1702 = vunpack.c.l.b16 %v1609
      %v1703 = vunpack.c.h.b16 %v1609
      %v1704 = vunpack.c.l.b16 %v1610
      %v1705 = vunpack.c.h.b16 %v1610
      %v1706 = vunpack.c.l.b16 %v1611
      %v1707 = vunpack.c.h.b16 %v1611
      %v1708 = vunpack.c.l.b16 %v1612
      %v1709 = vunpack.c.h.b16 %v1612
      %v1710 = vunpack.c.l.b16 %v1613
      %v1711 = vunpack.c.h.b16 %v1613
      %v1712 = vunpack.c.l.b16 %v1614
      %v1713 = vunpack.c.h.b16 %v1614
      %v1714 = vunpack.c.l.b16 %v1615
      %v1715 = vunpack.c.h.b16 %v1615
      %v1716 = vunpack.c.l.b16 %v1616
      %v1717 = vunpack.c.h.b16 %v1616
      %v1718 = vunpack.c.l.b16 %v1617
      %v1719 = vunpack.c.h.b16 %v1617
      %v1720 = vunpack.c.l.b16 %v1618
      %v1721 = vunpack.c.h.b16 %v1618
      %v1722 = vunpack.c.l.b16 %v1619
      %v1723 = vunpack.c.h.b16 %v1619
      %v1724 = vunpack.c.l.b16 %v1620
      %v1725 = vunpack.c.h.b16 %v1620
      %v1726 = vunpack.c.l.b16 %v1621
      %v1727 = vunpack.c.h.b16 %v1621
      %v1728 = vunpack.c.l.b16 %v1622
      %v1729 = vunpack.c.h.b16 %v1622
      %v1730 = vunpack.c.l.b16 %v1623
      %v1731 = vunpack.c.h.b16 %v1623
      %v1732 = vunpack.c.l.b16 %v1624
      %v1733 = vunpack.c.h.b16 %v1624
      %v1734 = vunpack.c.l.b16 %v1625
      %v1735 = vunpack.c.h.b16 %v1625
      %v1736 = vunpack.c.l.b16 %v1626
      %v1737 = vunpack.c.h.b16 %v1626
      %v1738 = vunpack.c.l.b16 %v1627
      %v1739 = vunpack.c.h.b16 %v1627
      %v1740 = vunpack.c.l.b16 %v1628
      %v1741 = vunpack.c.h.b16 %v1628
      %v1742 = vunpack.c.l.b16 %v1629
      %v1743 = vunpack.c.h.b16 %v1629
      %v1744 = vunpack.c.l.b16 %v1630
      %v1745 = vunpack.c.h.b16 %v1630
      %v1746 = vunpack.c.l.b16 %v1631
      %v1747 = vunpack.c.h.b16 %v1631
      %v1748 = vunpack.c.l.b16 %v1632
      %v1749 = vunpack.c.h.b16 %v1632
      %v1750 = vunpack.c.l.b16 %v1633
      %v1751 = vunpack.c.h.b16 %v1633
      %v1752 = vpack.c.b16 %v1692, %v1688
      %v1753 = vpack.c.b16 %v1693, %v1689
      %v1754 = vpack.c.b16 %v1694, %v1690
      %v1755 = vpack.c.b16 %v1695, %v1691
      %v1756 = vpack.c.b16 %v1700, %v1696
      %v1757 = vpack.c.b16 %v1701, %v1697
      %v1758 = vpack.c.b16 %v1702, %v1698
      %v1759 = vpack.c.b16 %v1703, %v1699
      %v1760 = vpack.c.b16 %v1708, %v1704
      %v1761 = vpack.c.b16 %v1709, %v1705
      %v1762 = vpack.c.b16 %v1710, %v1706
      %v1763 = vpack.c.b16 %v1711, %v1707
      %v1764 = vpack.c.b16 %v1716, %v1712
      %v1765 = vpack.c.b16 %v1717, %v1713
      %v1766 = vpack.c.b16 %v1718, %v1714
      %v1767 = vpack.c.b16 %v1719, %v1715
      %v1768 = vpack.c.b16 %v1724, %v1720
      %v1769 = vpack.c.b16 %v1725, %v1721
      %v1770 = vpack.c.b16 %v1726, %v1722
      %v1771 = vpack.c.b16 %v1727, %v1723
      %v1772 = vpack.c.b16 %v1732, %v1728
      %v1773 = vpack.c.b16 %v1733, %v1729
      %v1774 = vpack.c.b16 %v1734, %v1730
      %v1775 = vpack.c.b16 %v1735, %v1731
      %v1776 = vpack.c.b16 %v1740, %v1736
      %v1777 = vpack.c.b16 %v1741, %v1737
      %v1778 = vpack.c.b16 %v1742, %v1738
      %v1779 = vpack.c.b16 %v1743, %v1739
      %v1780 = vpack.c.b16 %v1748, %v1744
      %v1781 = vpack.c.b16 %v1749, %v1745
      %v1782 = vpack.c.b16 %v1750, %v1746
      %v1783 = vpack.c.b16 %v1751, %v1747
      %1816 = vmatprep.subr.bf16.mxu0 %v1753
      %1817 = vmatpush1.bf16.msra.mxu0 %v1752
      %1818 = vmatprep.subr.bf16.mxu0 %v1757
      %1819 = vmatpush1.bf16.msra.mxu0 %v1756
      %1820 = vmatprep.subr.bf16.mxu0 %v1761
      %1821 = vmatpush1.bf16.msra.mxu0 %v1760
      %1822 = vmatprep.subr.bf16.mxu0 %v1765
      %1823 = vmatpush1.bf16.msra.mxu0 %v1764
      %1824 = vmatprep.subr.bf16.mxu0 %v1769
      %1825 = vmatpush1.bf16.msra.mxu0 %v1768
      %1826 = vmatprep.subr.bf16.mxu0 %v1773
      %1827 = vmatpush1.bf16.msra.mxu0 %v1772
      %1828 = vmatprep.subr.bf16.mxu0 %v1777
      %1829 = vmatpush1.bf16.msra.mxu0 %v1776
      %1830 = vmatprep.subr.bf16.mxu0 %v1781
      %1831 = vmatpush1.bf16.msra.mxu0 %v1780
      %1832 = vmatprep.subr.bf16.mxu0 0
      %1833 = vmatpush1.bf16.msra.mxu0 0
      %1834 = vmatprep.subr.bf16.mxu0 0
      %1835 = vmatpush1.bf16.msra.mxu0 0
      %1836 = vmatprep.subr.bf16.mxu0 0
      %1837 = vmatpush1.bf16.msra.mxu0 0
      %1838 = vmatprep.subr.bf16.mxu0 0
      %1839 = vmatpush1.bf16.msra.mxu0 0
      %1840 = vmatprep.subr.bf16.mxu0 0
      %1841 = vmatpush1.bf16.msra.mxu0 0
      %1842 = vmatprep.subr.bf16.mxu0 0
      %1843 = vmatpush1.bf16.msra.mxu0 0
      %1844 = vmatprep.subr.bf16.mxu0 0
      %1845 = vmatpush1.bf16.msra.mxu0 0
      %1846 = vmatprep.subr.bf16.mxu0 0
      %1847 = vmatpush1.bf16.msra.mxu0 0
      %1848 = vmatprep.mubr.bf16.mxu0 0
      %1849 = vmatmul.mubr.bf16.gmra.mrb[0].mxu0 %v1600
      %v1850 = vpop.f32.mrb[0].mxu0
      %v1851 = vadd.f32 %v1639, %v1850
      %v1852 = vpop.f32.mrb[0].mxu0
      %v1853 = vadd.f32 %v1643, %v1852
      %v1854 = vpop.f32.mrb[0].mxu0
      %v1855 = vadd.f32 %v1639, %v1854
      %v1856 = vpop.f32.mrb[0].mxu0
      %v1857 = vadd.f32 %v1643, %v1856
      %1858 = vmatprep.mubr.bf16.mxu0 0
      %1859 = vmatmul.mubr.bf16.gmra.mrb[0].mxu0 %v1601
      %v1860 = vpop.f32.mrb[0].mxu0
      %v1861 = vadd.f32 %v1639, %v1860
      %v1862 = vpop.f32.mrb[0].mxu0
      %v1863 = vadd.f32 %v1643, %v1862
      %v1864 = vpop.f32.mrb[0].mxu0
      %v1865 = vpop.f32.mrb[0].mxu0
      %1866 = vdwg.mxu0
      %1867 = vmatprep.subr.bf16.mxu0 %v1755
      %1868 = vmatpush1.bf16.msra.mxu0 %v1754
      %1869 = vmatprep.subr.bf16.mxu0 %v1759
      %1870 = vmatpush1.bf16.msra.mxu0 %v1758
      %1871 = vmatprep.subr.bf16.mxu0 %v1763
      %1872 = vmatpush1.bf16.msra.mxu0 %v1762
      %1873 = vmatprep.subr.bf16.mxu0 %v1767
      %1874 = vmatpush1.bf16.msra.mxu0 %v1766
      %1875 = vmatprep.subr.bf16.mxu0 %v1771
      %1876 = vmatpush1.bf16.msra.mxu0 %v1770
      %1877 = vmatprep.subr.bf16.mxu0 %v1775
      %1878 = vmatpush1.bf16.msra.mxu0 %v1774
      %1879 = vmatprep.subr.bf16.mxu0 %v1779
      %1880 = vmatpush1.bf16.msra.mxu0 %v1778
      %1881 = vmatprep.subr.bf16.mxu0 %v1783
      %1882 = vmatpush1.bf16.msra.mxu0 %v1782
      %1883 = vmatprep.subr.bf16.mxu0 0
      %1884 = vmatpush1.bf16.msra.mxu0 0
      %1885 = vmatprep.subr.bf16.mxu0 0
      %1886 = vmatpush1.bf16.msra.mxu0 0
      %1887 = vmatprep.subr.bf16.mxu0 0
      %1888 = vmatpush1.bf16.msra.mxu0 0
      %1889 = vmatprep.subr.bf16.mxu0 0
      %1890 = vmatpush1.bf16.msra.mxu0 0
      %1891 = vmatprep.subr.bf16.mxu0 0
      %1892 = vmatpush1.bf16.msra.mxu0 0
      %1893 = vmatprep.subr.bf16.mxu0 0
      %1894 = vmatpush1.bf16.msra.mxu0 0
      %1895 = vmatprep.subr.bf16.mxu0 0
      %1896 = vmatpush1.bf16.msra.mxu0 0
      %1897 = vmatprep.subr.bf16.mxu0 0
      %1898 = vmatpush1.bf16.msra.mxu0 0
      %1899 = vmatprep.mubr.bf16.mxu0 0
      %1900 = vmatmul.mubr.bf16.gmra.mrb[0].mxu0 %v1600
      %v1901 = vpop.f32.mrb[0].mxu0
      %v1902 = vadd.f32 %v1647, %v1901
      %v1903 = vpop.f32.mrb[0].mxu0
      %v1904 = vadd.f32 %v1651, %v1903
      %v1905 = vpop.f32.mrb[0].mxu0
      %v1906 = vadd.f32 %v1647, %v1905
      %v1907 = vpop.f32.mrb[0].mxu0
      %v1908 = vadd.f32 %v1651, %v1907
      %1909 = vmatprep.mubr.bf16.mxu0 0
      %1910 = vmatmul.mubr.bf16.gmra.mrb[0].mxu0 %v1601
      %v1911 = vpop.f32.mrb[0].mxu0
      %v1912 = vadd.f32 %v1647, %v1911
      %v1913 = vpop.f32.mrb[0].mxu0
      %v1914 = vadd.f32 %v1651, %v1913
      %v1915 = vpop.f32.mrb[0].mxu0
      %v1916 = vpop.f32.mrb[0].mxu0
      %1917 = vdwg.mxu0
      %v1918 = vmax.f32 %v1851, 0.0
      %v1919 = vmax.f32 %v1853, 0.0
      %v1920 = vmax.f32 %v1902, 0.0
      %v1921 = vmax.f32 %v1904, 0.0
      %v1922 = vmax.f32 %v1855, 0.0
      %v1923 = vmax.f32 %v1857, 0.0
      %v1924 = vmax.f32 %v1906, 0.0
      %v1925 = vmax.f32 %v1908, 0.0
      %v1926 = vmax.f32 %v1861, 0.0
      %v1927 = vmax.f32 %v1863, 0.0
      %v1928 = vmax.f32 %v1912, 0.0
      %v1929 = vmax.f32 %v1914, 0.0
      %v1930 = vpack.c.bf16 %v1922, %v1918
      %v1931 = vpack.c.bf16 %v1923, %v1919
      %v1932 = vpack.c.bf16 %v1924, %v1920
      %v1933 = vpack.c.bf16 %v1925, %v1921
      %v1934 = vpack.c.bf16 %v1926, %v1926
      %v1935 = vpack.c.bf16 %v1927, %v1927
      %v1936 = vpack.c.bf16 %v1928, %v1928
      %v1937 = vpack.c.bf16 %v1929, %v1929
      %v1938 = vld [vmem:[%s10] sm:$0xf]
      %v1939 = vld [vmem:[%s10 + $0x4] sm:$0xf]
      %v1940 = vld [vmem:[%s10 + $0x8] sm:$0xf]
      %v1941 = vld [vmem:[%s10 + $0xc] sm:$0xf]
      %v1942 = vld [vmem:[%s10 + $0x10] sm:$0xf]
      %v1943 = vld [vmem:[%s10 + $0x14] sm:$0xf]
      %v1944 = vld [vmem:[%s10 + $0x18] sm:$0xf]
      %v1945 = vld [vmem:[%s10 + $0x1c] sm:$0xf]
      %v1946 = vld [vmem:[%s10 + $0x20] sm:$0xf]
      %v1947 = vld [vmem:[%s10 + $0x24] sm:$0xf]
      %v1948 = vld [vmem:[%s10 + $0x28] sm:$0xf]
      %v1949 = vld [vmem:[%s10 + $0x2c] sm:$0xf]
      %v1950 = vld [vmem:[%s10 + $0x30] sm:$0xf]
      %v1951 = vld [vmem:[%s10 + $0x34] sm:$0xf]
      %v1952 = vld [vmem:[%s10 + $0x38] sm:$0xf]
      %v1953 = vld [vmem:[%s10 + $0x3c] sm:$0xf]
      %v1954 = vld [vmem:[%s10 + $0x40] sm:$0xf]
      %v1955 = vld [vmem:[%s10 + $0x44] sm:$0xf]
      %v1956 = vld [vmem:[%s10 + $0x48] sm:$0xf]
      %v1957 = vld [vmem:[%s10 + $0x4c] sm:$0xf]
      %v1958 = vld [vmem:[%s10 + $0x50] sm:$0xf]
      %v1959 = vld [vmem:[%s10 + $0x54] sm:$0xf]
      %v1960 = vld [vmem:[%s10 + $0x58] sm:$0xf]
      %v1961 = vld [vmem:[%s10 + $0x5c] sm:$0xf]
      %v1962 = vld [vmem:[%s10 + $0x60] sm:$0xf]
      %v1963 = vld [vmem:[%s10 + $0x64] sm:$0xf]
      %v1964 = vld [vmem:[%s10 + $0x68] sm:$0xf]
      %v1965 = vld [vmem:[%s10 + $0x6c] sm:$0xf]
      %v1966 = vld [vmem:[%s10 + $0x70] sm:$0xf]
      %v1967 = vld [vmem:[%s10 + $0x74] sm:$0xf]
      %v1968 = vld [vmem:[%s10 + $0x78] sm:$0xf]
      %v1969 = vld [vmem:[%s10 + $0x7c] sm:$0xf]
      %v1970 = vld [vmem:[%s10 + $0x80] sm:$0xf]
      %v1971 = vld [vmem:[%s10 + $0x84] sm:$0xf]
      %v1972 = vld [vmem:[%s10 + $0x88] sm:$0xf]
      %v1973 = vld [vmem:[%s10 + $0x8c] sm:$0xf]
      %v1974 = vld [vmem:[%s10 + $0x90] sm:$0xf]
      %v1975 = vld [vmem:[%s10 + $0x94] sm:$0xf]
      %v1976 = vld [vmem:[%s10 + $0x98] sm:$0xf]
      %v1977 = vld [vmem:[%s10 + $0x9c] sm:$0xf]
      %v1978 = vld [vmem:[%s10 + $0xa0] sm:$0xf]
      %v1979 = vld [vmem:[%s10 + $0xa4] sm:$0xf]
      %v1980 = vld [vmem:[%s10 + $0xa8] sm:$0xf]
      %v1981 = vld [vmem:[%s10 + $0xac] sm:$0xf]
      %v1982 = vld [vmem:[%s10 + $0xb0] sm:$0xf]
      %v1983 = vld [vmem:[%s10 + $0xb4] sm:$0xf]
      %v1984 = vld [vmem:[%s10 + $0xb8] sm:$0xf]
      %v1985 = vld [vmem:[%s10 + $0xbc] sm:$0xf]
      %v1986 = vld [vmem:[%s10 + $0xc0] sm:$0xf]
      %v1987 = vld [vmem:[%s10 + $0xc4] sm:$0xf]
      %v1988 = vld [vmem:[%s10 + $0xc8] sm:$0xf]
      %v1989 = vld [vmem:[%s10 + $0xcc] sm:$0xf]
      %v1990 = vld [vmem:[%s10 + $0xd0] sm:$0xf]
      %v1991 = vld [vmem:[%s10 + $0xd4] sm:$0xf]
      %v1992 = vld [vmem:[%s10 + $0xd8] sm:$0xf]
      %v1993 = vld [vmem:[%s10 + $0xdc] sm:$0xf]
      %v1994 = vld [vmem:[%s10 + $0xe0] sm:$0xf]
      %v1995 = vld [vmem:[%s10 + $0xe4] sm:$0xf]
      %v1996 = vld [vmem:[%s10 + $0xe8] sm:$0xf]
      %v1997 = vld [vmem:[%s10 + $0xec] sm:$0xf]
      %v1998 = vld [vmem:[%s10 + $0xf0] sm:$0xf]
      %v1999 = vld [vmem:[%s10 + $0xf4] sm:$0xf]
      %v2000 = vld [vmem:[%s10 + $0xf8] sm:$0xf]
      %v2001 = vld [vmem:[%s10 + $0xfc] sm:$0xf]
      %v2002 = vld [vmem:[%s11] sm:$0x1]
      %v2004 = vlaneseq
      %v2005 = vshrl.u32 %v2004, 7
      %v2006 = vsub.s32 0, %v2005
      %v2007 = vrot.slane %v2002, %v2006
      %v2073 = vunpack.c.l.b16 %v1938
      %v2074 = vunpack.c.l.b16 %v1939
      %v2075 = vunpack.c.l.b16 %v1940
      %v2076 = vunpack.c.l.b16 %v1941
      %v2077 = vunpack.c.l.b16 %v1942
      %v2078 = vunpack.c.l.b16 %v1943
      %v2079 = vunpack.c.l.b16 %v1944
      %v2080 = vunpack.c.l.b16 %v1945
      %v2081 = vunpack.c.l.b16 %v1946
      %v2082 = vunpack.c.l.b16 %v1947
      %v2083 = vunpack.c.l.b16 %v1948
      %v2084 = vunpack.c.l.b16 %v1949
      %v2085 = vunpack.c.l.b16 %v1950
      %v2086 = vunpack.c.l.b16 %v1951
      %v2087 = vunpack.c.l.b16 %v1952
      %v2088 = vunpack.c.l.b16 %v1953
      %v2089 = vunpack.c.l.b16 %v1954
      %v2090 = vunpack.c.l.b16 %v1955
      %v2091 = vunpack.c.l.b16 %v1956
      %v2092 = vunpack.c.l.b16 %v1957
      %v2093 = vunpack.c.l.b16 %v1958
      %v2094 = vunpack.c.l.b16 %v1959
      %v2095 = vunpack.c.l.b16 %v1960
      %v2096 = vunpack.c.l.b16 %v1961
      %v2097 = vunpack.c.l.b16 %v1962
      %v2098 = vunpack.c.l.b16 %v1963
      %v2099 = vunpack.c.l.b16 %v1964
      %v2100 = vunpack.c.l.b16 %v1965
      %v2101 = vunpack.c.l.b16 %v1966
      %v2102 = vunpack.c.l.b16 %v1967
      %v2103 = vunpack.c.l.b16 %v1968
      %v2104 = vunpack.c.l.b16 %v1969
      %v2105 = vunpack.c.l.b16 %v1970
      %v2106 = vunpack.c.l.b16 %v1971
      %v2107 = vunpack.c.l.b16 %v1972
      %v2108 = vunpack.c.l.b16 %v1973
      %v2109 = vunpack.c.l.b16 %v1974
      %v2110 = vunpack.c.l.b16 %v1975
      %v2111 = vunpack.c.l.b16 %v1976
      %v2112 = vunpack.c.l.b16 %v1977
      %v2113 = vunpack.c.l.b16 %v1978
      %v2114 = vunpack.c.l.b16 %v1979
      %v2115 = vunpack.c.l.b16 %v1980
      %v2116 = vunpack.c.l.b16 %v1981
      %v2117 = vunpack.c.l.b16 %v1982
      %v2118 = vunpack.c.l.b16 %v1983
      %v2119 = vunpack.c.l.b16 %v1984
      %v2120 = vunpack.c.l.b16 %v1985
      %v2121 = vunpack.c.l.b16 %v1986
      %v2122 = vunpack.c.l.b16 %v1987
      %v2123 = vunpack.c.l.b16 %v1988
      %v2124 = vunpack.c.l.b16 %v1989
      %v2125 = vunpack.c.l.b16 %v1990
      %v2126 = vunpack.c.l.b16 %v1991
      %v2127 = vunpack.c.l.b16 %v1992
      %v2128 = vunpack.c.l.b16 %v1993
      %v2129 = vunpack.c.l.b16 %v1994
      %v2130 = vunpack.c.l.b16 %v1995
      %v2131 = vunpack.c.l.b16 %v1996
      %v2132 = vunpack.c.l.b16 %v1997
      %v2133 = vunpack.c.l.b16 %v1998
      %v2134 = vunpack.c.l.b16 %v1999
      %v2135 = vunpack.c.l.b16 %v2000
      %v2136 = vunpack.c.l.b16 %v2001
      %v2137 = vpack.c.b16 %v2074, %v2073
      %v2138 = vpack.c.b16 %v2076, %v2075
      %v2139 = vpack.c.b16 %v2078, %v2077
      %v2140 = vpack.c.b16 %v2080, %v2079
      %v2141 = vpack.c.b16 %v2082, %v2081
      %v2142 = vpack.c.b16 %v2084, %v2083
      %v2143 = vpack.c.b16 %v2086, %v2085
      %v2144 = vpack.c.b16 %v2088, %v2087
      %v2145 = vpack.c.b16 %v2090, %v2089
      %v2146 = vpack.c.b16 %v2092, %v2091
      %v2147 = vpack.c.b16 %v2094, %v2093
      %v2148 = vpack.c.b16 %v2096, %v2095
      %v2149 = vpack.c.b16 %v2098, %v2097
      %v2150 = vpack.c.b16 %v2100, %v2099
      %v2151 = vpack.c.b16 %v2102, %v2101
      %v2152 = vpack.c.b16 %v2104, %v2103
      %v2153 = vpack.c.b16 %v2106, %v2105
      %v2154 = vpack.c.b16 %v2108, %v2107
      %v2155 = vpack.c.b16 %v2110, %v2109
      %v2156 = vpack.c.b16 %v2112, %v2111
      %v2157 = vpack.c.b16 %v2114, %v2113
      %v2158 = vpack.c.b16 %v2116, %v2115
      %v2159 = vpack.c.b16 %v2118, %v2117
      %v2160 = vpack.c.b16 %v2120, %v2119
      %v2161 = vpack.c.b16 %v2122, %v2121
      %v2162 = vpack.c.b16 %v2124, %v2123
      %v2163 = vpack.c.b16 %v2126, %v2125
      %v2164 = vpack.c.b16 %v2128, %v2127
      %v2165 = vpack.c.b16 %v2130, %v2129
      %v2166 = vpack.c.b16 %v2132, %v2131
      %v2167 = vpack.c.b16 %v2134, %v2133
      %v2168 = vpack.c.b16 %v2136, %v2135
      %2201 = vmatprep.subr.bf16.mxu0 0
      %2202 = vmatpush1.bf16.msra.mxu0 %v2137
      %2203 = vmatprep.subr.bf16.mxu0 0
      %2204 = vmatpush1.bf16.msra.mxu0 %v2138
      %2205 = vmatprep.subr.bf16.mxu0 0
      %2206 = vmatpush1.bf16.msra.mxu0 %v2139
      %2207 = vmatprep.subr.bf16.mxu0 0
      %2208 = vmatpush1.bf16.msra.mxu0 %v2140
      %2209 = vmatprep.subr.bf16.mxu0 0
      %2210 = vmatpush1.bf16.msra.mxu0 %v2141
      %2211 = vmatprep.subr.bf16.mxu0 0
      %2212 = vmatpush1.bf16.msra.mxu0 %v2142
      %2213 = vmatprep.subr.bf16.mxu0 0
      %2214 = vmatpush1.bf16.msra.mxu0 %v2143
      %2215 = vmatprep.subr.bf16.mxu0 0
      %2216 = vmatpush1.bf16.msra.mxu0 %v2144
      %2217 = vmatprep.subr.bf16.mxu0 0
      %2218 = vmatpush1.bf16.msra.mxu0 %v2145
      %2219 = vmatprep.subr.bf16.mxu0 0
      %2220 = vmatpush1.bf16.msra.mxu0 %v2146
      %2221 = vmatprep.subr.bf16.mxu0 0
      %2222 = vmatpush1.bf16.msra.mxu0 %v2147
      %2223 = vmatprep.subr.bf16.mxu0 0
      %2224 = vmatpush1.bf16.msra.mxu0 %v2148
      %2225 = vmatprep.subr.bf16.mxu0 0
      %2226 = vmatpush1.bf16.msra.mxu0 %v2149
      %2227 = vmatprep.subr.bf16.mxu0 0
      %2228 = vmatpush1.bf16.msra.mxu0 %v2150
      %2229 = vmatprep.subr.bf16.mxu0 0
      %2230 = vmatpush1.bf16.msra.mxu0 %v2151
      %2231 = vmatprep.subr.bf16.mxu0 0
      %2232 = vmatpush1.bf16.msra.mxu0 %v2152
      %2233 = vmatprep.mubr.bf16.mxu0 %v1931
      %2234 = vmatmul.mubr.bf16.gmra.mrb[0].mxu0 %v1930
      %v2235 = vpop.f32.mrb[0].mxu0
      %v2236 = vadd.f32 %v2007, %v2235
      %v2237 = vpop.f32.mrb[0].mxu0
      %v2238 = vpop.f32.mrb[0].mxu0
      %v2239 = vadd.f32 %v2007, %v2238
      %v2240 = vpop.f32.mrb[0].mxu0
      %2241 = vmatprep.mubr.bf16.mxu0 %v1935
      %2242 = vmatmul.mubr.bf16.gmra.mrb[0].mxu0 %v1934
      %v2243 = vpop.f32.mrb[0].mxu0
      %v2244 = vadd.f32 %v2007, %v2243
      %v2245 = vpop.f32.mrb[0].mxu0
      %v2246 = vpop.f32.mrb[0].mxu0
      %v2247 = vpop.f32.mrb[0].mxu0
      %2248 = vdwg.mxu0
      %2249 = vmatprep.subr.bf16.mxu0 0
      %2250 = vmatpush1.bf16.msra.mxu0 %v2153
      %2251 = vmatprep.subr.bf16.mxu0 0
      %2252 = vmatpush1.bf16.msra.mxu0 %v2154
      %2253 = vmatprep.subr.bf16.mxu0 0
      %2254 = vmatpush1.bf16.msra.mxu0 %v2155
      %2255 = vmatprep.subr.bf16.mxu0 0
      %2256 = vmatpush1.bf16.msra.mxu0 %v2156
      %2257 = vmatprep.subr.bf16.mxu0 0
      %2258 = vmatpush1.bf16.msra.mxu0 %v2157
      %2259 = vmatprep.subr.bf16.mxu0 0
      %2260 = vmatpush1.bf16.msra.mxu0 %v2158
      %2261 = vmatprep.subr.bf16.mxu0 0
      %2262 = vmatpush1.bf16.msra.mxu0 %v2159
      %2263 = vmatprep.subr.bf16.mxu0 0
      %2264 = vmatpush1.bf16.msra.mxu0 %v2160
      %2265 = vmatprep.subr.bf16.mxu0 0
      %2266 = vmatpush1.bf16.msra.mxu0 %v2161
      %2267 = vmatprep.subr.bf16.mxu0 0
      %2268 = vmatpush1.bf16.msra.mxu0 %v2162
      %2269 = vmatprep.subr.bf16.mxu0 0
      %2270 = vmatpush1.bf16.msra.mxu0 %v2163
      %2271 = vmatprep.subr.bf16.mxu0 0
      %2272 = vmatpush1.bf16.msra.mxu0 %v2164
      %2273 = vmatprep.subr.bf16.mxu0 0
      %2274 = vmatpush1.bf16.msra.mxu0 %v2165
      %2275 = vmatprep.subr.bf16.mxu0 0
      %2276 = vmatpush1.bf16.msra.mxu0 %v2166
      %2277 = vmatprep.subr.bf16.mxu0 0
      %2278 = vmatpush1.bf16.msra.mxu0 %v2167
      %2279 = vmatprep.subr.bf16.mxu0 0
      %2280 = vmatpush1.bf16.msra.mxu0 %v2168
      %2281 = vmatprep.mubr.bf16.mxu0 %v1933
      %2282 = vmatmul.mubr.bf16.gmra.mrb[0].mxu0 %v1932
      %v2283 = vpop.f32.mrb[0].mxu0
      %v2284 = vadd.f32 %v2236, %v2283
      %v2285 = vpop.f32.mrb[0].mxu0
      %v2286 = vpop.f32.mrb[0].mxu0
      %v2287 = vadd.f32 %v2239, %v2286
      %v2288 = vpop.f32.mrb[0].mxu0
      %2289 = vmatprep.mubr.bf16.mxu0 %v1937
      %2290 = vmatmul.mubr.bf16.gmra.mrb[0].mxu0 %v1936
      %v2291 = vpop.f32.mrb[0].mxu0
      %v2292 = vadd.f32 %v2244, %v2291
      %v2293 = vpop.f32.mrb[0].mxu0
      %v2294 = vpop.f32.mrb[0].mxu0
      %v2295 = vpop.f32.mrb[0].mxu0
      %2296 = vdwg.mxu0
      %v2297 = vadd.f32 %v1597, %v2284
      %v2298 = vadd.f32 %v1598, %v2287
      %v2299 = vadd.f32 %v1599, %v2292
      %2300 = vst [vmem:[%s473] sm:$0xff] %v2297
      %2301 = vst [vmem:[%s473 + $0x8] sm:$0xff] %v2298
      %2302 = vst [vmem:[%s473 + $0x10] sm:$0xff] %v2299
      %p2303 = scmp.lt.s32.totalorder %s23, 1
      %s2304 = scalar_select %p2303, %s23, 1
      %s2305 = smul.addr %s2304, 3
      %s2306 = smul.addr %s2305, 8
      %s2307 = scalar_lea.vmem %s12, %s2306
      // Predicated region
      $region69: #{vit_forward.8} parent=67 // pred_check
        %p2308 = pneg %p313
      $region70: #{vit_forward.8} parent=67 // pred_check_branch
        %2310 = sbr.rel (%p2308) target = $region72
      $region71: #{vit_forward.8} parent=67 // pred_region
        _
      $region72: #{vit_forward.8} parent=67 // pred_fallthru
        _
    $region68: #{vit_forward.8} parent=5 // pred_fallthru
      _
    %p2311 = scmp.le.s32.totalorder 2, %s18
    // Predicated region
    $region73: #{vit_forward.8} parent=5 // pred_check
      %p2312 = pneg %p2311
    $region74: #{vit_forward.8} parent=5 // pred_check_branch
      %2314 = sbr.rel (%p2312) target = $region76
    $region75: #{vit_forward.8} parent=5 // pred_region
      %s2315 = ssub.s32 %s18, 2
      // Predicated region
      $region77: #{vit_forward.8} parent=75 // pred_check
        %p2316 = pneg %p319
      $region78: #{vit_forward.8} parent=75 // pred_check_branch
        %2318 = sbr.rel (%p2316) target = $region80
      $region79: #{vit_forward.8} parent=75 // pred_region
        %p2319 = scmp.lt.s32.totalorder %s24, 1
        %s2320 = scalar_select %p2319, %s24, 1
        %s2321 = smul.addr %s2320, 3
        %s2322 = smul.addr %s2321, 8
        %s2323 = scalar_lea.vmem %s12, %s2322
      $region80: #{vit_forward.8} parent=75 // pred_fallthru
        _
    $region76: #{vit_forward.8} parent=5 // pred_fallthru
      _
  $region6: #{vit_forward.8} parent=0 // loop_footer
    %s22 = sadd.s32 1, %s18
  $region7: #{vit_forward.8} parent=0 // loop_footer_branch
    %17 = sbr.rel target = $region3
  $region8: #{vit_forward.8} parent=0 // loop_exit
    _

</llo_original>
